<compile_context>
chip_gen: v5e
topology: v5e:2x2
jax: 0.10.0
libtpu: 0.0.40
codegen_flags: <defaults>
</compile_context>

<pallas_src>
import functools
import math

import jax
import jax.numpy as jnp
from jax.experimental import pallas as pl
from jax.experimental.pallas import tpu as pltpu

# MXU input dtype (f32 accumulation is always used).  Set to jnp.float32 for
# bit-closer parity with the PyTorch reference at the cost of MXU throughput.
MXU_DTYPE = jnp.bfloat16


# -----------------------------------------------------------------------------
# Per-generation VMEM / tile budgets
# -----------------------------------------------------------------------------
def _tpu_vmem_capacity_bytes():
    try:
        return int(pltpu.get_tpu_info().vmem_capacity_bytes)
    except Exception:
        return 64 * 1024 * 1024  # conservative fallback (v7x per-TC VMEM)


_VMEM_CAP = _tpu_vmem_capacity_bytes()
if _VMEM_CAP >= 128 * 1024 * 1024:          # v5e / v6e: 128 MiB physical VMEM
    VMEM_LIMIT = 96 * 1024 * 1024
    TM_TARGET = 512                          # row tile for matmul/FFN kernels
    TF_TARGET = 512                          # d_ff reduction tile
else:                                        # v7x: 64 MiB per TensorCore
    VMEM_LIMIT = 48 * 1024 * 1024
    TM_TARGET = 256
    TF_TARGET = 256
TK_TARGET = 512                              # generic reduction (K) tile
TN_TARGET = 512                              # projection output (N) tile
TQ_TARGET = 256                              # attention query rows per step
TKS_TARGET = 512                             # attention key/value rows per step


def _choose_tile(dim, target, multiple):
    """Largest tile <= target that divides dim and is a multiple of `multiple`.

    Falls back to the full dim (a full-extent block is always a legal
    BlockSpec), so non-divisible shapes still lower.
    """
    t = (min(dim, target) // multiple) * multiple
    while t >= multiple:
        if dim % t == 0:
            return t
        t -= multiple
    return dim


def _layernorm(y, gamma, beta, eps):
    """One-pass LayerNorm over the last axis (y is f32)."""
    mean = jnp.mean(y, axis=-1, keepdims=True)
    meansq = jnp.mean(y * y, axis=-1, keepdims=True)
    var = meansq - mean * mean
    inv = jax.lax.rsqrt(var + eps)
    return (y - mean) * inv * gamma + beta


# -----------------------------------------------------------------------------
# Kernel 1: lane-dense linear projection   y = x @ W + b
#   grid = (M tiles, N tiles, K tiles); K last, "arbitrary"; f32 VMEM acc.
#   Used for the fused QKV ([D,3D]), Q ([D,D]) and KV ([D,2D]) projections.
# -----------------------------------------------------------------------------
def _linear_kernel(x_ref, w_ref, b_ref, o_ref, acc_ref):
    @pl.when(pl.program_id(2) == 0)
    def _():
        acc_ref[...] = jnp.zeros_like(acc_ref)

    acc_ref[...] += jnp.dot(x_ref[...].astype(MXU_DTYPE),
                            w_ref[...].astype(MXU_DTYPE),
                            preferred_element_type=jnp.float32)

    @pl.when(pl.program_id(2) == pl.num_programs(2) - 1)
    def _():
        o_ref[...] = (acc_ref[...]
                      + b_ref[...].astype(jnp.float32)).astype(o_ref.dtype)


def linear_bias(x2d, w, b, *, out_dtype):
    M, K = x2d.shape
    N = w.shape[1]
    tm = _choose_tile(M, TM_TARGET, 8)
    tn = _choose_tile(N, TN_TARGET, 128)
    tk = _choose_tile(K, TK_TARGET, 128)
    return pl.pallas_call(
        _linear_kernel,
        out_shape=jax.ShapeDtypeStruct((M, N), out_dtype),
        grid=(M // tm, N // tn, K // tk),
        in_specs=[
            pl.BlockSpec((tm, tk), lambda i, j, k: (i, k)),
            pl.BlockSpec((tk, tn), lambda i, j, k: (k, j)),
            pl.BlockSpec((1, tn), lambda i, j, k: (0, j)),
        ],
        out_specs=pl.BlockSpec((tm, tn), lambda i, j, k: (i, j)),
        scratch_shapes=[pltpu.VMEM((tm, tn), jnp.float32)],
        compiler_params=pltpu.CompilerParams(
            dimension_semantics=("parallel", "parallel", "arbitrary"),
            vmem_limit_bytes=VMEM_LIMIT),
    )(x2d, w, b.reshape(1, N))


# -----------------------------------------------------------------------------
# Kernel 2: flash attention (Sk-tiled online softmax), per (batch, head).
#   grid = (B, H, Sq tiles, Sk tiles); Sk last, "arbitrary".
#   Q/K/V blocks are column slices of the lane-dense projection outputs
#   (head h -> column block h); context is written lane-dense into [M, D].
# -----------------------------------------------------------------------------
def _flash_attn_kernel(q_ref, k_ref, v_ref, o_ref, m_sc, l_sc, acc_sc, *, scale):
    ki = pl.program_id(3)

    @pl.when(ki == 0)
    def _():
        m_sc[...] = jnp.full_like(m_sc, -jnp.inf)
        l_sc[...] = jnp.zeros_like(l_sc)
        acc_sc[...] = jnp.zeros_like(acc_sc)

    q = (q_ref[...].astype(jnp.float32) * scale).astype(MXU_DTYPE)   # fold scale
    k = k_ref[...].astype(MXU_DTYPE)
    s = jax.lax.dot_general(q, k, (((1,), (1,)), ((), ())),
                            preferred_element_type=jnp.float32)      # [tq, tk]

    m_prev = m_sc[...]
    m_new = jnp.maximum(m_prev, jnp.max(s, axis=-1, keepdims=True))
    alpha = jnp.exp(m_prev - m_new)
    p = jnp.exp(s - m_new)
    l_sc[...] = alpha * l_sc[...] + jnp.sum(p, axis=-1, keepdims=True)
    acc_sc[...] = alpha * acc_sc[...] + jnp.dot(
        p.astype(MXU_DTYPE), v_ref[...].astype(MXU_DTYPE),
        preferred_element_type=jnp.float32)
    m_sc[...] = m_new

    @pl.when(ki == pl.num_programs(3) - 1)
    def _():
        # Exact division (not approx reciprocal) for closer parity with torch.
        o_ref[...] = (acc_sc[...] / l_sc[...]).astype(o_ref.dtype)


def flash_attention(q_arr, kv_arr, *, B, Sq, Sk, H, dk,
                    q_col0, k_col0, v_col0, scale, out_dtype):
    """q_arr: [B*Sq, >=H*dk]; kv_arr: [B*Sk, >=2*H*dk] (column-packed heads).

    Returns lane-dense context [B*Sq, H*dk] (head h at column block h).
    """
    if dk % 128 != 0:
        # TODO(synk): support dk < 128 by grouping several heads per block.
        raise NotImplementedError("flash_attention requires head_dim % 128 == 0")
    Mq = B * Sq
    tq = _choose_tile(Sq, TQ_TARGET, 8)
    tks = _choose_tile(Sk, TKS_TARGET, 8)
    nqi = Sq // tq
    nki = Sk // tks
    return pl.pallas_call(
        functools.partial(_flash_attn_kernel, scale=scale),
        out_shape=jax.ShapeDtypeStruct((Mq, H * dk), out_dtype),
        grid=(B, H, nqi, nki),
        in_specs=[
            pl.BlockSpec((tq, dk), lambda b, h, qi, ki: (b * nqi + qi, q_col0 + h)),
            pl.BlockSpec((tks, dk), lambda b, h, qi, ki: (b * nki + ki, k_col0 + h)),
            pl.BlockSpec((tks, dk), lambda b, h, qi, ki: (b * nki + ki, v_col0 + h)),
        ],
        out_specs=pl.BlockSpec((tq, dk), lambda b, h, qi, ki: (b * nqi + qi, h)),
        scratch_shapes=[pltpu.VMEM((tq, 1), jnp.float32),
                        pltpu.VMEM((tq, 1), jnp.float32),
                        pltpu.VMEM((tq, dk), jnp.float32)],
        compiler_params=pltpu.CompilerParams(
            dimension_semantics=("parallel", "parallel", "parallel", "arbitrary"),
            vmem_limit_bytes=VMEM_LIMIT),
    )(q_arr, kv_arr, kv_arr)


# -----------------------------------------------------------------------------
# Kernel 3: output projection fused with bias + residual + LayerNorm.
#   out = LN( ctx @ Wo + bo + residual );  grid = (M tiles, K=D tiles).
#   Full-width (K=D) contraction; N = D stays whole so the LayerNorm over the
#   full feature dim lives in the finalize epilogue.
# -----------------------------------------------------------------------------
def _matmul_res_ln_kernel(x_ref, w_ref, b_ref, res_ref, g_ref, bln_ref,
                          o_ref, acc_ref, *, eps):
    k = pl.program_id(1)

    @pl.when(k == 0)
    def _():
        acc_ref[...] = jnp.zeros_like(acc_ref)

    acc_ref[...] += jnp.dot(x_ref[...].astype(MXU_DTYPE),
                            w_ref[...].astype(MXU_DTYPE),
                            preferred_element_type=jnp.float32)

    @pl.when(k == pl.num_programs(1) - 1)
    def _():
        y = (acc_ref[...] + b_ref[...].astype(jnp.float32)
             + res_ref[...].astype(jnp.float32))
        o_ref[...] = _layernorm(y, g_ref[...].astype(jnp.float32),
                                bln_ref[...].astype(jnp.float32),
                                eps).astype(o_ref.dtype)


def matmul_residual_layernorm(x2d, w, b, res2d, gamma, beta, *, eps=1e-5):
    M, K = x2d.shape
    D = w.shape[1]
    tm = _choose_tile(M, TM_TARGET, 8)
    tk = _choose_tile(K, TK_TARGET, 128)
    return pl.pallas_call(
        functools.partial(_matmul_res_ln_kernel, eps=eps),
        out_shape=jax.ShapeDtypeStruct((M, D), res2d.dtype),
        grid=(M // tm, K // tk),
        in_specs=[
            pl.BlockSpec((tm, tk), lambda i, k: (i, k)),
            pl.BlockSpec((tk, D), lambda i, k: (k, 0)),
            pl.BlockSpec((1, D), lambda i, k: (0, 0)),
            pl.BlockSpec((tm, D), lambda i, k: (i, 0)),
            pl.BlockSpec((1, D), lambda i, k: (0, 0)),
            pl.BlockSpec((1, D), lambda i, k: (0, 0)),
        ],
        out_specs=pl.BlockSpec((tm, D), lambda i, k: (i, 0)),
        scratch_shapes=[pltpu.VMEM((tm, D), jnp.float32)],
        compiler_params=pltpu.CompilerParams(
            dimension_semantics=("parallel", "arbitrary"),
            vmem_limit_bytes=VMEM_LIMIT),
    )(x2d, w, b.reshape(1, D), res2d, gamma.reshape(1, D), beta.reshape(1, D))


# -----------------------------------------------------------------------------
# Kernel 4: fused FFN:  LN( gelu(x@W1 + b1) @ W2 + b2 + x )
#   grid = (M tiles, d_ff tiles); the [tm, tf] GELU intermediate never leaves
#   VMEM; d_ff is the inner reduction of the second matmul.  The x block is
#   reused as the residual (no duplicate activation stream).
# -----------------------------------------------------------------------------
def _ffn_kernel(x_ref, w1_ref, b1_ref, w2_ref, b2_ref, g_ref, bln_ref,
                o_ref, acc_ref, *, eps):
    f = pl.program_id(1)

    @pl.when(f == 0)
    def _():
        acc_ref[...] = jnp.zeros_like(acc_ref)

    h = jnp.dot(x_ref[...].astype(MXU_DTYPE), w1_ref[...].astype(MXU_DTYPE),
                preferred_element_type=jnp.float32)
    h = h + b1_ref[...].astype(jnp.float32)
    # Exact (erf) GELU to match torch.nn.functional.gelu default.
    h = 0.5 * h * (1.0 + jax.lax.erf(h * (1.0 / math.sqrt(2.0))))
    acc_ref[...] += jnp.dot(h.astype(MXU_DTYPE), w2_ref[...].astype(MXU_DTYPE),
                            preferred_element_type=jnp.float32)

    @pl.when(f == pl.num_programs(1) - 1)
    def _():
        y = (acc_ref[...] + b2_ref[...].astype(jnp.float32)
             + x_ref[...].astype(jnp.float32))          # residual = x block
        o_ref[...] = _layernorm(y, g_ref[...].astype(jnp.float32),
                                bln_ref[...].astype(jnp.float32),
                                eps).astype(o_ref.dtype)


def ffn_residual_layernorm(x2d, w1, b1, w2, b2, gamma, beta, *, eps=1e-5):
    M, D = x2d.shape
    d_ff = w1.shape[1]
    tm = _choose_tile(M, TM_TARGET, 8)
    tf = _choose_tile(d_ff, TF_TARGET, 128)
    return pl.pallas_call(
        functools.partial(_ffn_kernel, eps=eps),
        out_shape=jax.ShapeDtypeStruct((M, D), x2d.dtype),
        grid=(M // tm, d_ff // tf),
        in_specs=[
            pl.BlockSpec((tm, D), lambda i, f: (i, 0)),      # x (also residual)
            pl.BlockSpec((D, tf), lambda i, f: (0, f)),      # W1
            pl.BlockSpec((1, tf), lambda i, f: (0, f)),      # b1
            pl.BlockSpec((tf, D), lambda i, f: (f, 0)),      # W2
            pl.BlockSpec((1, D), lambda i, f: (0, 0)),       # b2
            pl.BlockSpec((1, D), lambda i, f: (0, 0)),       # gamma
            pl.BlockSpec((1, D), lambda i, f: (0, 0)),       # beta
        ],
        out_specs=pl.BlockSpec((tm, D), lambda i, f: (i, 0)),
        scratch_shapes=[pltpu.VMEM((tm, D), jnp.float32)],
        compiler_params=pltpu.CompilerParams(
            dimension_semantics=("parallel", "arbitrary"),
            vmem_limit_bytes=VMEM_LIMIT),
    )(x2d, w1, b1.reshape(1, d_ff), w2, b2.reshape(1, D),
      gamma.reshape(1, D), beta.reshape(1, D))


# -----------------------------------------------------------------------------
# Module wrappers
# -----------------------------------------------------------------------------
def multi_head_attention_block(q_in, kv_in, p, num_heads, gamma, beta,
                               *, self_attn):
    """MHA + residual + LayerNorm (post-norm), residual = q_in."""
    B, Sq, D = q_in.shape
    Sk = kv_in.shape[1]
    dk = D // num_heads
    scale = 1.0 / math.sqrt(dk)
    x2d = q_in.reshape(B * Sq, D)

    if self_attn:   # one fused lane-dense QKV projection: [M, 3D]
        qkv = linear_bias(x2d, p["w_qkv"], p["b_qkv"], out_dtype=MXU_DTYPE)
        q_arr, kv_arr = qkv, qkv
        q_col0, k_col0, v_col0 = 0, num_heads, 2 * num_heads
    else:           # Q from x [M, D]; fused KV from encoder output [Mk, 2D]
        q_arr = linear_bias(x2d, p["w_q"], p["b_q"], out_dtype=MXU_DTYPE)
        kv_arr = linear_bias(kv_in.reshape(B * Sk, D), p["w_kv"], p["b_kv"],
                             out_dtype=MXU_DTYPE)
        q_col0, k_col0, v_col0 = 0, 0, num_heads

    ctx = flash_attention(q_arr, kv_arr, B=B, Sq=Sq, Sk=Sk, H=num_heads, dk=dk,
                          q_col0=q_col0, k_col0=k_col0, v_col0=v_col0,
                          scale=scale, out_dtype=MXU_DTYPE)      # [M, D]

    out2d = matmul_residual_layernorm(ctx, p["w_o"], p["b_o"], x2d, gamma, beta)
    return out2d.reshape(B, Sq, D)


def decoder_layer(x, enc_output, params, num_heads):
    # Dropout layers are identity (eval mode); src_mask/tgt_mask are None.
    x = multi_head_attention_block(x, x, params["self_attn"], num_heads,
                                   params["ln1_g"], params["ln1_b"],
                                   self_attn=True)
    x = multi_head_attention_block(x, enc_output, params["cross_attn"],
                                   num_heads, params["ln2_g"], params["ln2_b"],
                                   self_attn=False)
    B, S, D = x.shape
    x2d = x.reshape(B * S, D)
    p = params["ffn"]
    y = ffn_residual_layernorm(x2d, p["w1"], p["b1"], p["w2"], p["b2"],
                               params["ln3_g"], params["ln3_b"])
    return y.reshape(B, S, D)


# -----------------------------------------------------------------------------
# Parameter init (PyTorch-Linear-like, weights stored as [in, out]) and
# one-time weight preprocessing (fused QKV/KV packing + MXU-dtype cast).
# -----------------------------------------------------------------------------
def init_params(key, d_model, d_ff):
    def lin(k, fan_in, fan_out):
        k1, k2 = jax.random.split(k)
        bound = 1.0 / math.sqrt(fan_in)
        w = jax.random.uniform(k1, (fan_in, fan_out), jnp.float32, -bound, bound)
        b = jax.random.uniform(k2, (fan_out,), jnp.float32, -bound, bound)
        return w, b

    keys = jax.random.split(key, 4)

    def attn_params(k4):
        ks = jax.random.split(k4, 4)
        wq, bq = lin(ks[0], d_model, d_model)
        wk, bk = lin(ks[1], d_model, d_model)
        wv, bv = lin(ks[2], d_model, d_model)
        wo, bo = lin(ks[3], d_model, d_model)
        return dict(wq=wq, bq=bq, wk=wk, bk=bk, wv=wv, bv=bv, wo=wo, bo=bo)

    w1, b1 = lin(keys[2], d_model, d_ff)
    w2, b2 = lin(keys[3], d_ff, d_model)

    return dict(
        self_attn=attn_params(keys[0]),
        cross_attn=attn_params(keys[1]),
        ffn=dict(w1=w1, b1=b1, w2=w2, b2=b2),
        ln1_g=jnp.ones((d_model,), jnp.float32), ln1_b=jnp.zeros((d_model,), jnp.float32),
        ln2_g=jnp.ones((d_model,), jnp.float32), ln2_b=jnp.zeros((d_model,), jnp.float32),
        ln3_g=jnp.ones((d_model,), jnp.float32), ln3_b=jnp.zeros((d_model,), jnp.float32),
    )


def preprocess_params(raw, dtype=None):
    """One-time weight repacking, hoisted out of the jitted forward."""
    dtype = MXU_DTYPE if dtype is None else dtype
    sa, ca, fp = raw["self_attn"], raw["cross_attn"], raw["ffn"]
    return dict(
        self_attn=dict(
            w_qkv=jnp.concatenate([sa["wq"], sa["wk"], sa["wv"]], axis=1).astype(dtype),
            b_qkv=jnp.concatenate([sa["bq"], sa["bk"], sa["bv"]]).astype(jnp.float32),
            w_o=sa["wo"].astype(dtype), b_o=sa["bo"].astype(jnp.float32)),
        cross_attn=dict(
            w_q=ca["wq"].astype(dtype), b_q=ca["bq"].astype(jnp.float32),
            w_kv=jnp.concatenate([ca["wk"], ca["wv"]], axis=1).astype(dtype),
            b_kv=jnp.concatenate([ca["bk"], ca["bv"]]).astype(jnp.float32),
            w_o=ca["wo"].astype(dtype), b_o=ca["bo"].astype(jnp.float32)),
        ffn=dict(w1=fp["w1"].astype(dtype), b1=fp["b1"].astype(jnp.float32),
                 w2=fp["w2"].astype(dtype), b2=fp["b2"].astype(jnp.float32)),
        ln1_g=raw["ln1_g"], ln1_b=raw["ln1_b"],
        ln2_g=raw["ln2_g"], ln2_b=raw["ln2_b"],
        ln3_g=raw["ln3_g"], ln3_b=raw["ln3_b"],
    )


# -----------------------------------------------------------------------------
# Pure-JAX f32 reference (mirrors the PyTorch module with dropout=identity,
# masks=None) used only for the in-script correctness check.
# -----------------------------------------------------------------------------
def decoder_layer_reference(x, enc_output, raw, num_heads, eps=1e-5):
    def layer_norm(y, g, b):
        mu = jnp.mean(y, axis=-1, keepdims=True)
        var = jnp.mean((y - mu) ** 2, axis=-1, keepdims=True)
        return (y - mu) * jax.lax.rsqrt(var + eps) * g + b

    def mha(q_in, kv_in, p, H):
        B, Sq, D = q_in.shape
        Sk = kv_in.shape[1]
        dk = D // H
        q = (q_in @ p["wq"] + p["bq"]).reshape(B, Sq, H, dk).transpose(0, 2, 1, 3)
        k = (kv_in @ p["wk"] + p["bk"]).reshape(B, Sk, H, dk).transpose(0, 2, 1, 3)
        v = (kv_in @ p["wv"] + p["bv"]).reshape(B, Sk, H, dk).transpose(0, 2, 1, 3)
        s = jnp.einsum("bhqd,bhkd->bhqk", q, k) / math.sqrt(dk)
        a = jax.nn.softmax(s, axis=-1)
        ctx = jnp.einsum("bhqk,bhkd->bhqd", a, v).transpose(0, 2, 1, 3).reshape(B, Sq, D)
        return ctx @ p["wo"] + p["bo"]

    x = layer_norm(x + mha(x, x, raw["self_attn"], num_heads),
                   raw["ln1_g"], raw["ln1_b"])
    x = layer_norm(x + mha(x, enc_output, raw["cross_attn"], num_heads),
                   raw["ln2_g"], raw["ln2_b"])
    fp = raw["ffn"]
    h = jax.nn.gelu(x @ fp["w1"] + fp["b1"], approximate=False)
    x = layer_norm(x + (h @ fp["w2"] + fp["b2"]), raw["ln3_g"], raw["ln3_b"])
    return x


if __name__ == "__main__":
    # Small but hardware-tile-friendly shapes (head_dim = 128, d_model = 256).
    B, S_tgt, S_src = 2, 8, 8
    d_model, num_heads, d_ff = 256, 2, 1024

    key = jax.random.PRNGKey(0)
    k_x, k_enc, k_p = jax.random.split(key, 3)

    x = jax.random.normal(k_x, (B, S_tgt, d_model), jnp.float32)
    enc_output = jax.random.normal(k_enc, (B, S_src, d_model), jnp.float32)

    raw_params = init_params(k_p, d_model, d_ff)
    params = preprocess_params(raw_params)       # one-time, outside the jit

    decoder_fn = jax.jit(decoder_layer, static_argnums=(3,))
    out = jax.block_until_ready(decoder_fn(x, enc_output, params, num_heads))

    assert out.shape == (B, S_tgt, d_model)
    assert bool(jnp.all(jnp.isfinite(out)))

    # Correctness check vs. the pure-JAX f32 reference (loose tolerance for the
    # bf16 MXU path; a structurally wrong kernel would give O(1) errors).
    ref = decoder_layer_reference(x, enc_output, raw_params, num_heads)
    max_err = float(jnp.max(jnp.abs(out.astype(jnp.float32) - ref)))
    assert max_err < 0.1, f"max |err| vs reference = {max_err}"

    print("KERNEL_OK")
</pallas_src>

<mosaic_0001>
module attributes {stable_mosaic.version = 11 : i64} {
  func.func @_linear_kernel(%arg0: i32, %arg1: i32, %arg2: i32, %arg3: memref<16x256xf32, #tpu.memory_space<vmem>>, %arg4: memref<256x384xbf16, #tpu.memory_space<vmem>>, %arg5: memref<1x384xf32, #tpu.memory_space<vmem>>, %arg6: memref<16x384xbf16, #tpu.memory_space<vmem>>, %arg7: memref<16x384xf32, #tpu.memory_space<vmem>>) attributes {dimension_semantics = [#tpu.dimension_semantics<parallel>, #tpu.dimension_semantics<parallel>, #tpu.dimension_semantics<arbitrary>], iteration_bounds = array<i64: 1, 2, 1>, scalar_prefetch = 0 : i64, scratch_operands = 1 : i64, tpu.core_type = #tpu.core_type<tc>, window_params = [{transform_indices = @transform_0, window_bounds = array<i64: 16, 256>}, {transform_indices = @transform_1, window_bounds = array<i64: 256, 384>}, {transform_indices = @transform_2, window_bounds = array<i64: 1, 384>}, {transform_indices = @transform_3, window_bounds = array<i64: 16, 384>}]} {
    %c0_i32 = arith.constant 0 : i32
    %0 = arith.cmpi eq, %arg2, %c0_i32 : i32
    %1 = arith.extui %0 : i1 to i32
    %c0_i32_0 = arith.constant 0 : i32
    %2 = arith.cmpi ne, %1, %c0_i32_0 : i32
    scf.if %2 {
      %cst_10 = arith.constant 0.000000e+00 : f32
      %13 = vector.broadcast %cst_10 : f32 to vector<16x384xf32>
      %c0_11 = arith.constant 0 : index
      %c0_12 = arith.constant 0 : index
      %14 = vector.load %arg7[%c0_11, %c0_12] : memref<16x384xf32, #tpu.memory_space<vmem>>, vector<16x384xf32>
      tpu.vector_store %arg7[%c0_11, %c0_12], %13 {strides = array<i32>} : memref<16x384xf32, #tpu.memory_space<vmem>>, vector<16x384xf32>,
    } else {
    }
    %c0 = arith.constant 0 : index
    %c0_1 = arith.constant 0 : index
    %3 = vector.load %arg7[%c0, %c0_1] : memref<16x384xf32, #tpu.memory_space<vmem>>, vector<16x384xf32>
    %c0_2 = arith.constant 0 : index
    %c0_3 = arith.constant 0 : index
    %4 = vector.load %arg3[%c0_2, %c0_3] : memref<16x256xf32, #tpu.memory_space<vmem>>, vector<16x256xf32>
    %5 = arith.truncf %4 : vector<16x256xf32> to vector<16x256xbf16>
    %c0_4 = arith.constant 0 : index
    %c0_5 = arith.constant 0 : index
    %6 = vector.load %arg4[%c0_4, %c0_5] : memref<256x384xbf16, #tpu.memory_space<vmem>>, vector<256x384xbf16>
    %cst = arith.constant dense<0.000000e+00> : vector<16x384xf32>
    %7 = tpu.matmul %5, %6, %cst {dimension_numbers = #tpu.dot_dimension_numbers<[1], [0], [0], [1], [0, 0, 1, 1], [], []>} : vector<16x256xbf16>, vector<256x384xbf16>, vector<16x384xf32> -> vector<16x384xf32>
    %8 = arith.addf %3, %7 : vector<16x384xf32>
    %c0_6 = arith.constant 0 : index
    %c0_7 = arith.constant 0 : index
    %9 = vector.load %arg7[%c0_6, %c0_7] : memref<16x384xf32, #tpu.memory_space<vmem>>, vector<16x384xf32>
    tpu.vector_store %arg7[%c0_6, %c0_7], %8 {strides = array<i32>} : memref<16x384xf32, #tpu.memory_space<vmem>>, vector<16x384xf32>,
    %c0_i32_8 = arith.constant 0 : i32
    %10 = arith.cmpi eq, %arg2, %c0_i32_8 : i32
    %11 = arith.extui %10 : i1 to i32
    %c0_i32_9 = arith.constant 0 : i32
    %12 = arith.cmpi ne, %11, %c0_i32_9 : i32
    scf.if %12 {
      %c0_10 = arith.constant 0 : index
      %c0_11 = arith.constant 0 : index
      %13 = vector.load %arg7[%c0_10, %c0_11] : memref<16x384xf32, #tpu.memory_space<vmem>>, vector<16x384xf32>
      %c0_12 = arith.constant 0 : index
      %c0_13 = arith.constant 0 : index
      %14 = vector.load %arg5[%c0_12, %c0_13] : memref<1x384xf32, #tpu.memory_space<vmem>>, vector<1x384xf32>
      %15 = vector.broadcast %14 : vector<1x384xf32> to vector<16x384xf32>
      %16 = arith.addf %13, %15 : vector<16x384xf32>
      %17 = arith.truncf %16 : vector<16x384xf32> to vector<16x384xbf16>
      %c0_14 = arith.constant 0 : index
      %c0_15 = arith.constant 0 : index
      %18 = vector.load %arg6[%c0_14, %c0_15] : memref<16x384xbf16, #tpu.memory_space<vmem>>, vector<16x384xbf16>
      tpu.vector_store %arg6[%c0_14, %c0_15], %17 {strides = array<i32>} : memref<16x384xbf16, #tpu.memory_space<vmem>>, vector<16x384xbf16>,
    } else {
    }
    return
  }
  func.func @transform_0(%arg0: i32, %arg1: i32, %arg2: i32) -> (i32, i32) {
    %c0_i32 = arith.constant 0 : i32
    return %arg0, %arg2 : i32, i32
  }
  func.func @transform_1(%arg0: i32, %arg1: i32, %arg2: i32) -> (i32, i32) {
    %c0_i32 = arith.constant 0 : i32
    return %arg2, %arg1 : i32, i32
  }
  func.func @transform_2(%arg0: i32, %arg1: i32, %arg2: i32) -> (i32, i32) {
    %c0_i32 = arith.constant 0 : i32
    %c0_i32_0 = arith.constant 0 : i32
    return %c0_i32, %arg1 : i32, i32
  }
  func.func @transform_3(%arg0: i32, %arg1: i32, %arg2: i32) -> (i32, i32) {
    %c0_i32 = arith.constant 0 : i32
    return %arg0, %arg1 : i32, i32
  }
}

module attributes {stable_mosaic.version = 11 : i64} {
  func.func @_linear_kernel(%arg0: i32, %arg1: i32, %arg2: i32, %arg3: memref<16x256xf32, #tpu.memory_space<vmem>>, %arg4: memref<256x512xbf16, #tpu.memory_space<vmem>>, %arg5: memref<1x512xf32, #tpu.memory_space<vmem>>, %arg6: memref<16x512xbf16, #tpu.memory_space<vmem>>, %arg7: memref<16x512xf32, #tpu.memory_space<vmem>>) attributes {dimension_semantics = [#tpu.dimension_semantics<parallel>, #tpu.dimension_semantics<parallel>, #tpu.dimension_semantics<arbitrary>], iteration_bounds = array<i64: 1, 1, 1>, scalar_prefetch = 0 : i64, scratch_operands = 1 : i64, tpu.core_type = #tpu.core_type<tc>, window_params = [{transform_indices = @transform_0, window_bounds = array<i64: 16, 256>}, {transform_indices = @transform_1, window_bounds = array<i64: 256, 512>}, {transform_indices = @transform_2, window_bounds = array<i64: 1, 512>}, {transform_indices = @transform_3, window_bounds = array<i64: 16, 512>}]} {
    %c0_i32 = arith.constant 0 : i32
    %0 = arith.cmpi eq, %arg2, %c0_i32 : i32
    %1 = arith.extui %0 : i1 to i32
    %c0_i32_0 = arith.constant 0 : i32
    %2 = arith.cmpi ne, %1, %c0_i32_0 : i32
    scf.if %2 {
      %cst_10 = arith.constant 0.000000e+00 : f32
      %13 = vector.broadcast %cst_10 : f32 to vector<16x512xf32>
      %c0_11 = arith.constant 0 : index
      %c0_12 = arith.constant 0 : index
      %14 = vector.load %arg7[%c0_11, %c0_12] : memref<16x512xf32, #tpu.memory_space<vmem>>, vector<16x512xf32>
      tpu.vector_store %arg7[%c0_11, %c0_12], %13 {strides = array<i32>} : memref<16x512xf32, #tpu.memory_space<vmem>>, vector<16x512xf32>,
    } else {
    }
    %c0 = arith.constant 0 : index
    %c0_1 = arith.constant 0 : index
    %3 = vector.load %arg7[%c0, %c0_1] : memref<16x512xf32, #tpu.memory_space<vmem>>, vector<16x512xf32>
    %c0_2 = arith.constant 0 : index
    %c0_3 = arith.constant 0 : index
    %4 = vector.load %arg3[%c0_2, %c0_3] : memref<16x256xf32, #tpu.memory_space<vmem>>, vector<16x256xf32>
    %5 = arith.truncf %4 : vector<16x256xf32> to vector<16x256xbf16>
    %c0_4 = arith.constant 0 : index
    %c0_5 = arith.constant 0 : index
    %6 = vector.load %arg4[%c0_4, %c0_5] : memref<256x512xbf16, #tpu.memory_space<vmem>>, vector<256x512xbf16>
    %cst = arith.constant dense<0.000000e+00> : vector<16x512xf32>
    %7 = tpu.matmul %5, %6, %cst {dimension_numbers = #tpu.dot_dimension_numbers<[1], [0], [0], [1], [0, 0, 1, 1], [], []>} : vector<16x256xbf16>, vector<256x512xbf16>, vector<16x512xf32> -> vector<16x512xf32>
    %8 = arith.addf %3, %7 : vector<16x512xf32>
    %c0_6 = arith.constant 0 : index
    %c0_7 = arith.constant 0 : index
    %9 = vector.load %arg7[%c0_6, %c0_7] : memref<16x512xf32, #tpu.memory_space<vmem>>, vector<16x512xf32>
    tpu.vector_store %arg7[%c0_6, %c0_7], %8 {strides = array<i32>} : memref<16x512xf32, #tpu.memory_space<vmem>>, vector<16x512xf32>,
    %c0_i32_8 = arith.constant 0 : i32
    %10 = arith.cmpi eq, %arg2, %c0_i32_8 : i32
    %11 = arith.extui %10 : i1 to i32
    %c0_i32_9 = arith.constant 0 : i32
    %12 = arith.cmpi ne, %11, %c0_i32_9 : i32
    scf.if %12 {
      %c0_10 = arith.constant 0 : index
      %c0_11 = arith.constant 0 : index
      %13 = vector.load %arg7[%c0_10, %c0_11] : memref<16x512xf32, #tpu.memory_space<vmem>>, vector<16x512xf32>
      %c0_12 = arith.constant 0 : index
      %c0_13 = arith.constant 0 : index
      %14 = vector.load %arg5[%c0_12, %c0_13] : memref<1x512xf32, #tpu.memory_space<vmem>>, vector<1x512xf32>
      %15 = vector.broadcast %14 : vector<1x512xf32> to vector<16x512xf32>
      %16 = arith.addf %13, %15 : vector<16x512xf32>
      %17 = arith.truncf %16 : vector<16x512xf32> to vector<16x512xbf16>
      %c0_14 = arith.constant 0 : index
      %c0_15 = arith.constant 0 : index
      %18 = vector.load %arg6[%c0_14, %c0_15] : memref<16x512xbf16, #tpu.memory_space<vmem>>, vector<16x512xbf16>
      tpu.vector_store %arg6[%c0_14, %c0_15], %17 {strides = array<i32>} : memref<16x512xbf16, #tpu.memory_space<vmem>>, vector<16x512xbf16>,
    } else {
    }
    return
  }
  func.func @transform_0(%arg0: i32, %arg1: i32, %arg2: i32) -> (i32, i32) {
    %c0_i32 = arith.constant 0 : i32
    return %arg0, %arg2 : i32, i32
  }
  func.func @transform_1(%arg0: i32, %arg1: i32, %arg2: i32) -> (i32, i32) {
    %c0_i32 = arith.constant 0 : i32
    return %arg2, %arg1 : i32, i32
  }
  func.func @transform_2(%arg0: i32, %arg1: i32, %arg2: i32) -> (i32, i32) {
    %c0_i32 = arith.constant 0 : i32
    %c0_i32_0 = arith.constant 0 : i32
    return %c0_i32, %arg1 : i32, i32
  }
  func.func @transform_3(%arg0: i32, %arg1: i32, %arg2: i32) -> (i32, i32) {
    %c0_i32 = arith.constant 0 : i32
    return %arg0, %arg1 : i32, i32
  }
}

module attributes {stable_mosaic.version = 11 : i64} {
  func.func @_flash_attn_kernel(%arg0: i32, %arg1: i32, %arg2: i32, %arg3: i32, %arg4: memref<8x128xbf16, #tpu.memory_space<vmem>>, %arg5: memref<8x128xbf16, #tpu.memory_space<vmem>>, %arg6: memref<8x128xbf16, #tpu.memory_space<vmem>>, %arg7: memref<8x128xbf16, #tpu.memory_space<vmem>>, %arg8: memref<8x1xf32, #tpu.memory_space<vmem>>, %arg9: memref<8x1xf32, #tpu.memory_space<vmem>>, %arg10: memref<8x128xf32, #tpu.memory_space<vmem>>) attributes {dimension_semantics = [#tpu.dimension_semantics<parallel>, #tpu.dimension_semantics<parallel>, #tpu.dimension_semantics<parallel>, #tpu.dimension_semantics<arbitrary>], iteration_bounds = array<i64: 2, 2, 1, 1>, scalar_prefetch = 0 : i64, scratch_operands = 3 : i64, tpu.core_type = #tpu.core_type<tc>, window_params = [{transform_indices = @transform_0, window_bounds = array<i64: 8, 128>}, {transform_indices = @transform_1, window_bounds = array<i64: 8, 128>}, {transform_indices = @transform_2, window_bounds = array<i64: 8, 128>}, {transform_indices = @transform_3, window_bounds = array<i64: 8, 128>}]} {
    %c0_i32 = arith.constant 0 : i32
    %0 = arith.cmpi eq, %arg3, %c0_i32 : i32
    %1 = arith.extui %0 : i1 to i32
    %c0_i32_0 = arith.constant 0 : i32
    %2 = arith.cmpi ne, %1, %c0_i32_0 : i32
    scf.if %2 {
      %cst_24 = arith.constant 0xFF800000 : f32
      %37 = vector.broadcast %cst_24 : f32 to vector<8x1xf32>
      %c0_25 = arith.constant 0 : index
      %c0_26 = arith.constant 0 : index
      %38 = vector.load %arg8[%c0_25, %c0_26] : memref<8x1xf32, #tpu.memory_space<vmem>>, vector<8x1xf32>
      tpu.vector_store %arg8[%c0_25, %c0_26], %37 {strides = array<i32>} : memref<8x1xf32, #tpu.memory_space<vmem>>, vector<8x1xf32>,
      %cst_27 = arith.constant 0.000000e+00 : f32
      %39 = vector.broadcast %cst_27 : f32 to vector<8x1xf32>
      %c0_28 = arith.constant 0 : index
      %c0_29 = arith.constant 0 : index
      %40 = vector.load %arg9[%c0_28, %c0_29] : memref<8x1xf32, #tpu.memory_space<vmem>>, vector<8x1xf32>
      tpu.vector_store %arg9[%c0_28, %c0_29], %39 {strides = array<i32>} : memref<8x1xf32, #tpu.memory_space<vmem>>, vector<8x1xf32>,
      %cst_30 = arith.constant 0.000000e+00 : f32
      %41 = vector.broadcast %cst_30 : f32 to vector<8x128xf32>
      %c0_31 = arith.constant 0 : index
      %c0_32 = arith.constant 0 : index
      %42 = vector.load %arg10[%c0_31, %c0_32] : memref<8x128xf32, #tpu.memory_space<vmem>>, vector<8x128xf32>
      tpu.vector_store %arg10[%c0_31, %c0_32], %41 {strides = array<i32>} : memref<8x128xf32, #tpu.memory_space<vmem>>, vector<8x128xf32>,
    } else {
    }
    %c0 = arith.constant 0 : index
    %c0_1 = arith.constant 0 : index
    %3 = vector.load %arg4[%c0, %c0_1] : memref<8x128xbf16, #tpu.memory_space<vmem>>, vector<8x128xbf16>
    %4 = arith.extf %3 : vector<8x128xbf16> to vector<8x128xf32>
    %cst = arith.constant 0.0883883461 : f32
    %5 = vector.broadcast %cst : f32 to vector<8x128xf32>
    %6 = arith.mulf %4, %5 : vector<8x128xf32>
    %7 = arith.truncf %6 : vector<8x128xf32> to vector<8x128xbf16>
    %c0_2 = arith.constant 0 : index
    %c0_3 = arith.constant 0 : index
    %8 = vector.load %arg5[%c0_2, %c0_3] : memref<8x128xbf16, #tpu.memory_space<vmem>>, vector<8x128xbf16>
    %cst_4 = arith.constant dense<0.000000e+00> : vector<8x8xf32>
    %9 = tpu.matmul %7, %8, %cst_4 {dimension_numbers = #tpu.dot_dimension_numbers<[1], [1], [0], [0], [0, 0, 1, 0], [], []>} : vector<8x128xbf16>, vector<8x128xbf16>, vector<8x8xf32> -> vector<8x8xf32>
    %c0_5 = arith.constant 0 : index
    %c0_6 = arith.constant 0 : index
    %10 = vector.load %arg8[%c0_5, %c0_6] : memref<8x1xf32, #tpu.memory_space<vmem>>, vector<8x1xf32>
    %cst_7 = arith.constant dense<0xFF800000> : vector<8xf32>
    %11 = vector.multi_reduction <maximumf>, %9, %cst_7 [1] : vector<8x8xf32> to vector<8xf32>
    %12 = vector.shape_cast %11 : vector<8xf32> to vector<8x1xf32>
    %13 = arith.maximumf %10, %12 : vector<8x1xf32>
    %14 = arith.subf %10, %13 : vector<8x1xf32>
    %15 = math.exp %14 : vector<8x1xf32>
    %16 = vector.broadcast %13 : vector<8x1xf32> to vector<8x8xf32>
    %17 = arith.subf %9, %16 : vector<8x8xf32>
    %18 = math.exp %17 : vector<8x8xf32>
    %c0_8 = arith.constant 0 : index
    %c0_9 = arith.constant 0 : index
    %19 = vector.load %arg9[%c0_8, %c0_9] : memref<8x1xf32, #tpu.memory_space<vmem>>, vector<8x1xf32>
    %20 = arith.mulf %15, %19 : vector<8x1xf32>
    %cst_10 = arith.constant dense<0.000000e+00> : vector<8xf32>
    %21 = vector.multi_reduction <add>, %18, %cst_10 [1] : vector<8x8xf32> to vector<8xf32>
    %22 = vector.shape_cast %21 : vector<8xf32> to vector<8x1xf32>
    %23 = arith.addf %20, %22 : vector<8x1xf32>
    %c0_11 = arith.constant 0 : index
    %c0_12 = arith.constant 0 : index
    %24 = vector.load %arg9[%c0_11, %c0_12] : memref<8x1xf32, #tpu.memory_space<vmem>>, vector<8x1xf32>
    tpu.vector_store %arg9[%c0_11, %c0_12], %23 {strides = array<i32>} : memref<8x1xf32, #tpu.memory_space<vmem>>, vector<8x1xf32>,
    %c0_13 = arith.constant 0 : index
    %c0_14 = arith.constant 0 : index
    %25 = vector.load %arg10[%c0_13, %c0_14] : memref<8x128xf32, #tpu.memory_space<vmem>>, vector<8x128xf32>
    %26 = vector.broadcast %15 : vector<8x1xf32> to vector<8x128xf32>
    %27 = arith.mulf %26, %25 : vector<8x128xf32>
    %28 = arith.truncf %18 : vector<8x8xf32> to vector<8x8xbf16>
    %c0_15 = arith.constant 0 : index
    %c0_16 = arith.constant 0 : index
    %29 = vector.load %arg6[%c0_15, %c0_16] : memref<8x128xbf16, #tpu.memory_space<vmem>>, vector<8x128xbf16>
    %cst_17 = arith.constant dense<0.000000e+00> : vector<8x128xf32>
    %30 = tpu.matmul %28, %29, %cst_17 {dimension_numbers = #tpu.dot_dimension_numbers<[1], [0], [0], [1], [0, 0, 1, 1], [], []>} : vector<8x8xbf16>, vector<8x128xbf16>, vector<8x128xf32> -> vector<8x128xf32>
    %31 = arith.addf %27, %30 : vector<8x128xf32>
    %c0_18 = arith.constant 0 : index
    %c0_19 = arith.constant 0 : index
    %32 = vector.load %arg10[%c0_18, %c0_19] : memref<8x128xf32, #tpu.memory_space<vmem>>, vector<8x128xf32>
    tpu.vector_store %arg10[%c0_18, %c0_19], %31 {strides = array<i32>} : memref<8x128xf32, #tpu.memory_space<vmem>>, vector<8x128xf32>,
    %c0_20 = arith.constant 0 : index
    %c0_21 = arith.constant 0 : index
    %33 = vector.load %arg8[%c0_20, %c0_21] : memref<8x1xf32, #tpu.memory_space<vmem>>, vector<8x1xf32>
    tpu.vector_store %arg8[%c0_20, %c0_21], %13 {strides = array<i32>} : memref<8x1xf32, #tpu.memory_space<vmem>>, vector<8x1xf32>,
    %c0_i32_22 = arith.constant 0 : i32
    %34 = arith.cmpi eq, %arg3, %c0_i32_22 : i32
    %35 = arith.extui %34 : i1 to i32
    %c0_i32_23 = arith.constant 0 : i32
    %36 = arith.cmpi ne, %35, %c0_i32_23 : i32
    scf.if %36 {
      %c0_24 = arith.constant 0 : index
      %c0_25 = arith.constant 0 : index
      %37 = vector.load %arg10[%c0_24, %c0_25] : memref<8x128xf32, #tpu.memory_space<vmem>>, vector<8x128xf32>
      %c0_26 = arith.constant 0 : index
      %c0_27 = arith.constant 0 : index
      %38 = vector.load %arg9[%c0_26, %c0_27] : memref<8x1xf32, #tpu.memory_space<vmem>>, vector<8x1xf32>
      %39 = vector.broadcast %38 : vector<8x1xf32> to vector<8x128xf32>
      %40 = arith.divf %37, %39 : vector<8x128xf32>
      %41 = arith.truncf %40 : vector<8x128xf32> to vector<8x128xbf16>
      %c0_28 = arith.constant 0 : index
      %c0_29 = arith.constant 0 : index
      %42 = vector.load %arg7[%c0_28, %c0_29] : memref<8x128xbf16, #tpu.memory_space<vmem>>, vector<8x128xbf16>
      tpu.vector_store %arg7[%c0_28, %c0_29], %41 {strides = array<i32>} : memref<8x128xbf16, #tpu.memory_space<vmem>>, vector<8x128xbf16>,
    } else {
    }
    return
  }
  func.func @transform_0(%arg0: i32, %arg1: i32, %arg2: i32, %arg3: i32) -> (i32, i32) {
    %c1_i32 = arith.constant 1 : i32
    %0 = arith.muli %arg0, %c1_i32 : i32
    %1 = arith.addi %0, %arg2 : i32
    %c0_i32 = arith.constant 0 : i32
    %2 = arith.addi %c0_i32, %arg1 : i32
    %c0_i32_0 = arith.constant 0 : i32
    return %1, %2 : i32, i32
  }
  func.func @transform_1(%arg0: i32, %arg1: i32, %arg2: i32, %arg3: i32) -> (i32, i32) {
    %c1_i32 = arith.constant 1 : i32
    %0 = arith.muli %arg0, %c1_i32 : i32
    %1 = arith.addi %0, %arg3 : i32
    %c2_i32 = arith.constant 2 : i32
    %2 = arith.addi %c2_i32, %arg1 : i32
    %c0_i32 = arith.constant 0 : i32
    return %1, %2 : i32, i32
  }
  func.func @transform_2(%arg0: i32, %arg1: i32, %arg2: i32, %arg3: i32) -> (i32, i32) {
    %c1_i32 = arith.constant 1 : i32
    %0 = arith.muli %arg0, %c1_i32 : i32
    %1 = arith.addi %0, %arg3 : i32
    %c4_i32 = arith.constant 4 : i32
    %2 = arith.addi %c4_i32, %arg1 : i32
    %c0_i32 = arith.constant 0 : i32
    return %1, %2 : i32, i32
  }
  func.func @transform_3(%arg0: i32, %arg1: i32, %arg2: i32, %arg3: i32) -> (i32, i32) {
    %c1_i32 = arith.constant 1 : i32
    %0 = arith.muli %arg0, %c1_i32 : i32
    %1 = arith.addi %0, %arg2 : i32
    %c0_i32 = arith.constant 0 : i32
    return %1, %arg1 : i32, i32
  }
}

module attributes {stable_mosaic.version = 11 : i64} {
  func.func @_matmul_res_ln_kernel(%arg0: i32, %arg1: i32, %arg2: memref<16x256xbf16, #tpu.memory_space<vmem>>, %arg3: memref<256x256xbf16, #tpu.memory_space<vmem>>, %arg4: memref<1x256xf32, #tpu.memory_space<vmem>>, %arg5: memref<16x256xf32, #tpu.memory_space<vmem>>, %arg6: memref<1x256xf32, #tpu.memory_space<vmem>>, %arg7: memref<1x256xf32, #tpu.memory_space<vmem>>, %arg8: memref<16x256xf32, #tpu.memory_space<vmem>>, %arg9: memref<16x256xf32, #tpu.memory_space<vmem>>) attributes {dimension_semantics = [#tpu.dimension_semantics<parallel>, #tpu.dimension_semantics<arbitrary>], iteration_bounds = array<i64: 1, 1>, scalar_prefetch = 0 : i64, scratch_operands = 1 : i64, tpu.core_type = #tpu.core_type<tc>, window_params = [{transform_indices = @transform_0, window_bounds = array<i64: 16, 256>}, {transform_indices = @transform_1, window_bounds = array<i64: 256, 256>}, {pipeline_mode = #tpu.pipeline_mode<synchronous>, transform_indices = @transform_2, window_bounds = array<i64: 1, 256>}, {transform_indices = @transform_3, window_bounds = array<i64: 16, 256>}, {pipeline_mode = #tpu.pipeline_mode<synchronous>, transform_indices = @transform_4, window_bounds = array<i64: 1, 256>}, {pipeline_mode = #tpu.pipeline_mode<synchronous>, transform_indices = @transform_5, window_bounds = array<i64: 1, 256>}, {transform_indices = @transform_6, window_bounds = array<i64: 16, 256>}]} {
    %c0_i32 = arith.constant 0 : i32
    %0 = arith.cmpi eq, %arg1, %c0_i32 : i32
    %1 = arith.extui %0 : i1 to i32
    %c0_i32_0 = arith.constant 0 : i32
    %2 = arith.cmpi ne, %1, %c0_i32_0 : i32
    scf.if %2 {
      %cst_10 = arith.constant 0.000000e+00 : f32
      %12 = vector.broadcast %cst_10 : f32 to vector<16x256xf32>
      %c0_11 = arith.constant 0 : index
      %c0_12 = arith.constant 0 : index
      %13 = vector.load %arg9[%c0_11, %c0_12] : memref<16x256xf32, #tpu.memory_space<vmem>>, vector<16x256xf32>
      tpu.vector_store %arg9[%c0_11, %c0_12], %12 {strides = array<i32>} : memref<16x256xf32, #tpu.memory_space<vmem>>, vector<16x256xf32>,
    } else {
    }
    %c0 = arith.constant 0 : index
    %c0_1 = arith.constant 0 : index
    %3 = vector.load %arg9[%c0, %c0_1] : memref<16x256xf32, #tpu.memory_space<vmem>>, vector<16x256xf32>
    %c0_2 = arith.constant 0 : index
    %c0_3 = arith.constant 0 : index
    %4 = vector.load %arg2[%c0_2, %c0_3] : memref<16x256xbf16, #tpu.memory_space<vmem>>, vector<16x256xbf16>
    %c0_4 = arith.constant 0 : index
    %c0_5 = arith.constant 0 : index
    %5 = vector.load %arg3[%c0_4, %c0_5] : memref<256x256xbf16, #tpu.memory_space<vmem>>, vector<256x256xbf16>
    %cst = arith.constant dense<0.000000e+00> : vector<16x256xf32>
    %6 = tpu.matmul %4, %5, %cst {dimension_numbers = #tpu.dot_dimension_numbers<[1], [0], [0], [1], [0, 0, 1, 1], [], []>} : vector<16x256xbf16>, vector<256x256xbf16>, vector<16x256xf32> -> vector<16x256xf32>
    %7 = arith.addf %3, %6 : vector<16x256xf32>
    %c0_6 = arith.constant 0 : index
    %c0_7 = arith.constant 0 : index
    %8 = vector.load %arg9[%c0_6, %c0_7] : memref<16x256xf32, #tpu.memory_space<vmem>>, vector<16x256xf32>
    tpu.vector_store %arg9[%c0_6, %c0_7], %7 {strides = array<i32>} : memref<16x256xf32, #tpu.memory_space<vmem>>, vector<16x256xf32>,
    %c0_i32_8 = arith.constant 0 : i32
    %9 = arith.cmpi eq, %arg1, %c0_i32_8 : i32
    %10 = arith.extui %9 : i1 to i32
    %c0_i32_9 = arith.constant 0 : i32
    %11 = arith.cmpi ne, %10, %c0_i32_9 : i32
    scf.if %11 {
      %c0_10 = arith.constant 0 : index
      %c0_11 = arith.constant 0 : index
      %12 = vector.load %arg9[%c0_10, %c0_11] : memref<16x256xf32, #tpu.memory_space<vmem>>, vector<16x256xf32>
      %c0_12 = arith.constant 0 : index
      %c0_13 = arith.constant 0 : index
      %13 = vector.load %arg4[%c0_12, %c0_13] : memref<1x256xf32, #tpu.memory_space<vmem>>, vector<1x256xf32>
      %14 = vector.broadcast %13 : vector<1x256xf32> to vector<16x256xf32>
      %15 = arith.addf %12, %14 : vector<16x256xf32>
      %c0_14 = arith.constant 0 : index
      %c0_15 = arith.constant 0 : index
      %16 = vector.load %arg5[%c0_14, %c0_15] : memref<16x256xf32, #tpu.memory_space<vmem>>, vector<16x256xf32>
      %17 = arith.addf %15, %16 : vector<16x256xf32>
      %c0_16 = arith.constant 0 : index
      %c0_17 = arith.constant 0 : index
      %18 = vector.load %arg6[%c0_16, %c0_17] : memref<1x256xf32, #tpu.memory_space<vmem>>, vector<1x256xf32>
      %c0_18 = arith.constant 0 : index
      %c0_19 = arith.constant 0 : index
      %19 = vector.load %arg7[%c0_18, %c0_19] : memref<1x256xf32, #tpu.memory_space<vmem>>, vector<1x256xf32>
      %cst_20 = arith.constant dense<0.000000e+00> : vector<16xf32>
      %20 = vector.multi_reduction <add>, %17, %cst_20 [1] : vector<16x256xf32> to vector<16xf32>
      %21 = vector.shape_cast %20 : vector<16xf32> to vector<16x1xf32>
      %cst_21 = arith.constant 2.560000e+02 : f32
      %22 = vector.broadcast %cst_21 : f32 to vector<16x1xf32>
      %23 = arith.divf %21, %22 : vector<16x1xf32>
      %24 = arith.mulf %17, %17 : vector<16x256xf32>
      %cst_22 = arith.constant dense<0.000000e+00> : vector<16xf32>
      %25 = vector.multi_reduction <add>, %24, %cst_22 [1] : vector<16x256xf32> to vector<16xf32>
      %26 = vector.shape_cast %25 : vector<16xf32> to vector<16x1xf32>
      %cst_23 = arith.constant 2.560000e+02 : f32
      %27 = vector.broadcast %cst_23 : f32 to vector<16x1xf32>
      %28 = arith.divf %26, %27 : vector<16x1xf32>
      %29 = arith.mulf %23, %23 : vector<16x1xf32>
      %30 = arith.subf %28, %29 : vector<16x1xf32>
      %cst_24 = arith.constant 9.99999974E-6 : f32
      %31 = vector.broadcast %cst_24 : f32 to vector<16x1xf32>
      %32 = arith.addf %30, %31 : vector<16x1xf32>
      %33 = math.rsqrt %32 : vector<16x1xf32>
      %34 = vector.broadcast %23 : vector<16x1xf32> to vector<16x256xf32>
      %35 = arith.subf %17, %34 : vector<16x256xf32>
      %36 = vector.broadcast %33 : vector<16x1xf32> to vector<16x256xf32>
      %37 = arith.mulf %35, %36 : vector<16x256xf32>
      %38 = vector.broadcast %18 : vector<1x256xf32> to vector<16x256xf32>
      %39 = arith.mulf %37, %38 : vector<16x256xf32>
      %40 = vector.broadcast %19 : vector<1x256xf32> to vector<16x256xf32>
      %41 = arith.addf %39, %40 : vector<16x256xf32>
      %c0_25 = arith.constant 0 : index
      %c0_26 = arith.constant 0 : index
      %42 = vector.load %arg8[%c0_25, %c0_26] : memref<16x256xf32, #tpu.memory_space<vmem>>, vector<16x256xf32>
      tpu.vector_store %arg8[%c0_25, %c0_26], %41 {strides = array<i32>} : memref<16x256xf32, #tpu.memory_space<vmem>>, vector<16x256xf32>,
    } else {
    }
    return
  }
  func.func @transform_0(%arg0: i32, %arg1: i32) -> (i32, i32) {
    %c0_i32 = arith.constant 0 : i32
    return %arg0, %arg1 : i32, i32
  }
  func.func @transform_1(%arg0: i32, %arg1: i32) -> (i32, i32) {
    %c0_i32 = arith.constant 0 : i32
    %c0_i32_0 = arith.constant 0 : i32
    return %arg1, %c0_i32 : i32, i32
  }
  func.func @transform_2(%arg0: i32, %arg1: i32) -> (i32, i32) {
    %c0_i32 = arith.constant 0 : i32
    %c0_i32_0 = arith.constant 0 : i32
    %c0_i32_1 = arith.constant 0 : i32
    return %c0_i32, %c0_i32_0 : i32, i32
  }
  func.func @transform_3(%arg0: i32, %arg1: i32) -> (i32, i32) {
    %c0_i32 = arith.constant 0 : i32
    %c0_i32_0 = arith.constant 0 : i32
    return %arg0, %c0_i32 : i32, i32
  }
  func.func @transform_4(%arg0: i32, %arg1: i32) -> (i32, i32) {
    %c0_i32 = arith.constant 0 : i32
    %c0_i32_0 = arith.constant 0 : i32
    %c0_i32_1 = arith.constant 0 : i32
    return %c0_i32, %c0_i32_0 : i32, i32
  }
  func.func @transform_5(%arg0: i32, %arg1: i32) -> (i32, i32) {
    %c0_i32 = arith.constant 0 : i32
    %c0_i32_0 = arith.constant 0 : i32
    %c0_i32_1 = arith.constant 0 : i32
    return %c0_i32, %c0_i32_0 : i32, i32
  }
  func.func @transform_6(%arg0: i32, %arg1: i32) -> (i32, i32) {
    %c0_i32 = arith.constant 0 : i32
    %c0_i32_0 = arith.constant 0 : i32
    return %arg0, %c0_i32 : i32, i32
  }
}

module attributes {stable_mosaic.version = 11 : i64} {
  func.func @_linear_kernel(%arg0: i32, %arg1: i32, %arg2: i32, %arg3: memref<16x256xf32, #tpu.memory_space<vmem>>, %arg4: memref<256x256xbf16, #tpu.memory_space<vmem>>, %arg5: memref<1x256xf32, #tpu.memory_space<vmem>>, %arg6: memref<16x256xbf16, #tpu.memory_space<vmem>>, %arg7: memref<16x256xf32, #tpu.memory_space<vmem>>) attributes {dimension_semantics = [#tpu.dimension_semantics<parallel>, #tpu.dimension_semantics<parallel>, #tpu.dimension_semantics<arbitrary>], iteration_bounds = array<i64: 1, 1, 1>, scalar_prefetch = 0 : i64, scratch_operands = 1 : i64, tpu.core_type = #tpu.core_type<tc>, window_params = [{transform_indices = @transform_0, window_bounds = array<i64: 16, 256>}, {transform_indices = @transform_1, window_bounds = array<i64: 256, 256>}, {transform_indices = @transform_2, window_bounds = array<i64: 1, 256>}, {transform_indices = @transform_3, window_bounds = array<i64: 16, 256>}]} {
    %c0_i32 = arith.constant 0 : i32
    %0 = arith.cmpi eq, %arg2, %c0_i32 : i32
    %1 = arith.extui %0 : i1 to i32
    %c0_i32_0 = arith.constant 0 : i32
    %2 = arith.cmpi ne, %1, %c0_i32_0 : i32
    scf.if %2 {
      %cst_10 = arith.constant 0.000000e+00 : f32
      %13 = vector.broadcast %cst_10 : f32 to vector<16x256xf32>
      %c0_11 = arith.constant 0 : index
      %c0_12 = arith.constant 0 : index
      %14 = vector.load %arg7[%c0_11, %c0_12] : memref<16x256xf32, #tpu.memory_space<vmem>>, vector<16x256xf32>
      tpu.vector_store %arg7[%c0_11, %c0_12], %13 {strides = array<i32>} : memref<16x256xf32, #tpu.memory_space<vmem>>, vector<16x256xf32>,
    } else {
    }
    %c0 = arith.constant 0 : index
    %c0_1 = arith.constant 0 : index
    %3 = vector.load %arg7[%c0, %c0_1] : memref<16x256xf32, #tpu.memory_space<vmem>>, vector<16x256xf32>
    %c0_2 = arith.constant 0 : index
    %c0_3 = arith.constant 0 : index
    %4 = vector.load %arg3[%c0_2, %c0_3] : memref<16x256xf32, #tpu.memory_space<vmem>>, vector<16x256xf32>
    %5 = arith.truncf %4 : vector<16x256xf32> to vector<16x256xbf16>
    %c0_4 = arith.constant 0 : index
    %c0_5 = arith.constant 0 : index
    %6 = vector.load %arg4[%c0_4, %c0_5] : memref<256x256xbf16, #tpu.memory_space<vmem>>, vector<256x256xbf16>
    %cst = arith.constant dense<0.000000e+00> : vector<16x256xf32>
    %7 = tpu.matmul %5, %6, %cst {dimension_numbers = #tpu.dot_dimension_numbers<[1], [0], [0], [1], [0, 0, 1, 1], [], []>} : vector<16x256xbf16>, vector<256x256xbf16>, vector<16x256xf32> -> vector<16x256xf32>
    %8 = arith.addf %3, %7 : vector<16x256xf32>
    %c0_6 = arith.constant 0 : index
    %c0_7 = arith.constant 0 : index
    %9 = vector.load %arg7[%c0_6, %c0_7] : memref<16x256xf32, #tpu.memory_space<vmem>>, vector<16x256xf32>
    tpu.vector_store %arg7[%c0_6, %c0_7], %8 {strides = array<i32>} : memref<16x256xf32, #tpu.memory_space<vmem>>, vector<16x256xf32>,
    %c0_i32_8 = arith.constant 0 : i32
    %10 = arith.cmpi eq, %arg2, %c0_i32_8 : i32
    %11 = arith.extui %10 : i1 to i32
    %c0_i32_9 = arith.constant 0 : i32
    %12 = arith.cmpi ne, %11, %c0_i32_9 : i32
    scf.if %12 {
      %c0_10 = arith.constant 0 : index
      %c0_11 = arith.constant 0 : index
      %13 = vector.load %arg7[%c0_10, %c0_11] : memref<16x256xf32, #tpu.memory_space<vmem>>, vector<16x256xf32>
      %c0_12 = arith.constant 0 : index
      %c0_13 = arith.constant 0 : index
      %14 = vector.load %arg5[%c0_12, %c0_13] : memref<1x256xf32, #tpu.memory_space<vmem>>, vector<1x256xf32>
      %15 = vector.broadcast %14 : vector<1x256xf32> to vector<16x256xf32>
      %16 = arith.addf %13, %15 : vector<16x256xf32>
      %17 = arith.truncf %16 : vector<16x256xf32> to vector<16x256xbf16>
      %c0_14 = arith.constant 0 : index
      %c0_15 = arith.constant 0 : index
      %18 = vector.load %arg6[%c0_14, %c0_15] : memref<16x256xbf16, #tpu.memory_space<vmem>>, vector<16x256xbf16>
      tpu.vector_store %arg6[%c0_14, %c0_15], %17 {strides = array<i32>} : memref<16x256xbf16, #tpu.memory_space<vmem>>, vector<16x256xbf16>,
    } else {
    }
    return
  }
  func.func @transform_0(%arg0: i32, %arg1: i32, %arg2: i32) -> (i32, i32) {
    %c0_i32 = arith.constant 0 : i32
    return %arg0, %arg2 : i32, i32
  }
  func.func @transform_1(%arg0: i32, %arg1: i32, %arg2: i32) -> (i32, i32) {
    %c0_i32 = arith.constant 0 : i32
    return %arg2, %arg1 : i32, i32
  }
  func.func @transform_2(%arg0: i32, %arg1: i32, %arg2: i32) -> (i32, i32) {
    %c0_i32 = arith.constant 0 : i32
    %c0_i32_0 = arith.constant 0 : i32
    return %c0_i32, %arg1 : i32, i32
  }
  func.func @transform_3(%arg0: i32, %arg1: i32, %arg2: i32) -> (i32, i32) {
    %c0_i32 = arith.constant 0 : i32
    return %arg0, %arg1 : i32, i32
  }
}

module attributes {stable_mosaic.version = 11 : i64} {
  func.func @_flash_attn_kernel(%arg0: i32, %arg1: i32, %arg2: i32, %arg3: i32, %arg4: memref<8x128xbf16, #tpu.memory_space<vmem>>, %arg5: memref<8x128xbf16, #tpu.memory_space<vmem>>, %arg6: memref<8x128xbf16, #tpu.memory_space<vmem>>, %arg7: memref<8x128xbf16, #tpu.memory_space<vmem>>, %arg8: memref<8x1xf32, #tpu.memory_space<vmem>>, %arg9: memref<8x1xf32, #tpu.memory_space<vmem>>, %arg10: memref<8x128xf32, #tpu.memory_space<vmem>>) attributes {dimension_semantics = [#tpu.dimension_semantics<parallel>, #tpu.dimension_semantics<parallel>, #tpu.dimension_semantics<parallel>, #tpu.dimension_semantics<arbitrary>], iteration_bounds = array<i64: 2, 2, 1, 1>, scalar_prefetch = 0 : i64, scratch_operands = 3 : i64, tpu.core_type = #tpu.core_type<tc>, window_params = [{transform_indices = @transform_0, window_bounds = array<i64: 8, 128>}, {transform_indices = @transform_1, window_bounds = array<i64: 8, 128>}, {transform_indices = @transform_2, window_bounds = array<i64: 8, 128>}, {transform_indices = @transform_3, window_bounds = array<i64: 8, 128>}]} {
    %c0_i32 = arith.constant 0 : i32
    %0 = arith.cmpi eq, %arg3, %c0_i32 : i32
    %1 = arith.extui %0 : i1 to i32
    %c0_i32_0 = arith.constant 0 : i32
    %2 = arith.cmpi ne, %1, %c0_i32_0 : i32
    scf.if %2 {
      %cst_24 = arith.constant 0xFF800000 : f32
      %37 = vector.broadcast %cst_24 : f32 to vector<8x1xf32>
      %c0_25 = arith.constant 0 : index
      %c0_26 = arith.constant 0 : index
      %38 = vector.load %arg8[%c0_25, %c0_26] : memref<8x1xf32, #tpu.memory_space<vmem>>, vector<8x1xf32>
      tpu.vector_store %arg8[%c0_25, %c0_26], %37 {strides = array<i32>} : memref<8x1xf32, #tpu.memory_space<vmem>>, vector<8x1xf32>,
      %cst_27 = arith.constant 0.000000e+00 : f32
      %39 = vector.broadcast %cst_27 : f32 to vector<8x1xf32>
      %c0_28 = arith.constant 0 : index
      %c0_29 = arith.constant 0 : index
      %40 = vector.load %arg9[%c0_28, %c0_29] : memref<8x1xf32, #tpu.memory_space<vmem>>, vector<8x1xf32>
      tpu.vector_store %arg9[%c0_28, %c0_29], %39 {strides = array<i32>} : memref<8x1xf32, #tpu.memory_space<vmem>>, vector<8x1xf32>,
      %cst_30 = arith.constant 0.000000e+00 : f32
      %41 = vector.broadcast %cst_30 : f32 to vector<8x128xf32>
      %c0_31 = arith.constant 0 : index
      %c0_32 = arith.constant 0 : index
      %42 = vector.load %arg10[%c0_31, %c0_32] : memref<8x128xf32, #tpu.memory_space<vmem>>, vector<8x128xf32>
      tpu.vector_store %arg10[%c0_31, %c0_32], %41 {strides = array<i32>} : memref<8x128xf32, #tpu.memory_space<vmem>>, vector<8x128xf32>,
    } else {
    }
    %c0 = arith.constant 0 : index
    %c0_1 = arith.constant 0 : index
    %3 = vector.load %arg4[%c0, %c0_1] : memref<8x128xbf16, #tpu.memory_space<vmem>>, vector<8x128xbf16>
    %4 = arith.extf %3 : vector<8x128xbf16> to vector<8x128xf32>
    %cst = arith.constant 0.0883883461 : f32
    %5 = vector.broadcast %cst : f32 to vector<8x128xf32>
    %6 = arith.mulf %4, %5 : vector<8x128xf32>
    %7 = arith.truncf %6 : vector<8x128xf32> to vector<8x128xbf16>
    %c0_2 = arith.constant 0 : index
    %c0_3 = arith.constant 0 : index
    %8 = vector.load %arg5[%c0_2, %c0_3] : memref<8x128xbf16, #tpu.memory_space<vmem>>, vector<8x128xbf16>
    %cst_4 = arith.constant dense<0.000000e+00> : vector<8x8xf32>
    %9 = tpu.matmul %7, %8, %cst_4 {dimension_numbers = #tpu.dot_dimension_numbers<[1], [1], [0], [0], [0, 0, 1, 0], [], []>} : vector<8x128xbf16>, vector<8x128xbf16>, vector<8x8xf32> -> vector<8x8xf32>
    %c0_5 = arith.constant 0 : index
    %c0_6 = arith.constant 0 : index
    %10 = vector.load %arg8[%c0_5, %c0_6] : memref<8x1xf32, #tpu.memory_space<vmem>>, vector<8x1xf32>
    %cst_7 = arith.constant dense<0xFF800000> : vector<8xf32>
    %11 = vector.multi_reduction <maximumf>, %9, %cst_7 [1] : vector<8x8xf32> to vector<8xf32>
    %12 = vector.shape_cast %11 : vector<8xf32> to vector<8x1xf32>
    %13 = arith.maximumf %10, %12 : vector<8x1xf32>
    %14 = arith.subf %10, %13 : vector<8x1xf32>
    %15 = math.exp %14 : vector<8x1xf32>
    %16 = vector.broadcast %13 : vector<8x1xf32> to vector<8x8xf32>
    %17 = arith.subf %9, %16 : vector<8x8xf32>
    %18 = math.exp %17 : vector<8x8xf32>
    %c0_8 = arith.constant 0 : index
    %c0_9 = arith.constant 0 : index
    %19 = vector.load %arg9[%c0_8, %c0_9] : memref<8x1xf32, #tpu.memory_space<vmem>>, vector<8x1xf32>
    %20 = arith.mulf %15, %19 : vector<8x1xf32>
    %cst_10 = arith.constant dense<0.000000e+00> : vector<8xf32>
    %21 = vector.multi_reduction <add>, %18, %cst_10 [1] : vector<8x8xf32> to vector<8xf32>
    %22 = vector.shape_cast %21 : vector<8xf32> to vector<8x1xf32>
    %23 = arith.addf %20, %22 : vector<8x1xf32>
    %c0_11 = arith.constant 0 : index
    %c0_12 = arith.constant 0 : index
    %24 = vector.load %arg9[%c0_11, %c0_12] : memref<8x1xf32, #tpu.memory_space<vmem>>, vector<8x1xf32>
    tpu.vector_store %arg9[%c0_11, %c0_12], %23 {strides = array<i32>} : memref<8x1xf32, #tpu.memory_space<vmem>>, vector<8x1xf32>,
    %c0_13 = arith.constant 0 : index
    %c0_14 = arith.constant 0 : index
    %25 = vector.load %arg10[%c0_13, %c0_14] : memref<8x128xf32, #tpu.memory_space<vmem>>, vector<8x128xf32>
    %26 = vector.broadcast %15 : vector<8x1xf32> to vector<8x128xf32>
    %27 = arith.mulf %26, %25 : vector<8x128xf32>
    %28 = arith.truncf %18 : vector<8x8xf32> to vector<8x8xbf16>
    %c0_15 = arith.constant 0 : index
    %c0_16 = arith.constant 0 : index
    %29 = vector.load %arg6[%c0_15, %c0_16] : memref<8x128xbf16, #tpu.memory_space<vmem>>, vector<8x128xbf16>
    %cst_17 = arith.constant dense<0.000000e+00> : vector<8x128xf32>
    %30 = tpu.matmul %28, %29, %cst_17 {dimension_numbers = #tpu.dot_dimension_numbers<[1], [0], [0], [1], [0, 0, 1, 1], [], []>} : vector<8x8xbf16>, vector<8x128xbf16>, vector<8x128xf32> -> vector<8x128xf32>
    %31 = arith.addf %27, %30 : vector<8x128xf32>
    %c0_18 = arith.constant 0 : index
    %c0_19 = arith.constant 0 : index
    %32 = vector.load %arg10[%c0_18, %c0_19] : memref<8x128xf32, #tpu.memory_space<vmem>>, vector<8x128xf32>
    tpu.vector_store %arg10[%c0_18, %c0_19], %31 {strides = array<i32>} : memref<8x128xf32, #tpu.memory_space<vmem>>, vector<8x128xf32>,
    %c0_20 = arith.constant 0 : index
    %c0_21 = arith.constant 0 : index
    %33 = vector.load %arg8[%c0_20, %c0_21] : memref<8x1xf32, #tpu.memory_space<vmem>>, vector<8x1xf32>
    tpu.vector_store %arg8[%c0_20, %c0_21], %13 {strides = array<i32>} : memref<8x1xf32, #tpu.memory_space<vmem>>, vector<8x1xf32>,
    %c0_i32_22 = arith.constant 0 : i32
    %34 = arith.cmpi eq, %arg3, %c0_i32_22 : i32
    %35 = arith.extui %34 : i1 to i32
    %c0_i32_23 = arith.constant 0 : i32
    %36 = arith.cmpi ne, %35, %c0_i32_23 : i32
    scf.if %36 {
      %c0_24 = arith.constant 0 : index
      %c0_25 = arith.constant 0 : index
      %37 = vector.load %arg10[%c0_24, %c0_25] : memref<8x128xf32, #tpu.memory_space<vmem>>, vector<8x128xf32>
      %c0_26 = arith.constant 0 : index
      %c0_27 = arith.constant 0 : index
      %38 = vector.load %arg9[%c0_26, %c0_27] : memref<8x1xf32, #tpu.memory_space<vmem>>, vector<8x1xf32>
      %39 = vector.broadcast %38 : vector<8x1xf32> to vector<8x128xf32>
      %40 = arith.divf %37, %39 : vector<8x128xf32>
      %41 = arith.truncf %40 : vector<8x128xf32> to vector<8x128xbf16>
      %c0_28 = arith.constant 0 : index
      %c0_29 = arith.constant 0 : index
      %42 = vector.load %arg7[%c0_28, %c0_29] : memref<8x128xbf16, #tpu.memory_space<vmem>>, vector<8x128xbf16>
      tpu.vector_store %arg7[%c0_28, %c0_29], %41 {strides = array<i32>} : memref<8x128xbf16, #tpu.memory_space<vmem>>, vector<8x128xbf16>,
    } else {
    }
    return
  }
  func.func @transform_0(%arg0: i32, %arg1: i32, %arg2: i32, %arg3: i32) -> (i32, i32) {
    %c1_i32 = arith.constant 1 : i32
    %0 = arith.muli %arg0, %c1_i32 : i32
    %1 = arith.addi %0, %arg2 : i32
    %c0_i32 = arith.constant 0 : i32
    %2 = arith.addi %c0_i32, %arg1 : i32
    %c0_i32_0 = arith.constant 0 : i32
    return %1, %2 : i32, i32
  }
  func.func @transform_1(%arg0: i32, %arg1: i32, %arg2: i32, %arg3: i32) -> (i32, i32) {
    %c1_i32 = arith.constant 1 : i32
    %0 = arith.muli %arg0, %c1_i32 : i32
    %1 = arith.addi %0, %arg3 : i32
    %c0_i32 = arith.constant 0 : i32
    %2 = arith.addi %c0_i32, %arg1 : i32
    %c0_i32_0 = arith.constant 0 : i32
    return %1, %2 : i32, i32
  }
  func.func @transform_2(%arg0: i32, %arg1: i32, %arg2: i32, %arg3: i32) -> (i32, i32) {
    %c1_i32 = arith.constant 1 : i32
    %0 = arith.muli %arg0, %c1_i32 : i32
    %1 = arith.addi %0, %arg3 : i32
    %c2_i32 = arith.constant 2 : i32
    %2 = arith.addi %c2_i32, %arg1 : i32
    %c0_i32 = arith.constant 0 : i32
    return %1, %2 : i32, i32
  }
  func.func @transform_3(%arg0: i32, %arg1: i32, %arg2: i32, %arg3: i32) -> (i32, i32) {
    %c1_i32 = arith.constant 1 : i32
    %0 = arith.muli %arg0, %c1_i32 : i32
    %1 = arith.addi %0, %arg2 : i32
    %c0_i32 = arith.constant 0 : i32
    return %1, %arg1 : i32, i32
  }
}

module attributes {stable_mosaic.version = 11 : i64} {
  func.func @_matmul_res_ln_kernel(%arg0: i32, %arg1: i32, %arg2: memref<16x256xbf16, #tpu.memory_space<vmem>>, %arg3: memref<256x256xbf16, #tpu.memory_space<vmem>>, %arg4: memref<1x256xf32, #tpu.memory_space<vmem>>, %arg5: memref<16x256xf32, #tpu.memory_space<vmem>>, %arg6: memref<1x256xf32, #tpu.memory_space<vmem>>, %arg7: memref<1x256xf32, #tpu.memory_space<vmem>>, %arg8: memref<16x256xf32, #tpu.memory_space<vmem>>, %arg9: memref<16x256xf32, #tpu.memory_space<vmem>>) attributes {dimension_semantics = [#tpu.dimension_semantics<parallel>, #tpu.dimension_semantics<arbitrary>], iteration_bounds = array<i64: 1, 1>, scalar_prefetch = 0 : i64, scratch_operands = 1 : i64, tpu.core_type = #tpu.core_type<tc>, window_params = [{transform_indices = @transform_0, window_bounds = array<i64: 16, 256>}, {transform_indices = @transform_1, window_bounds = array<i64: 256, 256>}, {pipeline_mode = #tpu.pipeline_mode<synchronous>, transform_indices = @transform_2, window_bounds = array<i64: 1, 256>}, {transform_indices = @transform_3, window_bounds = array<i64: 16, 256>}, {pipeline_mode = #tpu.pipeline_mode<synchronous>, transform_indices = @transform_4, window_bounds = array<i64: 1, 256>}, {pipeline_mode = #tpu.pipeline_mode<synchronous>, transform_indices = @transform_5, window_bounds = array<i64: 1, 256>}, {transform_indices = @transform_6, window_bounds = array<i64: 16, 256>}]} {
    %c0_i32 = arith.constant 0 : i32
    %0 = arith.cmpi eq, %arg1, %c0_i32 : i32
    %1 = arith.extui %0 : i1 to i32
    %c0_i32_0 = arith.constant 0 : i32
    %2 = arith.cmpi ne, %1, %c0_i32_0 : i32
    scf.if %2 {
      %cst_10 = arith.constant 0.000000e+00 : f32
      %12 = vector.broadcast %cst_10 : f32 to vector<16x256xf32>
      %c0_11 = arith.constant 0 : index
      %c0_12 = arith.constant 0 : index
      %13 = vector.load %arg9[%c0_11, %c0_12] : memref<16x256xf32, #tpu.memory_space<vmem>>, vector<16x256xf32>
      tpu.vector_store %arg9[%c0_11, %c0_12], %12 {strides = array<i32>} : memref<16x256xf32, #tpu.memory_space<vmem>>, vector<16x256xf32>,
    } else {
    }
    %c0 = arith.constant 0 : index
    %c0_1 = arith.constant 0 : index
    %3 = vector.load %arg9[%c0, %c0_1] : memref<16x256xf32, #tpu.memory_space<vmem>>, vector<16x256xf32>
    %c0_2 = arith.constant 0 : index
    %c0_3 = arith.constant 0 : index
    %4 = vector.load %arg2[%c0_2, %c0_3] : memref<16x256xbf16, #tpu.memory_space<vmem>>, vector<16x256xbf16>
    %c0_4 = arith.constant 0 : index
    %c0_5 = arith.constant 0 : index
    %5 = vector.load %arg3[%c0_4, %c0_5] : memref<256x256xbf16, #tpu.memory_space<vmem>>, vector<256x256xbf16>
    %cst = arith.constant dense<0.000000e+00> : vector<16x256xf32>
    %6 = tpu.matmul %4, %5, %cst {dimension_numbers = #tpu.dot_dimension_numbers<[1], [0], [0], [1], [0, 0, 1, 1], [], []>} : vector<16x256xbf16>, vector<256x256xbf16>, vector<16x256xf32> -> vector<16x256xf32>
    %7 = arith.addf %3, %6 : vector<16x256xf32>
    %c0_6 = arith.constant 0 : index
    %c0_7 = arith.constant 0 : index
    %8 = vector.load %arg9[%c0_6, %c0_7] : memref<16x256xf32, #tpu.memory_space<vmem>>, vector<16x256xf32>
    tpu.vector_store %arg9[%c0_6, %c0_7], %7 {strides = array<i32>} : memref<16x256xf32, #tpu.memory_space<vmem>>, vector<16x256xf32>,
    %c0_i32_8 = arith.constant 0 : i32
    %9 = arith.cmpi eq, %arg1, %c0_i32_8 : i32
    %10 = arith.extui %9 : i1 to i32
    %c0_i32_9 = arith.constant 0 : i32
    %11 = arith.cmpi ne, %10, %c0_i32_9 : i32
    scf.if %11 {
      %c0_10 = arith.constant 0 : index
      %c0_11 = arith.constant 0 : index
      %12 = vector.load %arg9[%c0_10, %c0_11] : memref<16x256xf32, #tpu.memory_space<vmem>>, vector<16x256xf32>
      %c0_12 = arith.constant 0 : index
      %c0_13 = arith.constant 0 : index
      %13 = vector.load %arg4[%c0_12, %c0_13] : memref<1x256xf32, #tpu.memory_space<vmem>>, vector<1x256xf32>
      %14 = vector.broadcast %13 : vector<1x256xf32> to vector<16x256xf32>
      %15 = arith.addf %12, %14 : vector<16x256xf32>
      %c0_14 = arith.constant 0 : index
      %c0_15 = arith.constant 0 : index
      %16 = vector.load %arg5[%c0_14, %c0_15] : memref<16x256xf32, #tpu.memory_space<vmem>>, vector<16x256xf32>
      %17 = arith.addf %15, %16 : vector<16x256xf32>
      %c0_16 = arith.constant 0 : index
      %c0_17 = arith.constant 0 : index
      %18 = vector.load %arg6[%c0_16, %c0_17] : memref<1x256xf32, #tpu.memory_space<vmem>>, vector<1x256xf32>
      %c0_18 = arith.constant 0 : index
      %c0_19 = arith.constant 0 : index
      %19 = vector.load %arg7[%c0_18, %c0_19] : memref<1x256xf32, #tpu.memory_space<vmem>>, vector<1x256xf32>
      %cst_20 = arith.constant dense<0.000000e+00> : vector<16xf32>
      %20 = vector.multi_reduction <add>, %17, %cst_20 [1] : vector<16x256xf32> to vector<16xf32>
      %21 = vector.shape_cast %20 : vector<16xf32> to vector<16x1xf32>
      %cst_21 = arith.constant 2.560000e+02 : f32
      %22 = vector.broadcast %cst_21 : f32 to vector<16x1xf32>
      %23 = arith.divf %21, %22 : vector<16x1xf32>
      %24 = arith.mulf %17, %17 : vector<16x256xf32>
      %cst_22 = arith.constant dense<0.000000e+00> : vector<16xf32>
      %25 = vector.multi_reduction <add>, %24, %cst_22 [1] : vector<16x256xf32> to vector<16xf32>
      %26 = vector.shape_cast %25 : vector<16xf32> to vector<16x1xf32>
      %cst_23 = arith.constant 2.560000e+02 : f32
      %27 = vector.broadcast %cst_23 : f32 to vector<16x1xf32>
      %28 = arith.divf %26, %27 : vector<16x1xf32>
      %29 = arith.mulf %23, %23 : vector<16x1xf32>
      %30 = arith.subf %28, %29 : vector<16x1xf32>
      %cst_24 = arith.constant 9.99999974E-6 : f32
      %31 = vector.broadcast %cst_24 : f32 to vector<16x1xf32>
      %32 = arith.addf %30, %31 : vector<16x1xf32>
      %33 = math.rsqrt %32 : vector<16x1xf32>
      %34 = vector.broadcast %23 : vector<16x1xf32> to vector<16x256xf32>
      %35 = arith.subf %17, %34 : vector<16x256xf32>
      %36 = vector.broadcast %33 : vector<16x1xf32> to vector<16x256xf32>
      %37 = arith.mulf %35, %36 : vector<16x256xf32>
      %38 = vector.broadcast %18 : vector<1x256xf32> to vector<16x256xf32>
      %39 = arith.mulf %37, %38 : vector<16x256xf32>
      %40 = vector.broadcast %19 : vector<1x256xf32> to vector<16x256xf32>
      %41 = arith.addf %39, %40 : vector<16x256xf32>
      %c0_25 = arith.constant 0 : index
      %c0_26 = arith.constant 0 : index
      %42 = vector.load %arg8[%c0_25, %c0_26] : memref<16x256xf32, #tpu.memory_space<vmem>>, vector<16x256xf32>
      tpu.vector_store %arg8[%c0_25, %c0_26], %41 {strides = array<i32>} : memref<16x256xf32, #tpu.memory_space<vmem>>, vector<16x256xf32>,
    } else {
    }
    return
  }
  func.func @transform_0(%arg0: i32, %arg1: i32) -> (i32, i32) {
    %c0_i32 = arith.constant 0 : i32
    return %arg0, %arg1 : i32, i32
  }
  func.func @transform_1(%arg0: i32, %arg1: i32) -> (i32, i32) {
    %c0_i32 = arith.constant 0 : i32
    %c0_i32_0 = arith.constant 0 : i32
    return %arg1, %c0_i32 : i32, i32
  }
  func.func @transform_2(%arg0: i32, %arg1: i32) -> (i32, i32) {
    %c0_i32 = arith.constant 0 : i32
    %c0_i32_0 = arith.constant 0 : i32
    %c0_i32_1 = arith.constant 0 : i32
    return %c0_i32, %c0_i32_0 : i32, i32
  }
  func.func @transform_3(%arg0: i32, %arg1: i32) -> (i32, i32) {
    %c0_i32 = arith.constant 0 : i32
    %c0_i32_0 = arith.constant 0 : i32
    return %arg0, %c0_i32 : i32, i32
  }
  func.func @transform_4(%arg0: i32, %arg1: i32) -> (i32, i32) {
    %c0_i32 = arith.constant 0 : i32
    %c0_i32_0 = arith.constant 0 : i32
    %c0_i32_1 = arith.constant 0 : i32
    return %c0_i32, %c0_i32_0 : i32, i32
  }
  func.func @transform_5(%arg0: i32, %arg1: i32) -> (i32, i32) {
    %c0_i32 = arith.constant 0 : i32
    %c0_i32_0 = arith.constant 0 : i32
    %c0_i32_1 = arith.constant 0 : i32
    return %c0_i32, %c0_i32_0 : i32, i32
  }
  func.func @transform_6(%arg0: i32, %arg1: i32) -> (i32, i32) {
    %c0_i32 = arith.constant 0 : i32
    %c0_i32_0 = arith.constant 0 : i32
    return %arg0, %c0_i32 : i32, i32
  }
}

module attributes {stable_mosaic.version = 11 : i64} {
  func.func @_ffn_kernel(%arg0: i32, %arg1: i32, %arg2: memref<16x256xf32, #tpu.memory_space<vmem>>, %arg3: memref<256x256xbf16, #tpu.memory_space<vmem>>, %arg4: memref<1x256xf32, #tpu.memory_space<vmem>>, %arg5: memref<256x256xbf16, #tpu.memory_space<vmem>>, %arg6: memref<1x256xf32, #tpu.memory_space<vmem>>, %arg7: memref<1x256xf32, #tpu.memory_space<vmem>>, %arg8: memref<1x256xf32, #tpu.memory_space<vmem>>, %arg9: memref<16x256xf32, #tpu.memory_space<vmem>>, %arg10: memref<16x256xf32, #tpu.memory_space<vmem>>) attributes {dimension_semantics = [#tpu.dimension_semantics<parallel>, #tpu.dimension_semantics<arbitrary>], iteration_bounds = array<i64: 1, 4>, scalar_prefetch = 0 : i64, scratch_operands = 1 : i64, tpu.core_type = #tpu.core_type<tc>, window_params = [{transform_indices = @transform_0, window_bounds = array<i64: 16, 256>}, {transform_indices = @transform_1, window_bounds = array<i64: 256, 256>}, {transform_indices = @transform_2, window_bounds = array<i64: 1, 256>}, {transform_indices = @transform_3, window_bounds = array<i64: 256, 256>}, {pipeline_mode = #tpu.pipeline_mode<synchronous>, transform_indices = @transform_4, window_bounds = array<i64: 1, 256>}, {pipeline_mode = #tpu.pipeline_mode<synchronous>, transform_indices = @transform_5, window_bounds = array<i64: 1, 256>}, {pipeline_mode = #tpu.pipeline_mode<synchronous>, transform_indices = @transform_6, window_bounds = array<i64: 1, 256>}, {transform_indices = @transform_7, window_bounds = array<i64: 16, 256>}]} {
    %c0_i32 = arith.constant 0 : i32
    %0 = arith.cmpi eq, %arg1, %c0_i32 : i32
    %1 = arith.extui %0 : i1 to i32
    %c0_i32_0 = arith.constant 0 : i32
    %2 = arith.cmpi ne, %1, %c0_i32_0 : i32
    scf.if %2 {
      %cst_17 = arith.constant 0.000000e+00 : f32
      %27 = vector.broadcast %cst_17 : f32 to vector<16x256xf32>
      %c0_18 = arith.constant 0 : index
      %c0_19 = arith.constant 0 : index
      %28 = vector.load %arg10[%c0_18, %c0_19] : memref<16x256xf32, #tpu.memory_space<vmem>>, vector<16x256xf32>
      tpu.vector_store %arg10[%c0_18, %c0_19], %27 {strides = array<i32>} : memref<16x256xf32, #tpu.memory_space<vmem>>, vector<16x256xf32>,
    } else {
    }
    %c0 = arith.constant 0 : index
    %c0_1 = arith.constant 0 : index
    %3 = vector.load %arg2[%c0, %c0_1] : memref<16x256xf32, #tpu.memory_space<vmem>>, vector<16x256xf32>
    %4 = arith.truncf %3 : vector<16x256xf32> to vector<16x256xbf16>
    %c0_2 = arith.constant 0 : index
    %c0_3 = arith.constant 0 : index
    %5 = vector.load %arg3[%c0_2, %c0_3] : memref<256x256xbf16, #tpu.memory_space<vmem>>, vector<256x256xbf16>
    %cst = arith.constant dense<0.000000e+00> : vector<16x256xf32>
    %6 = tpu.matmul %4, %5, %cst {dimension_numbers = #tpu.dot_dimension_numbers<[1], [0], [0], [1], [0, 0, 1, 1], [], []>} : vector<16x256xbf16>, vector<256x256xbf16>, vector<16x256xf32> -> vector<16x256xf32>
    %c0_4 = arith.constant 0 : index
    %c0_5 = arith.constant 0 : index
    %7 = vector.load %arg4[%c0_4, %c0_5] : memref<1x256xf32, #tpu.memory_space<vmem>>, vector<1x256xf32>
    %8 = vector.broadcast %7 : vector<1x256xf32> to vector<16x256xf32>
    %9 = arith.addf %6, %8 : vector<16x256xf32>
    %cst_6 = arith.constant 5.000000e-01 : f32
    %10 = vector.broadcast %cst_6 : f32 to vector<16x256xf32>
    %11 = arith.mulf %10, %9 : vector<16x256xf32>
    %cst_7 = arith.constant 0.707106769 : f32
    %12 = vector.broadcast %cst_7 : f32 to vector<16x256xf32>
    %13 = arith.mulf %9, %12 : vector<16x256xf32>
    %14 = math.erf %13 : vector<16x256xf32>
    %cst_8 = arith.constant 1.000000e+00 : f32
    %15 = vector.broadcast %cst_8 : f32 to vector<16x256xf32>
    %16 = arith.addf %15, %14 : vector<16x256xf32>
    %17 = arith.mulf %11, %16 : vector<16x256xf32>
    %c0_9 = arith.constant 0 : index
    %c0_10 = arith.constant 0 : index
    %18 = vector.load %arg10[%c0_9, %c0_10] : memref<16x256xf32, #tpu.memory_space<vmem>>, vector<16x256xf32>
    %19 = arith.truncf %17 : vector<16x256xf32> to vector<16x256xbf16>
    %c0_11 = arith.constant 0 : index
    %c0_12 = arith.constant 0 : index
    %20 = vector.load %arg5[%c0_11, %c0_12] : memref<256x256xbf16, #tpu.memory_space<vmem>>, vector<256x256xbf16>
    %cst_13 = arith.constant dense<0.000000e+00> : vector<16x256xf32>
    %21 = tpu.matmul %19, %20, %cst_13 {dimension_numbers = #tpu.dot_dimension_numbers<[1], [0], [0], [1], [0, 0, 1, 1], [], []>} : vector<16x256xbf16>, vector<256x256xbf16>, vector<16x256xf32> -> vector<16x256xf32>
    %22 = arith.addf %18, %21 : vector<16x256xf32>
    %c0_14 = arith.constant 0 : index
    %c0_15 = arith.constant 0 : index
    %23 = vector.load %arg10[%c0_14, %c0_15] : memref<16x256xf32, #tpu.memory_space<vmem>>, vector<16x256xf32>
    tpu.vector_store %arg10[%c0_14, %c0_15], %22 {strides = array<i32>} : memref<16x256xf32, #tpu.memory_space<vmem>>, vector<16x256xf32>,
    %c3_i32 = arith.constant 3 : i32
    %24 = arith.cmpi eq, %arg1, %c3_i32 : i32
    %25 = arith.extui %24 : i1 to i32
    %c0_i32_16 = arith.constant 0 : i32
    %26 = arith.cmpi ne, %25, %c0_i32_16 : i32
    scf.if %26 {
      %c0_17 = arith.constant 0 : index
      %c0_18 = arith.constant 0 : index
      %27 = vector.load %arg10[%c0_17, %c0_18] : memref<16x256xf32, #tpu.memory_space<vmem>>, vector<16x256xf32>
      %c0_19 = arith.constant 0 : index
      %c0_20 = arith.constant 0 : index
      %28 = vector.load %arg6[%c0_19, %c0_20] : memref<1x256xf32, #tpu.memory_space<vmem>>, vector<1x256xf32>
      %29 = vector.broadcast %28 : vector<1x256xf32> to vector<16x256xf32>
      %30 = arith.addf %27, %29 : vector<16x256xf32>
      %c0_21 = arith.constant 0 : index
      %c0_22 = arith.constant 0 : index
      %31 = vector.load %arg2[%c0_21, %c0_22] : memref<16x256xf32, #tpu.memory_space<vmem>>, vector<16x256xf32>
      %32 = arith.addf %30, %31 : vector<16x256xf32>
      %c0_23 = arith.constant 0 : index
      %c0_24 = arith.constant 0 : index
      %33 = vector.load %arg7[%c0_23, %c0_24] : memref<1x256xf32, #tpu.memory_space<vmem>>, vector<1x256xf32>
      %c0_25 = arith.constant 0 : index
      %c0_26 = arith.constant 0 : index
      %34 = vector.load %arg8[%c0_25, %c0_26] : memref<1x256xf32, #tpu.memory_space<vmem>>, vector<1x256xf32>
      %cst_27 = arith.constant dense<0.000000e+00> : vector<16xf32>
      %35 = vector.multi_reduction <add>, %32, %cst_27 [1] : vector<16x256xf32> to vector<16xf32>
      %36 = vector.shape_cast %35 : vector<16xf32> to vector<16x1xf32>
      %cst_28 = arith.constant 2.560000e+02 : f32
      %37 = vector.broadcast %cst_28 : f32 to vector<16x1xf32>
      %38 = arith.divf %36, %37 : vector<16x1xf32>
      %39 = arith.mulf %32, %32 : vector<16x256xf32>
      %cst_29 = arith.constant dense<0.000000e+00> : vector<16xf32>
      %40 = vector.multi_reduction <add>, %39, %cst_29 [1] : vector<16x256xf32> to vector<16xf32>
      %41 = vector.shape_cast %40 : vector<16xf32> to vector<16x1xf32>
      %cst_30 = arith.constant 2.560000e+02 : f32
      %42 = vector.broadcast %cst_30 : f32 to vector<16x1xf32>
      %43 = arith.divf %41, %42 : vector<16x1xf32>
      %44 = arith.mulf %38, %38 : vector<16x1xf32>
      %45 = arith.subf %43, %44 : vector<16x1xf32>
      %cst_31 = arith.constant 9.99999974E-6 : f32
      %46 = vector.broadcast %cst_31 : f32 to vector<16x1xf32>
      %47 = arith.addf %45, %46 : vector<16x1xf32>
      %48 = math.rsqrt %47 : vector<16x1xf32>
      %49 = vector.broadcast %38 : vector<16x1xf32> to vector<16x256xf32>
      %50 = arith.subf %32, %49 : vector<16x256xf32>
      %51 = vector.broadcast %48 : vector<16x1xf32> to vector<16x256xf32>
      %52 = arith.mulf %50, %51 : vector<16x256xf32>
      %53 = vector.broadcast %33 : vector<1x256xf32> to vector<16x256xf32>
      %54 = arith.mulf %52, %53 : vector<16x256xf32>
      %55 = vector.broadcast %34 : vector<1x256xf32> to vector<16x256xf32>
      %56 = arith.addf %54, %55 : vector<16x256xf32>
      %c0_32 = arith.constant 0 : index
      %c0_33 = arith.constant 0 : index
      %57 = vector.load %arg9[%c0_32, %c0_33] : memref<16x256xf32, #tpu.memory_space<vmem>>, vector<16x256xf32>
      tpu.vector_store %arg9[%c0_32, %c0_33], %56 {strides = array<i32>} : memref<16x256xf32, #tpu.memory_space<vmem>>, vector<16x256xf32>,
    } else {
    }
    return
  }
  func.func @transform_0(%arg0: i32, %arg1: i32) -> (i32, i32) {
    %c0_i32 = arith.constant 0 : i32
    %c0_i32_0 = arith.constant 0 : i32
    return %arg0, %c0_i32 : i32, i32
  }
  func.func @transform_1(%arg0: i32, %arg1: i32) -> (i32, i32) {
    %c0_i32 = arith.constant 0 : i32
    %c0_i32_0 = arith.constant 0 : i32
    return %c0_i32, %arg1 : i32, i32
  }
  func.func @transform_2(%arg0: i32, %arg1: i32) -> (i32, i32) {
    %c0_i32 = arith.constant 0 : i32
    %c0_i32_0 = arith.constant 0 : i32
    return %c0_i32, %arg1 : i32, i32
  }
  func.func @transform_3(%arg0: i32, %arg1: i32) -> (i32, i32) {
    %c0_i32 = arith.constant 0 : i32
    %c0_i32_0 = arith.constant 0 : i32
    return %arg1, %c0_i32 : i32, i32
  }
  func.func @transform_4(%arg0: i32, %arg1: i32) -> (i32, i32) {
    %c0_i32 = arith.constant 0 : i32
    %c0_i32_0 = arith.constant 0 : i32
    %c0_i32_1 = arith.constant 0 : i32
    return %c0_i32, %c0_i32_0 : i32, i32
  }
  func.func @transform_5(%arg0: i32, %arg1: i32) -> (i32, i32) {
    %c0_i32 = arith.constant 0 : i32
    %c0_i32_0 = arith.constant 0 : i32
    %c0_i32_1 = arith.constant 0 : i32
    return %c0_i32, %c0_i32_0 : i32, i32
  }
  func.func @transform_6(%arg0: i32, %arg1: i32) -> (i32, i32) {
    %c0_i32 = arith.constant 0 : i32
    %c0_i32_0 = arith.constant 0 : i32
    %c0_i32_1 = arith.constant 0 : i32
    return %c0_i32, %c0_i32_0 : i32, i32
  }
  func.func @transform_7(%arg0: i32, %arg1: i32) -> (i32, i32) {
    %c0_i32 = arith.constant 0 : i32
    %c0_i32_0 = arith.constant 0 : i32
    return %arg0, %c0_i32 : i32, i32
  }
}

</mosaic_0001>

<llo_original>
// kernel: decoder_layer.9
$region0: #{decoder_layer.9}
  #allocation0 [shape = 'u32[]', space=smem, size = 0x4, offset = 0x4, fixed_abs, tag = 'smem constant byte address 0x4 - core index']
  #allocation1 [shape = 'u32[72,128]{1,0:T(1,128)}', space=vmem, size = 0x9000, scoped, tag = 'internal scratch']
  #allocation2 [shape = 'f32[8,1]{1,0:T(8,128)}', space=vmem, size = 0x1000, scoped, tag = 'scratch operand']
  #allocation3 [shape = 'f32[8,1]{1,0:T(8,128)}', space=vmem, size = 0x1000, scoped, tag = 'scratch operand']
  #allocation4 [shape = 'f32[8,128]{1,0:T(8,128)}', space=vmem, size = 0x1000, scoped, tag = 'scratch operand']
  %s0 = inlined_call_operand.vmem [shape: bf16[16,768], index: 0, kind: input, shape index: {}, may-alias: {0,1,2}]
  %s1 = inlined_call_operand.vmem [shape: bf16[16,768], index: 1, kind: input, shape index: {}, may-alias: {0,1,2}]
  %s2 = inlined_call_operand.vmem [shape: bf16[16,768], index: 2, kind: input, shape index: {}, may-alias: {0,1,2}]
  %s3 = inlined_call_operand.vmem [shape: bf16[16,256], index: 3, kind: output, shape index: {}]
  %s4 = sld [smem:[#allocation0]]
  $region53: #{decoder_layer.9} parent=0
    _
  %s6 = ssub.s32 1, %s4
  %s7 = scalar_select 0, %s6, %s4
  loop: start=0, step=1, limit=6
  $region2: #{decoder_layer.9} parent=0 // loop_pre_header
    _
  $region3: #{decoder_layer.9} parent=0 // loop_header
    %s9 = sphi 0, %s13
    %p10 = scmp.ge.s32.totalorder %s9, 6
    %s16 = sphi 0, %s42
    %s17 = sphi 0, %s38
    %s18 = sphi 0, %s34
    %s19 = sphi 0, %s30
    %s20 = sphi 0, %s16
    %s21 = sphi 0, %s17
    %s22 = sphi 0, %s18
    %s23 = sphi 0, %s19
    %s24 = sphi 0, %s20
    %s25 = sphi 0, %s21
    %s26 = sphi 0, %s22
    %s27 = sphi 0, %s23
    %s49 = sphi 0, %s51
    %s52 = sphi 0, %s49
    %s53 = sphi 0, %s52
    %s69 = sphi 0, %s53
    %s81 = sphi 0, %s83
    %s84 = sphi 0, %s81
    %s85 = sphi 0, %s84
    %s101 = sphi 0, %s85
    %s113 = sphi 0, %s115
    %s116 = sphi 0, %s113
    %s117 = sphi 0, %s116
    %s133 = sphi 0, %s117
    %s143 = sphi 0, %s145
    %s146 = sphi 0, %s143
    %s147 = sphi 0, %s146
    %s163 = sphi 0, %s147
  $region4: #{decoder_layer.9} parent=0 // loop_header_branch
    %12 = sbr.rel (%p10) target = $region8
  $region5: #{decoder_layer.9} parent=0 // loop_body
    %s14 = ssub.s32 %s9, 1
    %s15 = ssub.s32 %s9, 2
    %s28 = sadd.s32 1, %s19
    %p29 = scmp.ge.s32.totalorder %s28, 1
    %s30 = scalar_select %p29, 0, %s28
    %s31 = sadd.s32 1, %s18
    %s32 = scalar_select %p29, %s31, %s18
    %p33 = scmp.ge.s32.totalorder %s32, 1
    %s34 = scalar_select %p33, 0, %s32
    %s35 = sadd.s32 1, %s17
    %s36 = scalar_select %p33, %s35, %s17
    %p37 = scmp.ge.s32.totalorder %s36, 2
    %s38 = scalar_select %p37, 0, %s36
    %s39 = sadd.s32 1, %s16
    %s40 = scalar_select %p37, %s39, %s16
    %p41 = scmp.ge.s32.totalorder %s40, 2
    %s42 = scalar_select %p41, 0, %s40
    %s43 = sadd.s32 %s16, %s18
    %s44 = sadd.s32 %s42, %s34
    %s45 = ssub.s32 %s43, %s44
    %s46 = ssub.s32 %s17, %s38
    %s47 = sor.u32 %s45, %s46
    %p48 = scmp.eq.s32.totalorder %s47, 0
    %s50 = sadd.s32 %s49, 1
    %s51 = scalar_select %p48, %s49, %s50
    %p54 = pneg %p48
    %p55 = scmp.eq.s32.totalorder %s9, 3
    %p56 = por %p54, %p55
    %p57 = scmp.ne.s32.totalorder %s49, %s52
    %p58 = scmp.eq.s32.totalorder %s9, 0
    %p59 = por %p57, %p58
    %p60 = scmp.ne.s32.totalorder %s49, %s52
    %p61 = scmp.eq.s32.totalorder %s14, 3
    %p62 = por %p60, %p61
    %p63 = scmp.ne.s32.totalorder %s52, %s53
    %p64 = scmp.eq.s32.totalorder %s14, 0
    %p65 = por %p63, %p64
    %p66 = scmp.ne.s32.totalorder %s52, %s53
    %p67 = scmp.eq.s32.totalorder %s15, 3
    %p68 = por %p66, %p67
    %p70 = scmp.ne.s32.totalorder %s53, %s69
    %p71 = scmp.eq.s32.totalorder %s15, 0
    %p72 = por %p70, %p71
    %s73 = sadd.s32 %s16, %s19
    %s74 = sadd.s32 %s17, 2
    %s75 = sadd.s32 %s42, %s30
    %s76 = sadd.s32 %s38, 2
    %s77 = ssub.s32 %s73, %s75
    %s78 = ssub.s32 %s74, %s76
    %s79 = sor.u32 %s77, %s78
    %p80 = scmp.eq.s32.totalorder %s79, 0
    %s82 = sadd.s32 %s81, 1
    %s83 = scalar_select %p80, %s81, %s82
    %p86 = pneg %p80
    %p87 = scmp.eq.s32.totalorder %s9, 3
    %p88 = por %p86, %p87
    %p89 = scmp.ne.s32.totalorder %s81, %s84
    %p90 = scmp.eq.s32.totalorder %s9, 0
    %p91 = por %p89, %p90
    %p92 = scmp.ne.s32.totalorder %s81, %s84
    %p93 = scmp.eq.s32.totalorder %s14, 3
    %p94 = por %p92, %p93
    %p95 = scmp.ne.s32.totalorder %s84, %s85
    %p96 = scmp.eq.s32.totalorder %s14, 0
    %p97 = por %p95, %p96
    %p98 = scmp.ne.s32.totalorder %s84, %s85
    %p99 = scmp.eq.s32.totalorder %s15, 3
    %p100 = por %p98, %p99
    %p102 = scmp.ne.s32.totalorder %s85, %s101
    %p103 = scmp.eq.s32.totalorder %s15, 0
    %p104 = por %p102, %p103
    %s105 = sadd.s32 %s16, %s19
    %s106 = sadd.s32 %s17, 4
    %s107 = sadd.s32 %s42, %s30
    %s108 = sadd.s32 %s38, 4
    %s109 = ssub.s32 %s105, %s107
    %s110 = ssub.s32 %s106, %s108
    %s111 = sor.u32 %s109, %s110
    %p112 = scmp.eq.s32.totalorder %s111, 0
    %s114 = sadd.s32 %s113, 1
    %s115 = scalar_select %p112, %s113, %s114
    %p118 = pneg %p112
    %p119 = scmp.eq.s32.totalorder %s9, 3
    %p120 = por %p118, %p119
    %p121 = scmp.ne.s32.totalorder %s113, %s116
    %p122 = scmp.eq.s32.totalorder %s9, 0
    %p123 = por %p121, %p122
    %p124 = scmp.ne.s32.totalorder %s113, %s116
    %p125 = scmp.eq.s32.totalorder %s14, 3
    %p126 = por %p124, %p125
    %p127 = scmp.ne.s32.totalorder %s116, %s117
    %p128 = scmp.eq.s32.totalorder %s14, 0
    %p129 = por %p127, %p128
    %p130 = scmp.ne.s32.totalorder %s116, %s117
    %p131 = scmp.eq.s32.totalorder %s15, 3
    %p132 = por %p130, %p131
    %p134 = scmp.ne.s32.totalorder %s117, %s133
    %p135 = scmp.eq.s32.totalorder %s15, 0
    %p136 = por %p134, %p135
    %s137 = sadd.s32 %s16, %s18
    %s138 = sadd.s32 %s42, %s34
    %s139 = ssub.s32 %s137, %s138
    %s140 = ssub.s32 %s17, %s38
    %s141 = sor.u32 %s139, %s140
    %p142 = scmp.eq.s32.totalorder %s141, 0
    %s144 = sadd.s32 %s143, 1
    %s145 = scalar_select %p142, %s143, %s144
    %p148 = pneg %p142
    %p149 = scmp.eq.s32.totalorder %s9, 3
    %p150 = por %p148, %p149
    %p151 = scmp.ne.s32.totalorder %s143, %s146
    %p152 = scmp.eq.s32.totalorder %s9, 0
    %p153 = por %p151, %p152
    %p154 = scmp.ne.s32.totalorder %s143, %s146
    %p155 = scmp.eq.s32.totalorder %s14, 3
    %p156 = por %p154, %p155
    %p157 = scmp.ne.s32.totalorder %s146, %s147
    %p158 = scmp.eq.s32.totalorder %s14, 0
    %p159 = por %p157, %p158
    %p160 = scmp.ne.s32.totalorder %s146, %s147
    %p161 = scmp.eq.s32.totalorder %s15, 3
    %p162 = por %p160, %p161
    %p164 = scmp.ne.s32.totalorder %s147, %s163
    %p165 = scmp.eq.s32.totalorder %s15, 0
    %p166 = por %p164, %p165
    %p167 = scmp.le.s32.totalorder 1, %s9
    %p168 = scmp.lt.s32.totalorder %s9, 5
    %p169 = pnand %p167, %p168
    %p170 = pneg %p169
    // Predicated region
    $region9: #{decoder_layer.9} parent=5 // pred_check
      _
    $region10: #{decoder_layer.9} parent=5 // pred_check_branch
      %172 = sbr.rel (%p169) target = $region12
    $region11: #{decoder_layer.9} parent=5 // pred_region
      %s173 = ssub.s32 %s9, 1
    $region12: #{decoder_layer.9} parent=5 // pred_fallthru
      _
    %p174 = scmp.lt.s32.totalorder %s9, 4
    // Predicated region
    $region13: #{decoder_layer.9} parent=5 // pred_check
      %p175 = pneg %p174
    $region14: #{decoder_layer.9} parent=5 // pred_check_branch
      %177 = sbr.rel (%p175) target = $region16
    $region15: #{decoder_layer.9} parent=5 // pred_region
      // Predicated region
      $region17: #{decoder_layer.9} parent=15 // pred_check
        %p178 = pneg %p59
      $region18: #{decoder_layer.9} parent=15 // pred_check_branch
        %180 = sbr.rel (%p178) target = $region20
      $region19: #{decoder_layer.9} parent=15 // pred_region
        %s181 = sadd.s32 %s16, %s18
        %p182 = scmp.lt.s32.totalorder %s181, 1
        %s183 = scalar_select %p182, %s181, 1
        %p184 = scmp.lt.s32.totalorder %s17, 5
        %s185 = scalar_select %p184, %s17, 5
        %s186 = smul.addr %s183, 6
        %s187 = sadd.s32 %s185, %s186
        %s188 = smul.addr %s187, 4
        %s189 = scalar_lea.vmem %s0, %s188
        %s190 = sadd.s32 %s16, %s18
      $region20: #{decoder_layer.9} parent=15 // pred_fallthru
        _
      // Predicated region
      $region21: #{decoder_layer.9} parent=15 // pred_check
        %p191 = pneg %p91
      $region22: #{decoder_layer.9} parent=15 // pred_check_branch
        %193 = sbr.rel (%p191) target = $region24
      $region23: #{decoder_layer.9} parent=15 // pred_region
        %s194 = sadd.s32 %s16, %s19
        %s195 = sadd.s32 %s17, 2
        %p196 = scmp.lt.s32.totalorder %s194, 1
        %s197 = scalar_select %p196, %s194, 1
        %p198 = scmp.lt.s32.totalorder %s195, 5
        %s199 = scalar_select %p198, %s195, 5
        %s200 = smul.addr %s197, 6
        %s201 = sadd.s32 %s199, %s200
        %s202 = smul.addr %s201, 4
        %s203 = scalar_lea.vmem %s1, %s202
        %s204 = sadd.s32 %s16, %s19
        %s205 = sadd.s32 %s17, 2
      $region24: #{decoder_layer.9} parent=15 // pred_fallthru
        _
      // Predicated region
      $region25: #{decoder_layer.9} parent=15 // pred_check
        %p206 = pneg %p123
      $region26: #{decoder_layer.9} parent=15 // pred_check_branch
        %208 = sbr.rel (%p206) target = $region28
      $region27: #{decoder_layer.9} parent=15 // pred_region
        %s209 = sadd.s32 %s16, %s19
        %s210 = sadd.s32 %s17, 4
        %p211 = scmp.lt.s32.totalorder %s209, 1
        %s212 = scalar_select %p211, %s209, 1
        %p213 = scmp.lt.s32.totalorder %s210, 5
        %s214 = scalar_select %p213, %s210, 5
        %s215 = smul.addr %s212, 6
        %s216 = sadd.s32 %s214, %s215
        %s217 = smul.addr %s216, 4
        %s218 = scalar_lea.vmem %s2, %s217
        %s219 = sadd.s32 %s16, %s19
        %s220 = sadd.s32 %s17, 4
      $region28: #{decoder_layer.9} parent=15 // pred_fallthru
        _
    $region16: #{decoder_layer.9} parent=5 // pred_fallthru
      _
    %p221 = scmp.le.s32.totalorder 1, %s9
    %p222 = scmp.lt.s32.totalorder %s9, 5
    %p223 = pnand %p221, %p222
    %p224 = pneg %p223
    // Predicated region
    $region29: #{decoder_layer.9} parent=5 // pred_check
      _
    $region30: #{decoder_layer.9} parent=5 // pred_check_branch
      %226 = sbr.rel (%p223) target = $region32
    $region31: #{decoder_layer.9} parent=5 // pred_region
      %s227 = ssub.s32 %s9, 1
      %s228 = sadd.s32 %s20, %s22
      %p229 = scmp.lt.s32.totalorder %s228, 1
      %s230 = scalar_select %p229, %s228, 1
      %p231 = scmp.lt.s32.totalorder %s21, 5
      %s232 = scalar_select %p231, %s21, 5
      %s233 = smul.addr %s230, 6
      %s234 = sadd.s32 %s232, %s233
      %s235 = smul.addr %s234, 4
      %s236 = scalar_lea.vmem %s0, %s235
      %p237 = pneg %p65
      %p238 = pneg %p62
      %s239 = sadd.s32 %s20, %s23
      %s240 = sadd.s32 %s21, 2
      %p241 = scmp.lt.s32.totalorder %s239, 1
      %s242 = scalar_select %p241, %s239, 1
      %p243 = scmp.lt.s32.totalorder %s240, 5
      %s244 = scalar_select %p243, %s240, 5
      %s245 = smul.addr %s242, 6
      %s246 = sadd.s32 %s244, %s245
      %s247 = smul.addr %s246, 4
      %s248 = scalar_lea.vmem %s1, %s247
      %p249 = pneg %p97
      %p250 = pneg %p94
      %s251 = sadd.s32 %s20, %s23
      %s252 = sadd.s32 %s21, 4
      %p253 = scmp.lt.s32.totalorder %s251, 1
      %s254 = scalar_select %p253, %s251, 1
      %p255 = scmp.lt.s32.totalorder %s252, 5
      %s256 = scalar_select %p255, %s252, 5
      %s257 = smul.addr %s254, 6
      %s258 = sadd.s32 %s256, %s257
      %s259 = smul.addr %s258, 4
      %s260 = scalar_lea.vmem %s2, %s259
      %p261 = pneg %p129
      %p262 = pneg %p126
      %p263 = pneg %p159
      %p264 = pneg %p156
      %s265 = sadd.s32 %s20, %s22
      %p266 = scmp.lt.s32.totalorder %s265, 1
      %s267 = scalar_select %p266, %s265, 1
      %p268 = scmp.lt.s32.totalorder %s21, 1
      %s269 = scalar_select %p268, %s21, 1
      %s270 = smul.addr %s267, 2
      %s271 = sadd.s32 %s269, %s270
      %s272 = smul.addr %s271, 4
      %s273 = scalar_lea.vmem %s3, %s272
      %s274 = sadd.s32 %s20, %s22
      %p275 = scmp.lt.s32.totalorder %s274, 1
      %s276 = scalar_select %p275, %s274, 1
      %p277 = scmp.lt.s32.totalorder %s21, 5
      %s278 = scalar_select %p277, %s21, 5
      %s279 = smul.addr %s276, 6
      %s280 = sadd.s32 %s278, %s279
      %s281 = smul.addr %s280, 4
      %s282 = scalar_lea.vmem %s0, %s281
      %s283 = sadd.s32 %s20, %s22
      %s284 = sadd.s32 %s20, %s23
      %s285 = sadd.s32 %s21, 2
      %p286 = scmp.lt.s32.totalorder %s284, 1
      %s287 = scalar_select %p286, %s284, 1
      %p288 = scmp.lt.s32.totalorder %s285, 5
      %s289 = scalar_select %p288, %s285, 5
      %s290 = smul.addr %s287, 6
      %s291 = sadd.s32 %s289, %s290
      %s292 = smul.addr %s291, 4
      %s293 = scalar_lea.vmem %s1, %s292
      %s294 = sadd.s32 %s20, %s23
      %s295 = sadd.s32 %s21, 2
      %s296 = sadd.s32 %s20, %s23
      %s297 = sadd.s32 %s21, 4
      %p298 = scmp.lt.s32.totalorder %s296, 1
      %s299 = scalar_select %p298, %s296, 1
      %p300 = scmp.lt.s32.totalorder %s297, 5
      %s301 = scalar_select %p300, %s297, 5
      %s302 = smul.addr %s299, 6
      %s303 = sadd.s32 %s301, %s302
      %s304 = smul.addr %s303, 4
      %s305 = scalar_lea.vmem %s2, %s304
      %s306 = sadd.s32 %s20, %s23
      %s307 = sadd.s32 %s21, 4
      %s308 = sadd.s32 %s20, %s22
      %p309 = scmp.lt.s32.totalorder %s308, 1
      %s310 = scalar_select %p309, %s308, 1
      %p311 = scmp.lt.s32.totalorder %s21, 1
      %s312 = scalar_select %p311, %s21, 1
      %s313 = smul.addr %s310, 2
      %s314 = sadd.s32 %s312, %s313
      %s315 = smul.addr %s314, 4
      %s316 = scalar_lea.vmem %s3, %s315
      %s317 = sadd.s32 %s20, %s22
      %p319 = scmp.eq.s32.totalorder %s23, 0
      // Predicated region
      $region33: #{decoder_layer.9} parent=31 // pred_check
        %p320 = pneg %p319
      $region34: #{decoder_layer.9} parent=31 // pred_check_branch
        %322 = sbr.rel (%p320) target = $region36
      $region35: #{decoder_layer.9} parent=31 // pred_region
        %vm323 = vcmask 7168
        %324 = vst.msk [vmem:[#allocation2] sm:$0xff] %vm323, -inf
        %325 = vst.msk [vmem:[#allocation3] sm:$0xff] %vm323, 0.0
        %326 = vst [vmem:[#allocation4] sm:$0xff] 0.0
      $region36: #{decoder_layer.9} parent=31 // pred_fallthru
        _
      %v327 = vld [vmem:[%s282] sm:$0xf]
      %v328 = vunpack.c.l.bf16 %v327
      %v329 = vmul.f32 %v328, 0.088388346
      %v330 = vpack.c.bf16 %v329, %v329
      %v331 = vld [vmem:[%s293] sm:$0xf]
      %332 = vmatpush.bf16.xpose.msra.mxu0 0
      %333 = vmatpush.bf16.xpose.msra.mxu0 0
      %334 = vmatpush.bf16.xpose.msra.mxu0 0
      %335 = vmatpush.bf16.xpose.msra.mxu0 0
      %336 = vmatpush.bf16.xpose.msra.mxu0 0
      %337 = vmatpush.bf16.xpose.msra.mxu0 0
      %338 = vmatpush.bf16.xpose.msra.mxu0 0
      %339 = vmatpush.bf16.xpose.msra.mxu0 %v331
      %340 = vmatmul.bf16.gmra.mxu0 %v330
      %v341 = vpop.f32.mrf.mxu0
      %v342 = vadd.f32 0.0, %v341
      %v343 = vpop.f32.mrf.mxu0
      %344 = vdwg.mxu0
      %v345 = vld [vmem:[#allocation2] sm:$0xff]
      %vm346 = vcmask 64512
      %v347 = vsel %vm346, %v342, -inf
      %348 = vmax.xlane.f32.xlu0 %v347
      %v349 = vpop.xlane.xlu0 %348
      %v350 = vmax.f32 %v345, %v349
      %v351 = vsub.f32 %v345, %v350
      %v352 = vmul.f32 %v351, 1.442695
      %v353 = vpow.pop %v352
      %355 = vset.pattern.permute.xlu0 0
      %356 = vperm.xlu0 %355, %v350
      %v357 = vpop.permute.xlu0 %356
      %v359 = vsub.f32 %v342, %v357
      %v360 = vmul.f32 %v359, 1.442695
      %v361 = vpow.pop %v360
      %v362 = vld [vmem:[#allocation3] sm:$0xff]
      %v363 = vmul.f32 %v353, %v362
      %v364 = vsel %vm346, %v361, 0.0
      %365 = vadd.xlane.f32.xlu0 %v364
      %v366 = vpop.xlane.xlu0 %365
      %v367 = vadd.f32 %v363, %v366
      %vm368 = vcmask 7168
      %369 = vst.msk [vmem:[#allocation3] sm:$0xff] %vm368, %v367
      %v370 = vld [vmem:[#allocation4] sm:$0xff]
      %372 = vset.pattern.permute.xlu0 0
      %373 = vperm.xlu0 %372, %v353
      %v374 = vpop.permute.xlu0 %373
      %v376 = vmul.f32 %v374, %v370
      %v377 = vpack.c.bf16 %v361, %v361
      %v378 = vld [vmem:[%s305] sm:$0xf]
      %v380 = vsel %vm346, %v377, 0
      %vm382 = vcmask 1043456
      %v384 = vsel %vm382, %v378, 0
      %386 = vmatpush.bf16.msra.mxu0 0
      %387 = vmatpush.bf16.msra.mxu0 0
      %388 = vmatpush.bf16.msra.mxu0 0
      %389 = vmatpush.bf16.msra.mxu0 0
      %390 = vmatpush.bf16.msra.mxu0 0
      %391 = vmatpush.bf16.msra.mxu0 0
      %392 = vmatpush.bf16.msra.mxu0 0
      %393 = vmatpush.bf16.msra.mxu0 %v384
      %394 = vmatmul.bf16.gmra.mxu0 %v380
      %v395 = vpop.f32.mrf.mxu0
      %v396 = vadd.f32 0.0, %v395
      %v397 = vpop.f32.mrf.mxu0
      %398 = vdwg.mxu0
      %v399 = vadd.f32 %v376, %v396
      %400 = vst [vmem:[#allocation4] sm:$0xff] %v399
      %401 = vst.msk [vmem:[#allocation2] sm:$0xff] %vm368, %v350
      // Predicated region
      $region37: #{decoder_layer.9} parent=31 // pred_check
        %p402 = pneg %p319
      $region38: #{decoder_layer.9} parent=31 // pred_check_branch
        %404 = sbr.rel (%p402) target = $region40
      $region39: #{decoder_layer.9} parent=31 // pred_region
        %v405 = vld [vmem:[#allocation4] sm:$0xff]
        %v406 = vld [vmem:[#allocation3] sm:$0xff]
        %408 = vset.pattern.permute.xlu0 0
        %409 = vperm.xlu0 %408, %v406
        %v410 = vpop.permute.xlu0 %409
        %v412 = vrcp.pop %v410
        %v413 = vmul.f32 %v410, %v412
        %v414 = vsub.f32 1.0, %v413
        %v415 = vmul.f32 %v412, %v414
        %v416 = vadd.f32 %v412, %v415
        %vm417 = vweird.f32 %v410
        %vm418 = vweird.f32 %v412
        %vm419 = vmor %vm417, %vm418
        %v420 = vsel %vm419, %v412, %v416
        %v421 = vand.u32 2147483647, %v410
        %vm422 = vcmp.eq.f32.partialorder %v421, 8.507059e+37
        %v423 = vand.u32 %v410, 2147483648
        %v424 = vor.u32 1.1754944e-38, %v423
        %v425 = vsel %vm422, %v424, %v420
        %v426 = vmul.f32 %v405, %v425
        %v427 = vpack.c.bf16 %v426, %v426
        %428 = vst [vmem:[%s316] sm:$0xf] %v427
      $region40: #{decoder_layer.9} parent=31 // pred_fallthru
        _
      %s429 = sadd.s32 %s20, %s22
      %p430 = scmp.lt.s32.totalorder %s429, 1
      %s431 = scalar_select %p430, %s429, 1
      %p432 = scmp.lt.s32.totalorder %s21, 1
      %s433 = scalar_select %p432, %s21, 1
      %s434 = smul.addr %s431, 2
      %s435 = sadd.s32 %s433, %s434
      %s436 = smul.addr %s435, 4
      %s437 = scalar_lea.vmem %s3, %s436
      // Predicated region
      $region41: #{decoder_layer.9} parent=31 // pred_check
        %p438 = pneg %p156
      $region42: #{decoder_layer.9} parent=31 // pred_check_branch
        %440 = sbr.rel (%p438) target = $region44
      $region43: #{decoder_layer.9} parent=31 // pred_region
        %s441 = sadd.s32 %s20, %s22
      $region44: #{decoder_layer.9} parent=31 // pred_fallthru
        _
    $region32: #{decoder_layer.9} parent=5 // pred_fallthru
      _
    %p442 = scmp.le.s32.totalorder 2, %s9
    // Predicated region
    $region45: #{decoder_layer.9} parent=5 // pred_check
      %p443 = pneg %p442
    $region46: #{decoder_layer.9} parent=5 // pred_check_branch
      %445 = sbr.rel (%p443) target = $region48
    $region47: #{decoder_layer.9} parent=5 // pred_region
      %s446 = ssub.s32 %s9, 2
      // Predicated region
      $region49: #{decoder_layer.9} parent=47 // pred_check
        %p447 = pneg %p162
      $region50: #{decoder_layer.9} parent=47 // pred_check_branch
        %449 = sbr.rel (%p447) target = $region52
      $region51: #{decoder_layer.9} parent=47 // pred_region
        %s450 = sadd.s32 %s24, %s26
        %p451 = scmp.lt.s32.totalorder %s450, 1
        %s452 = scalar_select %p451, %s450, 1
        %p453 = scmp.lt.s32.totalorder %s25, 1
        %s454 = scalar_select %p453, %s25, 1
        %s455 = smul.addr %s452, 2
        %s456 = sadd.s32 %s454, %s455
        %s457 = smul.addr %s456, 4
        %s458 = scalar_lea.vmem %s3, %s457
      $region52: #{decoder_layer.9} parent=47 // pred_fallthru
        _
    $region48: #{decoder_layer.9} parent=5 // pred_fallthru
      _
  $region6: #{decoder_layer.9} parent=0 // loop_footer
    %s13 = sadd.s32 1, %s9
  $region7: #{decoder_layer.9} parent=0 // loop_footer_branch
    %8 = sbr.rel target = $region3
  $region8: #{decoder_layer.9} parent=0 // loop_exit
    _

// kernel: decoder_layer.8
$region0: #{decoder_layer.8}
  #allocation0 [shape = 'u32[]', space=smem, size = 0x4, offset = 0x4, fixed_abs, tag = 'smem constant byte address 0x4 - core index']
  #allocation1 [shape = 'u32[72,128]{1,0:T(1,128)}', space=vmem, size = 0x9000, scoped, tag = 'internal scratch']
  #allocation2 [shape = 'f32[16,384]{1,0:T(8,128)}', space=vmem, size = 0x6000, scoped, tag = 'scratch operand']
  %s0 = inlined_call_operand.hbm [shape: f32[16,256], index: 0, kind: input, shape index: {}]
  %s1 = inlined_call_operand.hbm [shape: bf16[256,768], index: 1, kind: input, shape index: {}]
  %s2 = inlined_call_operand.vmem [shape: f32[1,768], index: 2, kind: input, shape index: {}]
  %s3 = inlined_call_operand.vmem [shape: bf16[16,768], index: 3, kind: output, shape index: {}]
  %s4 = sld [smem:[#allocation0]]
  $region83: #{decoder_layer.8} parent=0
    _
  %s6 = ssub.s32 1, %s4
  %s7 = scalar_select 0, %s6, %s4
  $region1: #{decoder_layer.8} parent=0
    #allocation3 [shape = 'u8[16384]{0}', space=vmem, size = 0x4000, scoped, tag = 'input window, operand 0, single buffered']
    #allocation4 [shape = 's32[2]{0}', space=sflag, size = 0x8, scoped, tag = 'scoped memory for decoder_layer.8']
    #allocation5 [shape = 'u8[393216]{0}', space=vmem, size = 0x60000, scoped, tag = 'input window, operand 1']
    #allocation6 [shape = 's32[2]{0}', space=sflag, size = 0x8, scoped, tag = 'scoped memory for decoder_layer.8']
    #allocation7 [shape = 'u8[24576]{0}', space=vmem, size = 0x6000, scoped, tag = 'output window, operand 0']
    %8 = vsyncpa [#allocation4], 0
    %9 = vsyncpa [#allocation6], 0
    %s10 = scalar_lea.sflag [#allocation6], 1
    %11 = vsyncpa %s10, 0
    loop: start=0, step=1, limit=4
    $region2: #{decoder_layer.8} parent=1 // loop_pre_header
      _
    $region3: #{decoder_layer.8} parent=1 // loop_header
      %s13 = sphi 0, %s17
      %p14 = scmp.ge.s32.totalorder %s13, 4
      %s20 = sphi 0, %s39
      %s21 = sphi 0, %s35
      %s22 = sphi 0, %s31
      %s23 = sphi 0, %s20
      %s24 = sphi 0, %s21
      %s25 = sphi 0, %s22
      %s26 = sphi 0, %s23
      %s27 = sphi 0, %s24
      %s28 = sphi 0, %s25
      %s44 = sphi 0, %s46
      %s47 = sphi 0, %s44
      %s48 = sphi 0, %s47
      %s64 = sphi 0, %s48
      %s72 = sphi 0, %s74
      %s75 = sphi 0, %s72
      %s76 = sphi 0, %s75
      %s92 = sphi 0, %s76
      %s98 = sphi 0, %s100
      %s101 = sphi 0, %s98
      %s102 = sphi 0, %s101
      %s118 = sphi 0, %s102
      %s126 = sphi 0, %s128
      %s129 = sphi 0, %s126
      %s130 = sphi 0, %s129
      %s146 = sphi 0, %s130
    $region4: #{decoder_layer.8} parent=1 // loop_header_branch
      %16 = sbr.rel (%p14) target = $region8
    $region5: #{decoder_layer.8} parent=1 // loop_body
      %s18 = ssub.s32 %s13, 1
      %s19 = ssub.s32 %s13, 2
      %s29 = sadd.s32 1, %s22
      %p30 = scmp.ge.s32.totalorder %s29, 1
      %s31 = scalar_select %p30, 0, %s29
      %s32 = sadd.s32 1, %s21
      %s33 = scalar_select %p30, %s32, %s21
      %p34 = scmp.ge.s32.totalorder %s33, 2
      %s35 = scalar_select %p34, 0, %s33
      %s36 = sadd.s32 1, %s20
      %s37 = scalar_select %p34, %s36, %s20
      %p38 = scmp.ge.s32.totalorder %s37, 1
      %s39 = scalar_select %p38, 0, %s37
      %s40 = ssub.s32 %s20, %s39
      %s41 = ssub.s32 %s22, %s31
      %s42 = sor.u32 %s40, %s41
      %p43 = scmp.eq.s32.totalorder %s42, 0
      %s45 = sadd.s32 %s44, 1
      %s46 = scalar_select %p43, %s44, %s45
      %p49 = pneg %p43
      %p50 = scmp.eq.s32.totalorder %s13, 1
      %p51 = por %p49, %p50
      %p52 = scmp.ne.s32.totalorder %s44, %s47
      %p53 = scmp.eq.s32.totalorder %s13, 0
      %p54 = por %p52, %p53
      %p55 = scmp.ne.s32.totalorder %s44, %s47
      %p56 = scmp.eq.s32.totalorder %s18, 1
      %p57 = por %p55, %p56
      %p58 = scmp.ne.s32.totalorder %s47, %s48
      %p59 = scmp.eq.s32.totalorder %s18, 0
      %p60 = por %p58, %p59
      %p61 = scmp.ne.s32.totalorder %s47, %s48
      %p62 = scmp.eq.s32.totalorder %s19, 1
      %p63 = por %p61, %p62
      %p65 = scmp.ne.s32.totalorder %s48, %s64
      %p66 = scmp.eq.s32.totalorder %s19, 0
      %p67 = por %p65, %p66
      %s68 = ssub.s32 %s22, %s31
      %s69 = ssub.s32 %s21, %s35
      %s70 = sor.u32 %s68, %s69
      %p71 = scmp.eq.s32.totalorder %s70, 0
      %s73 = sadd.s32 %s72, 1
      %s74 = scalar_select %p71, %s72, %s73
      %p77 = pneg %p71
      %p78 = scmp.eq.s32.totalorder %s13, 1
      %p79 = por %p77, %p78
      %p80 = scmp.ne.s32.totalorder %s72, %s75
      %p81 = scmp.eq.s32.totalorder %s13, 0
      %p82 = por %p80, %p81
      %p83 = scmp.ne.s32.totalorder %s72, %s75
      %p84 = scmp.eq.s32.totalorder %s18, 1
      %p85 = por %p83, %p84
      %p86 = scmp.ne.s32.totalorder %s75, %s76
      %p87 = scmp.eq.s32.totalorder %s18, 0
      %p88 = por %p86, %p87
      %p89 = scmp.ne.s32.totalorder %s75, %s76
      %p90 = scmp.eq.s32.totalorder %s19, 1
      %p91 = por %p89, %p90
      %p93 = scmp.ne.s32.totalorder %s76, %s92
      %p94 = scmp.eq.s32.totalorder %s19, 0
      %p95 = por %p93, %p94
      %s96 = ssub.s32 %s21, %s35
      %p97 = scmp.eq.s32.totalorder %s96, 0
      %s99 = sadd.s32 %s98, 1
      %s100 = scalar_select %p97, %s98, %s99
      %p103 = pneg %p97
      %p104 = scmp.eq.s32.totalorder %s13, 1
      %p105 = por %p103, %p104
      %p106 = scmp.ne.s32.totalorder %s98, %s101
      %p107 = scmp.eq.s32.totalorder %s13, 0
      %p108 = por %p106, %p107
      %p109 = scmp.ne.s32.totalorder %s98, %s101
      %p110 = scmp.eq.s32.totalorder %s18, 1
      %p111 = por %p109, %p110
      %p112 = scmp.ne.s32.totalorder %s101, %s102
      %p113 = scmp.eq.s32.totalorder %s18, 0
      %p114 = por %p112, %p113
      %p115 = scmp.ne.s32.totalorder %s101, %s102
      %p116 = scmp.eq.s32.totalorder %s19, 1
      %p117 = por %p115, %p116
      %p119 = scmp.ne.s32.totalorder %s102, %s118
      %p120 = scmp.eq.s32.totalorder %s19, 0
      %p121 = por %p119, %p120
      %s122 = ssub.s32 %s20, %s39
      %s123 = ssub.s32 %s21, %s35
      %s124 = sor.u32 %s122, %s123
      %p125 = scmp.eq.s32.totalorder %s124, 0
      %s127 = sadd.s32 %s126, 1
      %s128 = scalar_select %p125, %s126, %s127
      %p131 = pneg %p125
      %p132 = scmp.eq.s32.totalorder %s13, 1
      %p133 = por %p131, %p132
      %p134 = scmp.ne.s32.totalorder %s126, %s129
      %p135 = scmp.eq.s32.totalorder %s13, 0
      %p136 = por %p134, %p135
      %p137 = scmp.ne.s32.totalorder %s126, %s129
      %p138 = scmp.eq.s32.totalorder %s18, 1
      %p139 = por %p137, %p138
      %p140 = scmp.ne.s32.totalorder %s129, %s130
      %p141 = scmp.eq.s32.totalorder %s18, 0
      %p142 = por %p140, %p141
      %p143 = scmp.ne.s32.totalorder %s129, %s130
      %p144 = scmp.eq.s32.totalorder %s19, 1
      %p145 = por %p143, %p144
      %p147 = scmp.ne.s32.totalorder %s130, %s146
      %p148 = scmp.eq.s32.totalorder %s19, 0
      %p149 = por %p147, %p148
      %p150 = scmp.le.s32.totalorder 1, %s13
      %p151 = scmp.lt.s32.totalorder %s13, 3
      %p152 = pnand %p150, %p151
      %p153 = pneg %p152
      // Predicated region
      $region9: #{decoder_layer.8} parent=5 // pred_check
        _
      $region10: #{decoder_layer.8} parent=5 // pred_check_branch
        %155 = sbr.rel (%p152) target = $region12
      $region11: #{decoder_layer.8} parent=5 // pred_region
        %s156 = ssub.s32 %s13, 1
        // Predicated region
        $region13: #{decoder_layer.8} parent=11 // pred_check
          %p157 = pneg %p60
        $region14: #{decoder_layer.8} parent=11 // pred_check_branch
          %159 = sbr.rel (%p157) target = $region16
        $region15: #{decoder_layer.8} parent=11 // pred_region
          %s160 = smul.u32 2, %s23
          %s161 = smul.u32 2, %s25
          %163 = vsyncadd [#allocation4], 0
          %s164 = smul.addr %s160, 2
          %s165 = sadd.s32 %s161, %s164
          %s166 = smul.addr %s165, 8
          %s167 = scalar_lea.hbm %s0, %s166
          %s168 = sshll.u32 %s167, 4
          %s169 = int_to_ptr.hbm [resolvable:$true] %s168
          %s170 = sshll.u32 [#allocation3], 4
          %s171 = int_to_ptr.vmem [resolvable:$true] %s170
          %176 = dma.hbm_to_vmem [thread:$0]  %s169, 512, %s171, [#allocation4], 256, 256, 16
        $region16: #{decoder_layer.8} parent=11 // pred_fallthru
          _
      $region12: #{decoder_layer.8} parent=5 // pred_fallthru
        _
      %p177 = scmp.lt.s32.totalorder %s13, 2
      // Predicated region
      $region17: #{decoder_layer.8} parent=5 // pred_check
        %p178 = pneg %p177
      $region18: #{decoder_layer.8} parent=5 // pred_check_branch
        %180 = sbr.rel (%p178) target = $region20
      $region19: #{decoder_layer.8} parent=5 // pred_region
        // Predicated region
        $region21: #{decoder_layer.8} parent=19 // pred_check
          %p181 = pneg %p82
        $region22: #{decoder_layer.8} parent=19 // pred_check_branch
          %183 = sbr.rel (%p181) target = $region24
        $region23: #{decoder_layer.8} parent=19 // pred_region
          %s184 = sand.u32 %s72, 1
          %s185 = scalar_lea.sflag [#allocation6], %s184
          %s186 = sand.u32 %s72, 1
          %s187 = smul.addr %s186, 384
          %s188 = scalar_lea.vmem [#allocation5], %s187
          %s189 = smul.u32 32, %s22
          %s190 = smul.u32 3, %s21
          %192 = vsyncadd %s185, 0
          %s193 = smul.addr %s189, 6
          %s194 = sadd.s32 %s190, %s193
          %s195 = smul.addr %s194, 4
          %s196 = scalar_lea.hbm %s1, %s195
          %s197 = sshll.u32 %s196, 4
          %s198 = int_to_ptr.hbm [resolvable:$true] %s197
          %s199 = sshll.u32 %s188, 4
          %s200 = int_to_ptr.vmem [resolvable:$true] %s199
          %205 = dma.hbm_to_vmem [thread:$0]  %s198, 6144, %s200, %s185, 384, 192, 12
        $region24: #{decoder_layer.8} parent=19 // pred_fallthru
          _
        // Predicated region
        $region25: #{decoder_layer.8} parent=19 // pred_check
          %p206 = pneg %p108
        $region26: #{decoder_layer.8} parent=19 // pred_check_branch
          %208 = sbr.rel (%p206) target = $region28
        $region27: #{decoder_layer.8} parent=19 // pred_region
          %s209 = smul.u32 3, %s21
          %p210 = scmp.lt.s32.totalorder %s209, 5
          %s211 = scalar_select %p210, %s209, 5
          %s212 = scalar_lea.vmem %s2, %s211
          %s213 = smul.u32 3, %s21
        $region28: #{decoder_layer.8} parent=19 // pred_fallthru
          _
      $region20: #{decoder_layer.8} parent=5 // pred_fallthru
        _
      %p214 = scmp.le.s32.totalorder 1, %s13
      %p215 = scmp.lt.s32.totalorder %s13, 3
      %p216 = pnand %p214, %p215
      %p217 = pneg %p216
      // Predicated region
      $region29: #{decoder_layer.8} parent=5 // pred_check
        _
      $region30: #{decoder_layer.8} parent=5 // pred_check_branch
        %219 = sbr.rel (%p216) target = $region32
      $region31: #{decoder_layer.8} parent=5 // pred_region
        %s220 = ssub.s32 %s13, 1
        // Predicated region
        $region33: #{decoder_layer.8} parent=31 // pred_check
          %p221 = pneg %p60
        $region34: #{decoder_layer.8} parent=31 // pred_check_branch
          %223 = sbr.rel (%p221) target = $region36
        $region35: #{decoder_layer.8} parent=31 // pred_region
          %225 = dma.done [#allocation4], 512
        $region36: #{decoder_layer.8} parent=31 // pred_fallthru
          _
        %s226 = sand.u32 %s75, 1
        %s227 = scalar_lea.sflag [#allocation6], %s226
        %s228 = sand.u32 %s75, 1
        %s229 = smul.addr %s228, 384
        %s230 = scalar_lea.vmem [#allocation5], %s229
        // Predicated region
        $region37: #{decoder_layer.8} parent=31 // pred_check
          %p231 = pneg %p88
        $region38: #{decoder_layer.8} parent=31 // pred_check_branch
          %233 = sbr.rel (%p231) target = $region40
        $region39: #{decoder_layer.8} parent=31 // pred_region
          %235 = dma.done %s227, 6144
        $region40: #{decoder_layer.8} parent=31 // pred_fallthru
          _
        %p236 = pneg %p60
        %p237 = pneg %p57
        %s238 = sand.u32 %s75, 1
        %s239 = scalar_lea.sflag [#allocation6], %s238
        %s240 = sand.u32 %s75, 1
        %s241 = smul.addr %s240, 384
        %s242 = scalar_lea.vmem [#allocation5], %s241
        %p243 = pneg %p88
        %p244 = pneg %p85
        %s245 = smul.u32 3, %s24
        %p246 = scmp.lt.s32.totalorder %s245, 5
        %s247 = scalar_select %p246, %s245, 5
        %s248 = scalar_lea.vmem %s2, %s247
        %p249 = pneg %p114
        %p250 = pneg %p111
        %p251 = pneg %p142
        %p252 = pneg %p139
        %s253 = sand.u32 %s129, 1
        %s254 = sand.u32 %s129, 1
        %s255 = smul.addr %s254, 24
        %s256 = scalar_lea.vmem [#allocation7], %s255
        %s257 = smul.u32 2, %s23
        %s258 = smul.u32 2, %s25
        %s259 = smul.u32 32, %s25
        %s260 = smul.u32 3, %s24
        %s261 = smul.u32 3, %s24
        %p262 = scmp.lt.s32.totalorder %s261, 5
        %s263 = scalar_select %p262, %s261, 5
        %s264 = scalar_lea.vmem %s2, %s263
        %s265 = smul.u32 3, %s24
        %s266 = smul.u32 2, %s23
        %s267 = smul.u32 3, %s24
        %p268 = scmp.eq.s32.totalorder %s25, 0
        // Predicated region
        $region41: #{decoder_layer.8} parent=31 // pred_check
          %p269 = pneg %p268
        $region42: #{decoder_layer.8} parent=31 // pred_check_branch
          %271 = sbr.rel (%p269) target = $region44
        $region43: #{decoder_layer.8} parent=31 // pred_region
          %272 = vst [vmem:[#allocation2] sm:$0xff] 0.0
          %273 = vst [vmem:[#allocation2 + $0x8] sm:$0xff] 0.0
          %274 = vst [vmem:[#allocation2 + $0x10] sm:$0xff] 0.0
          %275 = vst [vmem:[#allocation2 + $0x18] sm:$0xff] 0.0
          %276 = vst [vmem:[#allocation2 + $0x20] sm:$0xff] 0.0
          %277 = vst [vmem:[#allocation2 + $0x28] sm:$0xff] 0.0
        $region44: #{decoder_layer.8} parent=31 // pred_fallthru
          _
        %v278 = vld [vmem:[#allocation2] sm:$0xff]
        %v279 = vld [vmem:[#allocation2 + $0x8] sm:$0xff]
        %v280 = vld [vmem:[#allocation2 + $0x10] sm:$0xff]
        %v281 = vld [vmem:[#allocation2 + $0x18] sm:$0xff]
        %v282 = vld [vmem:[#allocation2 + $0x20] sm:$0xff]
        %v283 = vld [vmem:[#allocation2 + $0x28] sm:$0xff]
        %v284 = vld [vmem:[#allocation3] sm:$0xff]
        %v285 = vld [vmem:[#allocation3 + $0x8] sm:$0xff]
        %v286 = vld [vmem:[#allocation3 + $0x10] sm:$0xff]
        %v287 = vld [vmem:[#allocation3 + $0x18] sm:$0xff]
        %v288 = vpack.c.bf16 %v286, %v284
        %v289 = vpack.c.bf16 %v287, %v285
        %v290 = vld [vmem:[%s230] sm:$0xff]
        %v291 = vld [vmem:[%s230 + $0x8] sm:$0xf]
        %v292 = vld [vmem:[%s230 + $0xc] sm:$0xff]
        %v293 = vld [vmem:[%s230 + $0x14] sm:$0xf]
        %v294 = vld [vmem:[%s230 + $0x18] sm:$0xff]
        %v295 = vld [vmem:[%s230 + $0x20] sm:$0xf]
        %v296 = vld [vmem:[%s230 + $0x24] sm:$0xff]
        %v297 = vld [vmem:[%s230 + $0x2c] sm:$0xf]
        %v298 = vld [vmem:[%s230 + $0x30] sm:$0xff]
        %v299 = vld [vmem:[%s230 + $0x38] sm:$0xf]
        %v300 = vld [vmem:[%s230 + $0x3c] sm:$0xff]
        %v301 = vld [vmem:[%s230 + $0x44] sm:$0xf]
        %v302 = vld [vmem:[%s230 + $0x48] sm:$0xff]
        %v303 = vld [vmem:[%s230 + $0x50] sm:$0xf]
        %v304 = vld [vmem:[%s230 + $0x54] sm:$0xff]
        %v305 = vld [vmem:[%s230 + $0x5c] sm:$0xf]
        %v306 = vld [vmem:[%s230 + $0x60] sm:$0xff]
        %v307 = vld [vmem:[%s230 + $0x68] sm:$0xf]
        %v308 = vld [vmem:[%s230 + $0x6c] sm:$0xff]
        %v309 = vld [vmem:[%s230 + $0x74] sm:$0xf]
        %v310 = vld [vmem:[%s230 + $0x78] sm:$0xff]
        %v311 = vld [vmem:[%s230 + $0x80] sm:$0xf]
        %v312 = vld [vmem:[%s230 + $0x84] sm:$0xff]
        %v313 = vld [vmem:[%s230 + $0x8c] sm:$0xf]
        %v314 = vld [vmem:[%s230 + $0x90] sm:$0xff]
        %v315 = vld [vmem:[%s230 + $0x98] sm:$0xf]
        %v316 = vld [vmem:[%s230 + $0x9c] sm:$0xff]
        %v317 = vld [vmem:[%s230 + $0xa4] sm:$0xf]
        %v318 = vld [vmem:[%s230 + $0xa8] sm:$0xff]
        %v319 = vld [vmem:[%s230 + $0xb0] sm:$0xf]
        %v320 = vld [vmem:[%s230 + $0xb4] sm:$0xff]
        %v321 = vld [vmem:[%s230 + $0xbc] sm:$0xf]
        %v322 = vld [vmem:[%s230 + $0xc0] sm:$0xff]
        %v323 = vld [vmem:[%s230 + $0xc8] sm:$0xf]
        %v324 = vld [vmem:[%s230 + $0xcc] sm:$0xff]
        %v325 = vld [vmem:[%s230 + $0xd4] sm:$0xf]
        %v326 = vld [vmem:[%s230 + $0xd8] sm:$0xff]
        %v327 = vld [vmem:[%s230 + $0xe0] sm:$0xf]
        %v328 = vld [vmem:[%s230 + $0xe4] sm:$0xff]
        %v329 = vld [vmem:[%s230 + $0xec] sm:$0xf]
        %v330 = vld [vmem:[%s230 + $0xf0] sm:$0xff]
        %v331 = vld [vmem:[%s230 + $0xf8] sm:$0xf]
        %v332 = vld [vmem:[%s230 + $0xfc] sm:$0xff]
        %v333 = vld [vmem:[%s230 + $0x104] sm:$0xf]
        %v334 = vld [vmem:[%s230 + $0x108] sm:$0xff]
        %v335 = vld [vmem:[%s230 + $0x110] sm:$0xf]
        %v336 = vld [vmem:[%s230 + $0x114] sm:$0xff]
        %v337 = vld [vmem:[%s230 + $0x11c] sm:$0xf]
        %v338 = vld [vmem:[%s230 + $0x120] sm:$0xff]
        %v339 = vld [vmem:[%s230 + $0x128] sm:$0xf]
        %v340 = vld [vmem:[%s230 + $0x12c] sm:$0xff]
        %v341 = vld [vmem:[%s230 + $0x134] sm:$0xf]
        %v342 = vld [vmem:[%s230 + $0x138] sm:$0xff]
        %v343 = vld [vmem:[%s230 + $0x140] sm:$0xf]
        %v344 = vld [vmem:[%s230 + $0x144] sm:$0xff]
        %v345 = vld [vmem:[%s230 + $0x14c] sm:$0xf]
        %v346 = vld [vmem:[%s230 + $0x150] sm:$0xff]
        %v347 = vld [vmem:[%s230 + $0x158] sm:$0xf]
        %v348 = vld [vmem:[%s230 + $0x15c] sm:$0xff]
        %v349 = vld [vmem:[%s230 + $0x164] sm:$0xf]
        %v350 = vld [vmem:[%s230 + $0x168] sm:$0xff]
        %v351 = vld [vmem:[%s230 + $0x170] sm:$0xf]
        %v352 = vld [vmem:[%s230 + $0x174] sm:$0xff]
        %v353 = vld [vmem:[%s230 + $0x17c] sm:$0xf]
        %v418 = vunpack.c.l.b16 %v290
        %v419 = vunpack.c.h.b16 %v290
        %v420 = vunpack.c.l.b16 %v291
        %v421 = vunpack.c.l.b16 %v292
        %v422 = vunpack.c.h.b16 %v292
        %v423 = vunpack.c.l.b16 %v293
        %v424 = vunpack.c.l.b16 %v294
        %v425 = vunpack.c.h.b16 %v294
        %v426 = vunpack.c.l.b16 %v295
        %v427 = vunpack.c.l.b16 %v296
        %v428 = vunpack.c.h.b16 %v296
        %v429 = vunpack.c.l.b16 %v297
        %v430 = vunpack.c.l.b16 %v298
        %v431 = vunpack.c.h.b16 %v298
        %v432 = vunpack.c.l.b16 %v299
        %v433 = vunpack.c.l.b16 %v300
        %v434 = vunpack.c.h.b16 %v300
        %v435 = vunpack.c.l.b16 %v301
        %v436 = vunpack.c.l.b16 %v302
        %v437 = vunpack.c.h.b16 %v302
        %v438 = vunpack.c.l.b16 %v303
        %v439 = vunpack.c.l.b16 %v304
        %v440 = vunpack.c.h.b16 %v304
        %v441 = vunpack.c.l.b16 %v305
        %v442 = vunpack.c.l.b16 %v306
        %v443 = vunpack.c.h.b16 %v306
        %v444 = vunpack.c.l.b16 %v307
        %v445 = vunpack.c.l.b16 %v308
        %v446 = vunpack.c.h.b16 %v308
        %v447 = vunpack.c.l.b16 %v309
        %v448 = vunpack.c.l.b16 %v310
        %v449 = vunpack.c.h.b16 %v310
        %v450 = vunpack.c.l.b16 %v311
        %v451 = vunpack.c.l.b16 %v312
        %v452 = vunpack.c.h.b16 %v312
        %v453 = vunpack.c.l.b16 %v313
        %v454 = vunpack.c.l.b16 %v314
        %v455 = vunpack.c.h.b16 %v314
        %v456 = vunpack.c.l.b16 %v315
        %v457 = vunpack.c.l.b16 %v316
        %v458 = vunpack.c.h.b16 %v316
        %v459 = vunpack.c.l.b16 %v317
        %v460 = vunpack.c.l.b16 %v318
        %v461 = vunpack.c.h.b16 %v318
        %v462 = vunpack.c.l.b16 %v319
        %v463 = vunpack.c.l.b16 %v320
        %v464 = vunpack.c.h.b16 %v320
        %v465 = vunpack.c.l.b16 %v321
        %v466 = vunpack.c.l.b16 %v322
        %v467 = vunpack.c.h.b16 %v322
        %v468 = vunpack.c.l.b16 %v323
        %v469 = vunpack.c.l.b16 %v324
        %v470 = vunpack.c.h.b16 %v324
        %v471 = vunpack.c.l.b16 %v325
        %v472 = vunpack.c.l.b16 %v326
        %v473 = vunpack.c.h.b16 %v326
        %v474 = vunpack.c.l.b16 %v327
        %v475 = vunpack.c.l.b16 %v328
        %v476 = vunpack.c.h.b16 %v328
        %v477 = vunpack.c.l.b16 %v329
        %v478 = vunpack.c.l.b16 %v330
        %v479 = vunpack.c.h.b16 %v330
        %v480 = vunpack.c.l.b16 %v331
        %v481 = vunpack.c.l.b16 %v332
        %v482 = vunpack.c.h.b16 %v332
        %v483 = vunpack.c.l.b16 %v333
        %v484 = vunpack.c.l.b16 %v334
        %v485 = vunpack.c.h.b16 %v334
        %v486 = vunpack.c.l.b16 %v335
        %v487 = vunpack.c.l.b16 %v336
        %v488 = vunpack.c.h.b16 %v336
        %v489 = vunpack.c.l.b16 %v337
        %v490 = vunpack.c.l.b16 %v338
        %v491 = vunpack.c.h.b16 %v338
        %v492 = vunpack.c.l.b16 %v339
        %v493 = vunpack.c.l.b16 %v340
        %v494 = vunpack.c.h.b16 %v340
        %v495 = vunpack.c.l.b16 %v341
        %v496 = vunpack.c.l.b16 %v342
        %v497 = vunpack.c.h.b16 %v342
        %v498 = vunpack.c.l.b16 %v343
        %v499 = vunpack.c.l.b16 %v344
        %v500 = vunpack.c.h.b16 %v344
        %v501 = vunpack.c.l.b16 %v345
        %v502 = vunpack.c.l.b16 %v346
        %v503 = vunpack.c.h.b16 %v346
        %v504 = vunpack.c.l.b16 %v347
        %v505 = vunpack.c.l.b16 %v348
        %v506 = vunpack.c.h.b16 %v348
        %v507 = vunpack.c.l.b16 %v349
        %v508 = vunpack.c.l.b16 %v350
        %v509 = vunpack.c.h.b16 %v350
        %v510 = vunpack.c.l.b16 %v351
        %v511 = vunpack.c.l.b16 %v352
        %v512 = vunpack.c.h.b16 %v352
        %v513 = vunpack.c.l.b16 %v353
        %v514 = vpack.c.b16 %v421, %v418
        %v515 = vpack.c.b16 %v422, %v419
        %v516 = vpack.c.b16 %v423, %v420
        %v517 = vpack.c.b16 %v427, %v424
        %v518 = vpack.c.b16 %v428, %v425
        %v519 = vpack.c.b16 %v429, %v426
        %v520 = vpack.c.b16 %v433, %v430
        %v521 = vpack.c.b16 %v434, %v431
        %v522 = vpack.c.b16 %v435, %v432
        %v523 = vpack.c.b16 %v439, %v436
        %v524 = vpack.c.b16 %v440, %v437
        %v525 = vpack.c.b16 %v441, %v438
        %v526 = vpack.c.b16 %v445, %v442
        %v527 = vpack.c.b16 %v446, %v443
        %v528 = vpack.c.b16 %v447, %v444
        %v529 = vpack.c.b16 %v451, %v448
        %v530 = vpack.c.b16 %v452, %v449
        %v531 = vpack.c.b16 %v453, %v450
        %v532 = vpack.c.b16 %v457, %v454
        %v533 = vpack.c.b16 %v458, %v455
        %v534 = vpack.c.b16 %v459, %v456
        %v535 = vpack.c.b16 %v463, %v460
        %v536 = vpack.c.b16 %v464, %v461
        %v537 = vpack.c.b16 %v465, %v462
        %v538 = vpack.c.b16 %v469, %v466
        %v539 = vpack.c.b16 %v470, %v467
        %v540 = vpack.c.b16 %v471, %v468
        %v541 = vpack.c.b16 %v475, %v472
        %v542 = vpack.c.b16 %v476, %v473
        %v543 = vpack.c.b16 %v477, %v474
        %v544 = vpack.c.b16 %v481, %v478
        %v545 = vpack.c.b16 %v482, %v479
        %v546 = vpack.c.b16 %v483, %v480
        %v547 = vpack.c.b16 %v487, %v484
        %v548 = vpack.c.b16 %v488, %v485
        %v549 = vpack.c.b16 %v489, %v486
        %v550 = vpack.c.b16 %v493, %v490
        %v551 = vpack.c.b16 %v494, %v491
        %v552 = vpack.c.b16 %v495, %v492
        %v553 = vpack.c.b16 %v499, %v496
        %v554 = vpack.c.b16 %v500, %v497
        %v555 = vpack.c.b16 %v501, %v498
        %v556 = vpack.c.b16 %v505, %v502
        %v557 = vpack.c.b16 %v506, %v503
        %v558 = vpack.c.b16 %v507, %v504
        %v559 = vpack.c.b16 %v511, %v508
        %v560 = vpack.c.b16 %v512, %v509
        %v561 = vpack.c.b16 %v513, %v510
        %610 = vmatpush.bf16.msra.mxu0 %v535
        %611 = vmatpush.bf16.msra.mxu0 %v532
        %612 = vmatpush.bf16.msra.mxu0 %v529
        %613 = vmatpush.bf16.msra.mxu0 %v526
        %614 = vmatpush.bf16.msra.mxu0 %v523
        %615 = vmatpush.bf16.msra.mxu0 %v520
        %616 = vmatpush.bf16.msra.mxu0 %v517
        %617 = vmatpush.bf16.msra.mxu0 %v514
        %618 = vmatmul.bf16.gmra.mxu0 %v288
        %v619 = vpop.f32.mrf.mxu0
        %v620 = vadd.f32 0.0, %v619
        %v621 = vpop.f32.mrf.mxu0
        %v622 = vadd.f32 0.0, %v621
        %623 = vdwg.mxu0
        %624 = vmatpush.bf16.msra.mxu0 %v559
        %625 = vmatpush.bf16.msra.mxu0 %v556
        %626 = vmatpush.bf16.msra.mxu0 %v553
        %627 = vmatpush.bf16.msra.mxu0 %v550
        %628 = vmatpush.bf16.msra.mxu0 %v547
        %629 = vmatpush.bf16.msra.mxu0 %v544
        %630 = vmatpush.bf16.msra.mxu0 %v541
        %631 = vmatpush.bf16.msra.mxu0 %v538
        %632 = vmatmul.bf16.gmra.mxu0 %v289
        %v633 = vpop.f32.mrf.mxu0
        %v634 = vadd.f32 %v620, %v633
        %v635 = vpop.f32.mrf.mxu0
        %v636 = vadd.f32 %v622, %v635
        %637 = vdwg.mxu0
        %638 = vmatpush.bf16.msra.mxu0 %v536
        %639 = vmatpush.bf16.msra.mxu0 %v533
        %640 = vmatpush.bf16.msra.mxu0 %v530
        %641 = vmatpush.bf16.msra.mxu0 %v527
        %642 = vmatpush.bf16.msra.mxu0 %v524
        %643 = vmatpush.bf16.msra.mxu0 %v521
        %644 = vmatpush.bf16.msra.mxu0 %v518
        %645 = vmatpush.bf16.msra.mxu0 %v515
        %646 = vmatmul.bf16.gmra.mxu0 %v288
        %v647 = vpop.f32.mrf.mxu0
        %v648 = vadd.f32 0.0, %v647
        %v649 = vpop.f32.mrf.mxu0
        %v650 = vadd.f32 0.0, %v649
        %651 = vdwg.mxu0
        %652 = vmatpush.bf16.msra.mxu0 %v560
        %653 = vmatpush.bf16.msra.mxu0 %v557
        %654 = vmatpush.bf16.msra.mxu0 %v554
        %655 = vmatpush.bf16.msra.mxu0 %v551
        %656 = vmatpush.bf16.msra.mxu0 %v548
        %657 = vmatpush.bf16.msra.mxu0 %v545
        %658 = vmatpush.bf16.msra.mxu0 %v542
        %659 = vmatpush.bf16.msra.mxu0 %v539
        %660 = vmatmul.bf16.gmra.mxu0 %v289
        %v661 = vpop.f32.mrf.mxu0
        %v662 = vadd.f32 %v648, %v661
        %v663 = vpop.f32.mrf.mxu0
        %v664 = vadd.f32 %v650, %v663
        %665 = vdwg.mxu0
        %666 = vmatpush.bf16.msra.mxu0 %v537
        %667 = vmatpush.bf16.msra.mxu0 %v534
        %668 = vmatpush.bf16.msra.mxu0 %v531
        %669 = vmatpush.bf16.msra.mxu0 %v528
        %670 = vmatpush.bf16.msra.mxu0 %v525
        %671 = vmatpush.bf16.msra.mxu0 %v522
        %672 = vmatpush.bf16.msra.mxu0 %v519
        %673 = vmatpush.bf16.msra.mxu0 %v516
        %674 = vmatmul.bf16.gmra.mxu0 %v288
        %v675 = vpop.f32.mrf.mxu0
        %v676 = vadd.f32 0.0, %v675
        %v677 = vpop.f32.mrf.mxu0
        %v678 = vadd.f32 0.0, %v677
        %679 = vdwg.mxu0
        %680 = vmatpush.bf16.msra.mxu0 %v561
        %681 = vmatpush.bf16.msra.mxu0 %v558
        %682 = vmatpush.bf16.msra.mxu0 %v555
        %683 = vmatpush.bf16.msra.mxu0 %v552
        %684 = vmatpush.bf16.msra.mxu0 %v549
        %685 = vmatpush.bf16.msra.mxu0 %v546
        %686 = vmatpush.bf16.msra.mxu0 %v543
        %687 = vmatpush.bf16.msra.mxu0 %v540
        %688 = vmatmul.bf16.gmra.mxu0 %v289
        %v689 = vpop.f32.mrf.mxu0
        %v690 = vadd.f32 %v676, %v689
        %v691 = vpop.f32.mrf.mxu0
        %v692 = vadd.f32 %v678, %v691
        %693 = vdwg.mxu0
        %v694 = vadd.f32 %v278, %v634
        %v695 = vadd.f32 %v279, %v662
        %v696 = vadd.f32 %v280, %v690
        %v697 = vadd.f32 %v281, %v636
        %v698 = vadd.f32 %v282, %v664
        %v699 = vadd.f32 %v283, %v692
        %700 = vst [vmem:[#allocation2] sm:$0xff] %v694
        %701 = vst [vmem:[#allocation2 + $0x8] sm:$0xff] %v695
        %702 = vst [vmem:[#allocation2 + $0x10] sm:$0xff] %v696
        %703 = vst [vmem:[#allocation2 + $0x18] sm:$0xff] %v697
        %704 = vst [vmem:[#allocation2 + $0x20] sm:$0xff] %v698
        %705 = vst [vmem:[#allocation2 + $0x28] sm:$0xff] %v699
        // Predicated region
        $region45: #{decoder_layer.8} parent=31 // pred_check
          %p706 = pneg %p268
        $region46: #{decoder_layer.8} parent=31 // pred_check_branch
          %708 = sbr.rel (%p706) target = $region48
        $region47: #{decoder_layer.8} parent=31 // pred_region
          %v709 = vld [vmem:[#allocation2] sm:$0xff]
          %v710 = vld [vmem:[#allocation2 + $0x8] sm:$0xff]
          %v711 = vld [vmem:[#allocation2 + $0x10] sm:$0xff]
          %v712 = vld [vmem:[#allocation2 + $0x18] sm:$0xff]
          %v713 = vld [vmem:[#allocation2 + $0x20] sm:$0xff]
          %v714 = vld [vmem:[#allocation2 + $0x28] sm:$0xff]
          %v715 = vld [vmem:[%s264] sm:$0x7]
          %v717 = vperm.slane %v715, 0
          %v718 = vperm.slane %v715, 1
          %v719 = vperm.slane %v715, 2
          %v723 = vadd.f32 %v709, %v717
          %v724 = vadd.f32 %v710, %v718
          %v725 = vadd.f32 %v711, %v719
          %v726 = vadd.f32 %v712, %v717
          %v727 = vadd.f32 %v713, %v718
          %v728 = vadd.f32 %v714, %v719
          %v729 = vpack.c.bf16 %v724, %v723
          %v730 = vpack.c.bf16 %v725, %v725
          %v731 = vpack.c.bf16 %v727, %v726
          %v732 = vpack.c.bf16 %v728, %v728
          %733 = vst [vmem:[%s256] sm:$0xff] %v729
          %734 = vst [vmem:[%s256 + $0x8] sm:$0xf] %v730
          %735 = vst [vmem:[%s256 + $0xc] sm:$0xff] %v731
          %736 = vst [vmem:[%s256 + $0x14] sm:$0xf] %v732
        $region48: #{decoder_layer.8} parent=31 // pred_fallthru
          _
        %s737 = sand.u32 %s129, 1
        %s738 = sand.u32 %s129, 1
        %s739 = smul.addr %s738, 24
        %s740 = scalar_lea.vmem [#allocation7], %s739
        // Predicated region
        $region49: #{decoder_layer.8} parent=31 // pred_check
          %p741 = pneg %p139
        $region50: #{decoder_layer.8} parent=31 // pred_check_branch
          %743 = sbr.rel (%p741) target = $region52
        $region51: #{decoder_layer.8} parent=31 // pred_region
          %s744 = smul.u32 2, %s23
          %s745 = smul.u32 3, %s24
          %s746 = smul.addr %s744, 6
          %s747 = sadd.s32 %s745, %s746
          %s748 = smul.addr %s747, 4
          %s749 = scalar_lea.vmem %s3, %s748
          // Predicated region
          $region53: #{decoder_layer.8} parent=51 // pred_check
            _
          $region54: #{decoder_layer.8} parent=51 // pred_check_branch
            %751 = sbr.rel (0) target = $region56
          $region55: #{decoder_layer.8} parent=51 // pred_region
            // Predicated region
            $region57: #{decoder_layer.8} parent=55 // pred_check
              _
            $region58: #{decoder_layer.8} parent=55 // pred_check_branch
              %753 = sbr.rel (0) target = $region60
            $region59: #{decoder_layer.8} parent=55 // pred_region
              %s754 = scalar_lea.vmem %s740, 8 [#allocation7]
              %s755 = scalar_lea.vmem %s749, 8
              loop: start=0, step=1, limit=1
              $region61: #{decoder_layer.8} parent=59 // loop_pre_header
                _
              $region62: #{decoder_layer.8} parent=59 // loop_header
                %s757 = sphi 0, %s761
                %p758 = scmp.ge.s32.totalorder %s757, 1
                %s762 = sphi %s740, %s740
                %s763 = sphi %s749, %s749
              $region63: #{decoder_layer.8} parent=59 // loop_header_branch
                %760 = sbr.rel (%p758) target = $region67
              $region64: #{decoder_layer.8} parent=59 // loop_body
                %v764 = vld [vmem:[%s762] sm:$0xff]
                %765 = vst [vmem:[%s763] sm:$0xff] %v764
                %v766 = vld [vmem:[%s762 + $0xc] sm:$0xff]
                %767 = vst [vmem:[%s763 + $0x18] sm:$0xff] %v766
              $region65: #{decoder_layer.8} parent=59 // loop_footer
                %s761 = sadd.s32 1, %s757
              $region66: #{decoder_layer.8} parent=59 // loop_footer_branch
                %756 = sbr.rel target = $region62
              $region67: #{decoder_layer.8} parent=59 // loop_exit
                _
              %s769 = ssub.s32 16, 1
              loop: start=0, step=1, limit=1
              $region68: #{decoder_layer.8} parent=59 // loop_pre_header
                _
              $region69: #{decoder_layer.8} parent=59 // loop_header
                %s771 = sphi 0, %s775
                %p772 = scmp.ge.s32.totalorder %s771, 1
                %s776 = sphi %s754, %s754
                %s777 = sphi %s755, %s755
              $region70: #{decoder_layer.8} parent=59 // loop_header_branch
                %774 = sbr.rel (%p772) target = $region74
              $region71: #{decoder_layer.8} parent=59 // loop_body
                %v778 = vld [vmem:[%s776] sm:%s769]
                %779 = vst [vmem:[%s777] sm:%s769] %v778
                %v780 = vld [vmem:[%s776 + $0xc] sm:%s769]
                %781 = vst [vmem:[%s777 + $0x18] sm:%s769] %v780
              $region72: #{decoder_layer.8} parent=59 // loop_footer
                %s775 = sadd.s32 1, %s771
              $region73: #{decoder_layer.8} parent=59 // loop_footer_branch
                %770 = sbr.rel target = $region69
              $region74: #{decoder_layer.8} parent=59 // loop_exit
                _
            $region60: #{decoder_layer.8} parent=55 // pred_fallthru
              _
          $region56: #{decoder_layer.8} parent=51 // pred_fallthru
            _
          %782 = vnop
        $region52: #{decoder_layer.8} parent=31 // pred_fallthru
          _
      $region32: #{decoder_layer.8} parent=5 // pred_fallthru
        _
      %p783 = scmp.le.s32.totalorder 2, %s13
      // Predicated region
      $region75: #{decoder_layer.8} parent=5 // pred_check
        %p784 = pneg %p783
      $region76: #{decoder_layer.8} parent=5 // pred_check_branch
        %786 = sbr.rel (%p784) target = $region78
      $region77: #{decoder_layer.8} parent=5 // pred_region
        %s787 = ssub.s32 %s13, 2
        // Predicated region
        $region79: #{decoder_layer.8} parent=77 // pred_check
          %p788 = pneg %p145
        $region80: #{decoder_layer.8} parent=77 // pred_check_branch
          %790 = sbr.rel (%p788) target = $region82
        $region81: #{decoder_layer.8} parent=77 // pred_region
          %s791 = sand.u32 %s130, 1
          %s792 = sand.u32 %s130, 1
          %s793 = smul.addr %s792, 24
          %s794 = scalar_lea.vmem [#allocation7], %s793
        $region82: #{decoder_layer.8} parent=77 // pred_fallthru
          _
      $region78: #{decoder_layer.8} parent=5 // pred_fallthru
        _
    $region6: #{decoder_layer.8} parent=1 // loop_footer
      %s17 = sadd.s32 1, %s13
    $region7: #{decoder_layer.8} parent=1 // loop_footer_branch
      %12 = sbr.rel target = $region3
    $region8: #{decoder_layer.8} parent=1 // loop_exit
      _
    %795 = vsyncpa [#allocation4], 1
    %s796 = scalar_lea.sflag [#allocation4], 1
    %797 = vsyncpa %s796, 1
    %798 = vsyncpa [#allocation6], 1
    %s799 = scalar_lea.sflag [#allocation6], 1
    %800 = vsyncpa %s799, 1

// kernel: decoder_layer.12
$region0: #{decoder_layer.12}
  #allocation0 [shape = 'u32[]', space=smem, size = 0x4, offset = 0x4, fixed_abs, tag = 'smem constant byte address 0x4 - core index']
  #allocation1 [shape = 'u32[72,128]{1,0:T(1,128)}', space=vmem, size = 0x9000, scoped, tag = 'internal scratch']
  #allocation2 [shape = 'f32[16,512]{1,0:T(8,128)}', space=vmem, size = 0x8000, scoped, tag = 'scratch operand']
  %s0 = inlined_call_operand.hbm [shape: f32[16,256], index: 0, kind: input, shape index: {}]
  %s1 = inlined_call_operand.hbm [shape: bf16[256,512], index: 1, kind: input, shape index: {}]
  %s2 = inlined_call_operand.vmem [shape: f32[1,512], index: 2, kind: input, shape index: {}]
  %s3 = inlined_call_operand.vmem [shape: bf16[16,512], index: 3, kind: output, shape index: {}]
  %s4 = sld [smem:[#allocation0]]
  $region38: #{decoder_layer.12} parent=0
    _
  %s6 = ssub.s32 1, %s4
  %s7 = scalar_select 0, %s6, %s4
  $region1: #{decoder_layer.12} parent=0
    #allocation3 [shape = 'u8[16384]{0}', space=vmem, size = 0x4000, scoped, tag = 'input window, operand 0, single buffered']
    #allocation4 [shape = 's32[1]{0}', space=sflag, size = 0x4, scoped, tag = 'scoped memory for decoder_layer.12']
    #allocation5 [shape = 'u8[262144]{0}', space=vmem, size = 0x40000, scoped, tag = 'input window, operand 1, single buffered']
    #allocation6 [shape = 's32[1]{0}', space=sflag, size = 0x4, scoped, tag = 'scoped memory for decoder_layer.12']
    %8 = vsyncpa [#allocation4], 0
    %9 = vsyncpa [#allocation6], 0
    // Predicated region
    $region2: #{decoder_layer.12} parent=1 // pred_check
      _
    $region3: #{decoder_layer.12} parent=1 // pred_check_branch
      %11 = sbr.rel (0) target = $region5
    $region4: #{decoder_layer.12} parent=1 // pred_region
      %13 = vsyncadd [#allocation4], 0
      %s14 = sshll.u32 %s0, 4
      %s15 = int_to_ptr.hbm [resolvable:$true] %s14
      %s16 = sshll.u32 [#allocation3], 4
      %s17 = int_to_ptr.vmem [resolvable:$true] %s16
      %22 = dma.hbm_to_vmem [thread:$0]  %s15, 512, %s17, [#allocation4], 256, 256, 16
    $region5: #{decoder_layer.12} parent=1 // pred_fallthru
      _
    // Predicated region
    $region6: #{decoder_layer.12} parent=1 // pred_check
      _
    $region7: #{decoder_layer.12} parent=1 // pred_check_branch
      %24 = sbr.rel (0) target = $region9
    $region8: #{decoder_layer.12} parent=1 // pred_region
      %26 = vsyncadd [#allocation6], 0
      %s27 = sshll.u32 %s1, 4
      %s28 = int_to_ptr.hbm [resolvable:$true] %s27
      %s29 = sshll.u32 [#allocation5], 4
      %s30 = int_to_ptr.vmem [resolvable:$true] %s29
      %35 = dma.hbm_to_vmem [thread:$0]  %s28, 8192, %s30, [#allocation6], 256, 256, 16
    $region9: #{decoder_layer.12} parent=1 // pred_fallthru
      _
    // Predicated region
    $region10: #{decoder_layer.12} parent=1 // pred_check
      _
    $region11: #{decoder_layer.12} parent=1 // pred_check_branch
      %37 = sbr.rel (0) target = $region13
    $region12: #{decoder_layer.12} parent=1 // pred_region
      _
    $region13: #{decoder_layer.12} parent=1 // pred_fallthru
      _
    // Predicated region
    $region14: #{decoder_layer.12} parent=1 // pred_check
      _
    $region15: #{decoder_layer.12} parent=1 // pred_check_branch
      %39 = sbr.rel (0) target = $region17
    $region16: #{decoder_layer.12} parent=1 // pred_region
      %41 = dma.done [#allocation4], 512
    $region17: #{decoder_layer.12} parent=1 // pred_fallthru
      _
    // Predicated region
    $region18: #{decoder_layer.12} parent=1 // pred_check
      _
    $region19: #{decoder_layer.12} parent=1 // pred_check_branch
      %43 = sbr.rel (0) target = $region21
    $region20: #{decoder_layer.12} parent=1 // pred_region
      %45 = dma.done [#allocation6], 8192
    $region21: #{decoder_layer.12} parent=1 // pred_fallthru
      _
    %p46 = scmp.eq.s32.totalorder 0, 0
    // Predicated region
    $region22: #{decoder_layer.12} parent=1 // pred_check
      %p47 = pneg %p46
    $region23: #{decoder_layer.12} parent=1 // pred_check_branch
      %49 = sbr.rel (%p47) target = $region25
    $region24: #{decoder_layer.12} parent=1 // pred_region
      %50 = vst [vmem:[#allocation2] sm:$0xff] 0.0
      %51 = vst [vmem:[#allocation2 + $0x8] sm:$0xff] 0.0
      %52 = vst [vmem:[#allocation2 + $0x10] sm:$0xff] 0.0
      %53 = vst [vmem:[#allocation2 + $0x18] sm:$0xff] 0.0
      %54 = vst [vmem:[#allocation2 + $0x20] sm:$0xff] 0.0
      %55 = vst [vmem:[#allocation2 + $0x28] sm:$0xff] 0.0
      %56 = vst [vmem:[#allocation2 + $0x30] sm:$0xff] 0.0
      %57 = vst [vmem:[#allocation2 + $0x38] sm:$0xff] 0.0
    $region25: #{decoder_layer.12} parent=1 // pred_fallthru
      _
    %v58 = vld [vmem:[#allocation2] sm:$0xff]
    %v59 = vld [vmem:[#allocation2 + $0x8] sm:$0xff]
    %v60 = vld [vmem:[#allocation2 + $0x10] sm:$0xff]
    %v61 = vld [vmem:[#allocation2 + $0x18] sm:$0xff]
    %v62 = vld [vmem:[#allocation2 + $0x20] sm:$0xff]
    %v63 = vld [vmem:[#allocation2 + $0x28] sm:$0xff]
    %v64 = vld [vmem:[#allocation2 + $0x30] sm:$0xff]
    %v65 = vld [vmem:[#allocation2 + $0x38] sm:$0xff]
    %v66 = vld [vmem:[#allocation3] sm:$0xff]
    %v67 = vld [vmem:[#allocation3 + $0x8] sm:$0xff]
    %v68 = vld [vmem:[#allocation3 + $0x10] sm:$0xff]
    %v69 = vld [vmem:[#allocation3 + $0x18] sm:$0xff]
    %v70 = vpack.c.bf16 %v68, %v66
    %v71 = vpack.c.bf16 %v69, %v67
    %v72 = vld [vmem:[#allocation5] sm:$0xff]
    %v73 = vld [vmem:[#allocation5 + $0x8] sm:$0xff]
    %v74 = vld [vmem:[#allocation5 + $0x10] sm:$0xff]
    %v75 = vld [vmem:[#allocation5 + $0x18] sm:$0xff]
    %v76 = vld [vmem:[#allocation5 + $0x20] sm:$0xff]
    %v77 = vld [vmem:[#allocation5 + $0x28] sm:$0xff]
    %v78 = vld [vmem:[#allocation5 + $0x30] sm:$0xff]
    %v79 = vld [vmem:[#allocation5 + $0x38] sm:$0xff]
    %v80 = vld [vmem:[#allocation5 + $0x40] sm:$0xff]
    %v81 = vld [vmem:[#allocation5 + $0x48] sm:$0xff]
    %v82 = vld [vmem:[#allocation5 + $0x50] sm:$0xff]
    %v83 = vld [vmem:[#allocation5 + $0x58] sm:$0xff]
    %v84 = vld [vmem:[#allocation5 + $0x60] sm:$0xff]
    %v85 = vld [vmem:[#allocation5 + $0x68] sm:$0xff]
    %v86 = vld [vmem:[#allocation5 + $0x70] sm:$0xff]
    %v87 = vld [vmem:[#allocation5 + $0x78] sm:$0xff]
    %v88 = vld [vmem:[#allocation5 + $0x80] sm:$0xff]
    %v89 = vld [vmem:[#allocation5 + $0x88] sm:$0xff]
    %v90 = vld [vmem:[#allocation5 + $0x90] sm:$0xff]
    %v91 = vld [vmem:[#allocation5 + $0x98] sm:$0xff]
    %v92 = vld [vmem:[#allocation5 + $0xa0] sm:$0xff]
    %v93 = vld [vmem:[#allocation5 + $0xa8] sm:$0xff]
    %v94 = vld [vmem:[#allocation5 + $0xb0] sm:$0xff]
    %v95 = vld [vmem:[#allocation5 + $0xb8] sm:$0xff]
    %v96 = vld [vmem:[#allocation5 + $0xc0] sm:$0xff]
    %v97 = vld [vmem:[#allocation5 + $0xc8] sm:$0xff]
    %v98 = vld [vmem:[#allocation5 + $0xd0] sm:$0xff]
    %v99 = vld [vmem:[#allocation5 + $0xd8] sm:$0xff]
    %v100 = vld [vmem:[#allocation5 + $0xe0] sm:$0xff]
    %v101 = vld [vmem:[#allocation5 + $0xe8] sm:$0xff]
    %v102 = vld [vmem:[#allocation5 + $0xf0] sm:$0xff]
    %v103 = vld [vmem:[#allocation5 + $0xf8] sm:$0xff]
    %v104 = vld [vmem:[#allocation5 + $0x100] sm:$0xff]
    %v105 = vld [vmem:[#allocation5 + $0x108] sm:$0xff]
    %v106 = vld [vmem:[#allocation5 + $0x110] sm:$0xff]
    %v107 = vld [vmem:[#allocation5 + $0x118] sm:$0xff]
    %v108 = vld [vmem:[#allocation5 + $0x120] sm:$0xff]
    %v109 = vld [vmem:[#allocation5 + $0x128] sm:$0xff]
    %v110 = vld [vmem:[#allocation5 + $0x130] sm:$0xff]
    %v111 = vld [vmem:[#allocation5 + $0x138] sm:$0xff]
    %v112 = vld [vmem:[#allocation5 + $0x140] sm:$0xff]
    %v113 = vld [vmem:[#allocation5 + $0x148] sm:$0xff]
    %v114 = vld [vmem:[#allocation5 + $0x150] sm:$0xff]
    %v115 = vld [vmem:[#allocation5 + $0x158] sm:$0xff]
    %v116 = vld [vmem:[#allocation5 + $0x160] sm:$0xff]
    %v117 = vld [vmem:[#allocation5 + $0x168] sm:$0xff]
    %v118 = vld [vmem:[#allocation5 + $0x170] sm:$0xff]
    %v119 = vld [vmem:[#allocation5 + $0x178] sm:$0xff]
    %v120 = vld [vmem:[#allocation5 + $0x180] sm:$0xff]
    %v121 = vld [vmem:[#allocation5 + $0x188] sm:$0xff]
    %v122 = vld [vmem:[#allocation5 + $0x190] sm:$0xff]
    %v123 = vld [vmem:[#allocation5 + $0x198] sm:$0xff]
    %v124 = vld [vmem:[#allocation5 + $0x1a0] sm:$0xff]
    %v125 = vld [vmem:[#allocation5 + $0x1a8] sm:$0xff]
    %v126 = vld [vmem:[#allocation5 + $0x1b0] sm:$0xff]
    %v127 = vld [vmem:[#allocation5 + $0x1b8] sm:$0xff]
    %v128 = vld [vmem:[#allocation5 + $0x1c0] sm:$0xff]
    %v129 = vld [vmem:[#allocation5 + $0x1c8] sm:$0xff]
    %v130 = vld [vmem:[#allocation5 + $0x1d0] sm:$0xff]
    %v131 = vld [vmem:[#allocation5 + $0x1d8] sm:$0xff]
    %v132 = vld [vmem:[#allocation5 + $0x1e0] sm:$0xff]
    %v133 = vld [vmem:[#allocation5 + $0x1e8] sm:$0xff]
    %v134 = vld [vmem:[#allocation5 + $0x1f0] sm:$0xff]
    %v135 = vld [vmem:[#allocation5 + $0x1f8] sm:$0xff]
    %v200 = vunpack.c.l.b16 %v72
    %v201 = vunpack.c.h.b16 %v72
    %v202 = vunpack.c.l.b16 %v73
    %v203 = vunpack.c.h.b16 %v73
    %v204 = vunpack.c.l.b16 %v74
    %v205 = vunpack.c.h.b16 %v74
    %v206 = vunpack.c.l.b16 %v75
    %v207 = vunpack.c.h.b16 %v75
    %v208 = vunpack.c.l.b16 %v76
    %v209 = vunpack.c.h.b16 %v76
    %v210 = vunpack.c.l.b16 %v77
    %v211 = vunpack.c.h.b16 %v77
    %v212 = vunpack.c.l.b16 %v78
    %v213 = vunpack.c.h.b16 %v78
    %v214 = vunpack.c.l.b16 %v79
    %v215 = vunpack.c.h.b16 %v79
    %v216 = vunpack.c.l.b16 %v80
    %v217 = vunpack.c.h.b16 %v80
    %v218 = vunpack.c.l.b16 %v81
    %v219 = vunpack.c.h.b16 %v81
    %v220 = vunpack.c.l.b16 %v82
    %v221 = vunpack.c.h.b16 %v82
    %v222 = vunpack.c.l.b16 %v83
    %v223 = vunpack.c.h.b16 %v83
    %v224 = vunpack.c.l.b16 %v84
    %v225 = vunpack.c.h.b16 %v84
    %v226 = vunpack.c.l.b16 %v85
    %v227 = vunpack.c.h.b16 %v85
    %v228 = vunpack.c.l.b16 %v86
    %v229 = vunpack.c.h.b16 %v86
    %v230 = vunpack.c.l.b16 %v87
    %v231 = vunpack.c.h.b16 %v87
    %v232 = vunpack.c.l.b16 %v88
    %v233 = vunpack.c.h.b16 %v88
    %v234 = vunpack.c.l.b16 %v89
    %v235 = vunpack.c.h.b16 %v89
    %v236 = vunpack.c.l.b16 %v90
    %v237 = vunpack.c.h.b16 %v90
    %v238 = vunpack.c.l.b16 %v91
    %v239 = vunpack.c.h.b16 %v91
    %v240 = vunpack.c.l.b16 %v92
    %v241 = vunpack.c.h.b16 %v92
    %v242 = vunpack.c.l.b16 %v93
    %v243 = vunpack.c.h.b16 %v93
    %v244 = vunpack.c.l.b16 %v94
    %v245 = vunpack.c.h.b16 %v94
    %v246 = vunpack.c.l.b16 %v95
    %v247 = vunpack.c.h.b16 %v95
    %v248 = vunpack.c.l.b16 %v96
    %v249 = vunpack.c.h.b16 %v96
    %v250 = vunpack.c.l.b16 %v97
    %v251 = vunpack.c.h.b16 %v97
    %v252 = vunpack.c.l.b16 %v98
    %v253 = vunpack.c.h.b16 %v98
    %v254 = vunpack.c.l.b16 %v99
    %v255 = vunpack.c.h.b16 %v99
    %v256 = vunpack.c.l.b16 %v100
    %v257 = vunpack.c.h.b16 %v100
    %v258 = vunpack.c.l.b16 %v101
    %v259 = vunpack.c.h.b16 %v101
    %v260 = vunpack.c.l.b16 %v102
    %v261 = vunpack.c.h.b16 %v102
    %v262 = vunpack.c.l.b16 %v103
    %v263 = vunpack.c.h.b16 %v103
    %v264 = vunpack.c.l.b16 %v104
    %v265 = vunpack.c.h.b16 %v104
    %v266 = vunpack.c.l.b16 %v105
    %v267 = vunpack.c.h.b16 %v105
    %v268 = vunpack.c.l.b16 %v106
    %v269 = vunpack.c.h.b16 %v106
    %v270 = vunpack.c.l.b16 %v107
    %v271 = vunpack.c.h.b16 %v107
    %v272 = vunpack.c.l.b16 %v108
    %v273 = vunpack.c.h.b16 %v108
    %v274 = vunpack.c.l.b16 %v109
    %v275 = vunpack.c.h.b16 %v109
    %v276 = vunpack.c.l.b16 %v110
    %v277 = vunpack.c.h.b16 %v110
    %v278 = vunpack.c.l.b16 %v111
    %v279 = vunpack.c.h.b16 %v111
    %v280 = vunpack.c.l.b16 %v112
    %v281 = vunpack.c.h.b16 %v112
    %v282 = vunpack.c.l.b16 %v113
    %v283 = vunpack.c.h.b16 %v113
    %v284 = vunpack.c.l.b16 %v114
    %v285 = vunpack.c.h.b16 %v114
    %v286 = vunpack.c.l.b16 %v115
    %v287 = vunpack.c.h.b16 %v115
    %v288 = vunpack.c.l.b16 %v116
    %v289 = vunpack.c.h.b16 %v116
    %v290 = vunpack.c.l.b16 %v117
    %v291 = vunpack.c.h.b16 %v117
    %v292 = vunpack.c.l.b16 %v118
    %v293 = vunpack.c.h.b16 %v118
    %v294 = vunpack.c.l.b16 %v119
    %v295 = vunpack.c.h.b16 %v119
    %v296 = vunpack.c.l.b16 %v120
    %v297 = vunpack.c.h.b16 %v120
    %v298 = vunpack.c.l.b16 %v121
    %v299 = vunpack.c.h.b16 %v121
    %v300 = vunpack.c.l.b16 %v122
    %v301 = vunpack.c.h.b16 %v122
    %v302 = vunpack.c.l.b16 %v123
    %v303 = vunpack.c.h.b16 %v123
    %v304 = vunpack.c.l.b16 %v124
    %v305 = vunpack.c.h.b16 %v124
    %v306 = vunpack.c.l.b16 %v125
    %v307 = vunpack.c.h.b16 %v125
    %v308 = vunpack.c.l.b16 %v126
    %v309 = vunpack.c.h.b16 %v126
    %v310 = vunpack.c.l.b16 %v127
    %v311 = vunpack.c.h.b16 %v127
    %v312 = vunpack.c.l.b16 %v128
    %v313 = vunpack.c.h.b16 %v128
    %v314 = vunpack.c.l.b16 %v129
    %v315 = vunpack.c.h.b16 %v129
    %v316 = vunpack.c.l.b16 %v130
    %v317 = vunpack.c.h.b16 %v130
    %v318 = vunpack.c.l.b16 %v131
    %v319 = vunpack.c.h.b16 %v131
    %v320 = vunpack.c.l.b16 %v132
    %v321 = vunpack.c.h.b16 %v132
    %v322 = vunpack.c.l.b16 %v133
    %v323 = vunpack.c.h.b16 %v133
    %v324 = vunpack.c.l.b16 %v134
    %v325 = vunpack.c.h.b16 %v134
    %v326 = vunpack.c.l.b16 %v135
    %v327 = vunpack.c.h.b16 %v135
    %v328 = vpack.c.b16 %v204, %v200
    %v329 = vpack.c.b16 %v205, %v201
    %v330 = vpack.c.b16 %v206, %v202
    %v331 = vpack.c.b16 %v207, %v203
    %v332 = vpack.c.b16 %v212, %v208
    %v333 = vpack.c.b16 %v213, %v209
    %v334 = vpack.c.b16 %v214, %v210
    %v335 = vpack.c.b16 %v215, %v211
    %v336 = vpack.c.b16 %v220, %v216
    %v337 = vpack.c.b16 %v221, %v217
    %v338 = vpack.c.b16 %v222, %v218
    %v339 = vpack.c.b16 %v223, %v219
    %v340 = vpack.c.b16 %v228, %v224
    %v341 = vpack.c.b16 %v229, %v225
    %v342 = vpack.c.b16 %v230, %v226
    %v343 = vpack.c.b16 %v231, %v227
    %v344 = vpack.c.b16 %v236, %v232
    %v345 = vpack.c.b16 %v237, %v233
    %v346 = vpack.c.b16 %v238, %v234
    %v347 = vpack.c.b16 %v239, %v235
    %v348 = vpack.c.b16 %v244, %v240
    %v349 = vpack.c.b16 %v245, %v241
    %v350 = vpack.c.b16 %v246, %v242
    %v351 = vpack.c.b16 %v247, %v243
    %v352 = vpack.c.b16 %v252, %v248
    %v353 = vpack.c.b16 %v253, %v249
    %v354 = vpack.c.b16 %v254, %v250
    %v355 = vpack.c.b16 %v255, %v251
    %v356 = vpack.c.b16 %v260, %v256
    %v357 = vpack.c.b16 %v261, %v257
    %v358 = vpack.c.b16 %v262, %v258
    %v359 = vpack.c.b16 %v263, %v259
    %v360 = vpack.c.b16 %v268, %v264
    %v361 = vpack.c.b16 %v269, %v265
    %v362 = vpack.c.b16 %v270, %v266
    %v363 = vpack.c.b16 %v271, %v267
    %v364 = vpack.c.b16 %v276, %v272
    %v365 = vpack.c.b16 %v277, %v273
    %v366 = vpack.c.b16 %v278, %v274
    %v367 = vpack.c.b16 %v279, %v275
    %v368 = vpack.c.b16 %v284, %v280
    %v369 = vpack.c.b16 %v285, %v281
    %v370 = vpack.c.b16 %v286, %v282
    %v371 = vpack.c.b16 %v287, %v283
    %v372 = vpack.c.b16 %v292, %v288
    %v373 = vpack.c.b16 %v293, %v289
    %v374 = vpack.c.b16 %v294, %v290
    %v375 = vpack.c.b16 %v295, %v291
    %v376 = vpack.c.b16 %v300, %v296
    %v377 = vpack.c.b16 %v301, %v297
    %v378 = vpack.c.b16 %v302, %v298
    %v379 = vpack.c.b16 %v303, %v299
    %v380 = vpack.c.b16 %v308, %v304
    %v381 = vpack.c.b16 %v309, %v305
    %v382 = vpack.c.b16 %v310, %v306
    %v383 = vpack.c.b16 %v311, %v307
    %v384 = vpack.c.b16 %v316, %v312
    %v385 = vpack.c.b16 %v317, %v313
    %v386 = vpack.c.b16 %v318, %v314
    %v387 = vpack.c.b16 %v319, %v315
    %v388 = vpack.c.b16 %v324, %v320
    %v389 = vpack.c.b16 %v325, %v321
    %v390 = vpack.c.b16 %v326, %v322
    %v391 = vpack.c.b16 %v327, %v323
    %456 = vmatpush.bf16.msra.mxu0 %v356
    %457 = vmatpush.bf16.msra.mxu0 %v352
    %458 = vmatpush.bf16.msra.mxu0 %v348
    %459 = vmatpush.bf16.msra.mxu0 %v344
    %460 = vmatpush.bf16.msra.mxu0 %v340
    %461 = vmatpush.bf16.msra.mxu0 %v336
    %462 = vmatpush.bf16.msra.mxu0 %v332
    %463 = vmatpush.bf16.msra.mxu0 %v328
    %464 = vmatmul.bf16.gmra.mxu0 %v70
    %v465 = vpop.f32.mrf.mxu0
    %v466 = vadd.f32 0.0, %v465
    %v467 = vpop.f32.mrf.mxu0
    %v468 = vadd.f32 0.0, %v467
    %469 = vdwg.mxu0
    %470 = vmatpush.bf16.msra.mxu0 %v388
    %471 = vmatpush.bf16.msra.mxu0 %v384
    %472 = vmatpush.bf16.msra.mxu0 %v380
    %473 = vmatpush.bf16.msra.mxu0 %v376
    %474 = vmatpush.bf16.msra.mxu0 %v372
    %475 = vmatpush.bf16.msra.mxu0 %v368
    %476 = vmatpush.bf16.msra.mxu0 %v364
    %477 = vmatpush.bf16.msra.mxu0 %v360
    %478 = vmatmul.bf16.gmra.mxu0 %v71
    %v479 = vpop.f32.mrf.mxu0
    %v480 = vadd.f32 %v466, %v479
    %v481 = vpop.f32.mrf.mxu0
    %v482 = vadd.f32 %v468, %v481
    %483 = vdwg.mxu0
    %484 = vmatpush.bf16.msra.mxu0 %v357
    %485 = vmatpush.bf16.msra.mxu0 %v353
    %486 = vmatpush.bf16.msra.mxu0 %v349
    %487 = vmatpush.bf16.msra.mxu0 %v345
    %488 = vmatpush.bf16.msra.mxu0 %v341
    %489 = vmatpush.bf16.msra.mxu0 %v337
    %490 = vmatpush.bf16.msra.mxu0 %v333
    %491 = vmatpush.bf16.msra.mxu0 %v329
    %492 = vmatmul.bf16.gmra.mxu0 %v70
    %v493 = vpop.f32.mrf.mxu0
    %v494 = vadd.f32 0.0, %v493
    %v495 = vpop.f32.mrf.mxu0
    %v496 = vadd.f32 0.0, %v495
    %497 = vdwg.mxu0
    %498 = vmatpush.bf16.msra.mxu0 %v389
    %499 = vmatpush.bf16.msra.mxu0 %v385
    %500 = vmatpush.bf16.msra.mxu0 %v381
    %501 = vmatpush.bf16.msra.mxu0 %v377
    %502 = vmatpush.bf16.msra.mxu0 %v373
    %503 = vmatpush.bf16.msra.mxu0 %v369
    %504 = vmatpush.bf16.msra.mxu0 %v365
    %505 = vmatpush.bf16.msra.mxu0 %v361
    %506 = vmatmul.bf16.gmra.mxu0 %v71
    %v507 = vpop.f32.mrf.mxu0
    %v508 = vadd.f32 %v494, %v507
    %v509 = vpop.f32.mrf.mxu0
    %v510 = vadd.f32 %v496, %v509
    %511 = vdwg.mxu0
    %512 = vmatpush.bf16.msra.mxu0 %v358
    %513 = vmatpush.bf16.msra.mxu0 %v354
    %514 = vmatpush.bf16.msra.mxu0 %v350
    %515 = vmatpush.bf16.msra.mxu0 %v346
    %516 = vmatpush.bf16.msra.mxu0 %v342
    %517 = vmatpush.bf16.msra.mxu0 %v338
    %518 = vmatpush.bf16.msra.mxu0 %v334
    %519 = vmatpush.bf16.msra.mxu0 %v330
    %520 = vmatmul.bf16.gmra.mxu0 %v70
    %v521 = vpop.f32.mrf.mxu0
    %v522 = vadd.f32 0.0, %v521
    %v523 = vpop.f32.mrf.mxu0
    %v524 = vadd.f32 0.0, %v523
    %525 = vdwg.mxu0
    %526 = vmatpush.bf16.msra.mxu0 %v390
    %527 = vmatpush.bf16.msra.mxu0 %v386
    %528 = vmatpush.bf16.msra.mxu0 %v382
    %529 = vmatpush.bf16.msra.mxu0 %v378
    %530 = vmatpush.bf16.msra.mxu0 %v374
    %531 = vmatpush.bf16.msra.mxu0 %v370
    %532 = vmatpush.bf16.msra.mxu0 %v366
    %533 = vmatpush.bf16.msra.mxu0 %v362
    %534 = vmatmul.bf16.gmra.mxu0 %v71
    %v535 = vpop.f32.mrf.mxu0
    %v536 = vadd.f32 %v522, %v535
    %v537 = vpop.f32.mrf.mxu0
    %v538 = vadd.f32 %v524, %v537
    %539 = vdwg.mxu0
    %540 = vmatpush.bf16.msra.mxu0 %v359
    %541 = vmatpush.bf16.msra.mxu0 %v355
    %542 = vmatpush.bf16.msra.mxu0 %v351
    %543 = vmatpush.bf16.msra.mxu0 %v347
    %544 = vmatpush.bf16.msra.mxu0 %v343
    %545 = vmatpush.bf16.msra.mxu0 %v339
    %546 = vmatpush.bf16.msra.mxu0 %v335
    %547 = vmatpush.bf16.msra.mxu0 %v331
    %548 = vmatmul.bf16.gmra.mxu0 %v70
    %v549 = vpop.f32.mrf.mxu0
    %v550 = vadd.f32 0.0, %v549
    %v551 = vpop.f32.mrf.mxu0
    %v552 = vadd.f32 0.0, %v551
    %553 = vdwg.mxu0
    %554 = vmatpush.bf16.msra.mxu0 %v391
    %555 = vmatpush.bf16.msra.mxu0 %v387
    %556 = vmatpush.bf16.msra.mxu0 %v383
    %557 = vmatpush.bf16.msra.mxu0 %v379
    %558 = vmatpush.bf16.msra.mxu0 %v375
    %559 = vmatpush.bf16.msra.mxu0 %v371
    %560 = vmatpush.bf16.msra.mxu0 %v367
    %561 = vmatpush.bf16.msra.mxu0 %v363
    %562 = vmatmul.bf16.gmra.mxu0 %v71
    %v563 = vpop.f32.mrf.mxu0
    %v564 = vadd.f32 %v550, %v563
    %v565 = vpop.f32.mrf.mxu0
    %v566 = vadd.f32 %v552, %v565
    %567 = vdwg.mxu0
    %v568 = vadd.f32 %v58, %v480
    %v569 = vadd.f32 %v59, %v508
    %v570 = vadd.f32 %v60, %v536
    %v571 = vadd.f32 %v61, %v564
    %v572 = vadd.f32 %v62, %v482
    %v573 = vadd.f32 %v63, %v510
    %v574 = vadd.f32 %v64, %v538
    %v575 = vadd.f32 %v65, %v566
    %576 = vst [vmem:[#allocation2] sm:$0xff] %v568
    %577 = vst [vmem:[#allocation2 + $0x8] sm:$0xff] %v569
    %578 = vst [vmem:[#allocation2 + $0x10] sm:$0xff] %v570
    %579 = vst [vmem:[#allocation2 + $0x18] sm:$0xff] %v571
    %580 = vst [vmem:[#allocation2 + $0x20] sm:$0xff] %v572
    %581 = vst [vmem:[#allocation2 + $0x28] sm:$0xff] %v573
    %582 = vst [vmem:[#allocation2 + $0x30] sm:$0xff] %v574
    %583 = vst [vmem:[#allocation2 + $0x38] sm:$0xff] %v575
    // Predicated region
    $region26: #{decoder_layer.12} parent=1 // pred_check
      %p584 = pneg %p46
    $region27: #{decoder_layer.12} parent=1 // pred_check_branch
      %586 = sbr.rel (%p584) target = $region29
    $region28: #{decoder_layer.12} parent=1 // pred_region
      %v587 = vld [vmem:[#allocation2] sm:$0xff]
      %v588 = vld [vmem:[#allocation2 + $0x8] sm:$0xff]
      %v589 = vld [vmem:[#allocation2 + $0x10] sm:$0xff]
      %v590 = vld [vmem:[#allocation2 + $0x18] sm:$0xff]
      %v591 = vld [vmem:[#allocation2 + $0x20] sm:$0xff]
      %v592 = vld [vmem:[#allocation2 + $0x28] sm:$0xff]
      %v593 = vld [vmem:[#allocation2 + $0x30] sm:$0xff]
      %v594 = vld [vmem:[#allocation2 + $0x38] sm:$0xff]
      %v595 = vld [vmem:[%s2] sm:$0xf]
      %v597 = vperm.slane %v595, 0
      %v598 = vperm.slane %v595, 1
      %v599 = vperm.slane %v595, 2
      %v600 = vperm.slane %v595, 3
      %v605 = vadd.f32 %v587, %v597
      %v606 = vadd.f32 %v588, %v598
      %v607 = vadd.f32 %v589, %v599
      %v608 = vadd.f32 %v590, %v600
      %v609 = vadd.f32 %v591, %v597
      %v610 = vadd.f32 %v592, %v598
      %v611 = vadd.f32 %v593, %v599
      %v612 = vadd.f32 %v594, %v600
      %v613 = vpack.c.bf16 %v606, %v605
      %v614 = vpack.c.bf16 %v608, %v607
      %v615 = vpack.c.bf16 %v610, %v609
      %v616 = vpack.c.bf16 %v612, %v611
      %617 = vst [vmem:[%s3] sm:$0xff] %v613
      %618 = vst [vmem:[%s3 + $0x8] sm:$0xff] %v614
      %619 = vst [vmem:[%s3 + $0x10] sm:$0xff] %v615
      %620 = vst [vmem:[%s3 + $0x18] sm:$0xff] %v616
    $region29: #{decoder_layer.12} parent=1 // pred_fallthru
      _
    // Predicated region
    $region30: #{decoder_layer.12} parent=1 // pred_check
      _
    $region31: #{decoder_layer.12} parent=1 // pred_check_branch
      %622 = sbr.rel (0) target = $region33
    $region32: #{decoder_layer.12} parent=1 // pred_region
      _
    $region33: #{decoder_layer.12} parent=1 // pred_fallthru
      _
    // Predicated region
    $region34: #{decoder_layer.12} parent=1 // pred_check
      _
    $region35: #{decoder_layer.12} parent=1 // pred_check_branch
      %624 = sbr.rel (0) target = $region37
    $region36: #{decoder_layer.12} parent=1 // pred_region
      _
    $region37: #{decoder_layer.12} parent=1 // pred_fallthru
      _
    %625 = vsyncpa [#allocation4], 1
    %626 = vsyncpa [#allocation6], 1

// kernel: decoder_layer.10
$region0: #{decoder_layer.10}
  #allocation0 [shape = 'u32[]', space=smem, size = 0x4, offset = 0x4, fixed_abs, tag = 'smem constant byte address 0x4 - core index']
  #allocation1 [shape = 'u32[72,128]{1,0:T(1,128)}', space=vmem, size = 0x9000, scoped, tag = 'internal scratch']
  #allocation2 [shape = 'f32[16,256]{1,0:T(8,128)}', space=vmem, size = 0x4000, scoped, tag = 'scratch operand']
  %s0 = inlined_call_operand.vmem [shape: bf16[16,256], index: 0, kind: input, shape index: {}]
  %s1 = inlined_call_operand.hbm [shape: bf16[256,256], index: 1, kind: input, shape index: {}]
  %s2 = inlined_call_operand.vmem [shape: f32[1,256], index: 2, kind: input, shape index: {}]
  %s3 = inlined_call_operand.hbm [shape: f32[16,256], index: 3, kind: input, shape index: {}]
  %s4 = inlined_call_operand.vmem [shape: f32[1,256], index: 4, kind: input, shape index: {}]
  %s5 = inlined_call_operand.vmem [shape: f32[1,256], index: 5, kind: input, shape index: {}]
  %s6 = inlined_call_operand.vmem [shape: f32[16,256], index: 6, kind: output, shape index: {}]
  %s7 = sld [smem:[#allocation0]]
  $region50: #{decoder_layer.10} parent=0
    _
  %s9 = ssub.s32 1, %s7
  %s10 = scalar_select 0, %s9, %s7
  $region1: #{decoder_layer.10} parent=0
    #allocation3 [shape = 'u8[131072]{0}', space=vmem, size = 0x20000, scoped, tag = 'input window, operand 1, single buffered']
    #allocation4 [shape = 's32[1]{0}', space=sflag, size = 0x4, scoped, tag = 'scoped memory for decoder_layer.10']
    #allocation5 [shape = 'u8[16384]{0}', space=vmem, size = 0x4000, scoped, tag = 'input window, operand 3, single buffered']
    #allocation6 [shape = 's32[1]{0}', space=sflag, size = 0x4, scoped, tag = 'scoped memory for decoder_layer.10']
    %11 = vsyncpa [#allocation4], 0
    %12 = vsyncpa [#allocation6], 0
    // Predicated region
    $region2: #{decoder_layer.10} parent=1 // pred_check
      _
    $region3: #{decoder_layer.10} parent=1 // pred_check_branch
      %14 = sbr.rel (0) target = $region5
    $region4: #{decoder_layer.10} parent=1 // pred_region
      _
    $region5: #{decoder_layer.10} parent=1 // pred_fallthru
      _
    // Predicated region
    $region6: #{decoder_layer.10} parent=1 // pred_check
      _
    $region7: #{decoder_layer.10} parent=1 // pred_check_branch
      %16 = sbr.rel (0) target = $region9
    $region8: #{decoder_layer.10} parent=1 // pred_region
      %18 = vsyncadd [#allocation4], 0
      %s19 = sshll.u32 %s1, 4
      %s20 = int_to_ptr.hbm [resolvable:$true] %s19
      %s21 = sshll.u32 [#allocation3], 4
      %s22 = int_to_ptr.vmem [resolvable:$true] %s21
      %27 = dma.hbm_to_vmem [thread:$0]  %s20, 4096, %s22, [#allocation4], 128, 128, 8
    $region9: #{decoder_layer.10} parent=1 // pred_fallthru
      _
    // Predicated region
    $region10: #{decoder_layer.10} parent=1 // pred_check
      _
    $region11: #{decoder_layer.10} parent=1 // pred_check_branch
      %29 = sbr.rel (0) target = $region13
    $region12: #{decoder_layer.10} parent=1 // pred_region
      _
    $region13: #{decoder_layer.10} parent=1 // pred_fallthru
      _
    // Predicated region
    $region14: #{decoder_layer.10} parent=1 // pred_check
      _
    $region15: #{decoder_layer.10} parent=1 // pred_check_branch
      %31 = sbr.rel (0) target = $region17
    $region16: #{decoder_layer.10} parent=1 // pred_region
      %33 = vsyncadd [#allocation6], 0
      %s34 = sshll.u32 %s3, 4
      %s35 = int_to_ptr.hbm [resolvable:$true] %s34
      %s36 = sshll.u32 [#allocation5], 4
      %s37 = int_to_ptr.vmem [resolvable:$true] %s36
      %42 = dma.hbm_to_vmem [thread:$0]  %s35, 512, %s37, [#allocation6], 256, 256, 16
    $region17: #{decoder_layer.10} parent=1 // pred_fallthru
      _
    // Predicated region
    $region18: #{decoder_layer.10} parent=1 // pred_check
      _
    $region19: #{decoder_layer.10} parent=1 // pred_check_branch
      %44 = sbr.rel (0) target = $region21
    $region20: #{decoder_layer.10} parent=1 // pred_region
      _
    $region21: #{decoder_layer.10} parent=1 // pred_fallthru
      _
    // Predicated region
    $region22: #{decoder_layer.10} parent=1 // pred_check
      _
    $region23: #{decoder_layer.10} parent=1 // pred_check_branch
      %46 = sbr.rel (0) target = $region25
    $region24: #{decoder_layer.10} parent=1 // pred_region
      _
    $region25: #{decoder_layer.10} parent=1 // pred_fallthru
      _
    // Predicated region
    $region26: #{decoder_layer.10} parent=1 // pred_check
      _
    $region27: #{decoder_layer.10} parent=1 // pred_check_branch
      %48 = sbr.rel (0) target = $region29
    $region28: #{decoder_layer.10} parent=1 // pred_region
      %50 = dma.done [#allocation4], 4096
    $region29: #{decoder_layer.10} parent=1 // pred_fallthru
      _
    // Predicated region
    $region30: #{decoder_layer.10} parent=1 // pred_check
      _
    $region31: #{decoder_layer.10} parent=1 // pred_check_branch
      %52 = sbr.rel (0) target = $region33
    $region32: #{decoder_layer.10} parent=1 // pred_region
      %54 = dma.done [#allocation6], 512
    $region33: #{decoder_layer.10} parent=1 // pred_fallthru
      _
    %p55 = scmp.eq.s32.totalorder 0, 0
    // Predicated region
    $region34: #{decoder_layer.10} parent=1 // pred_check
      %p56 = pneg %p55
    $region35: #{decoder_layer.10} parent=1 // pred_check_branch
      %58 = sbr.rel (%p56) target = $region37
    $region36: #{decoder_layer.10} parent=1 // pred_region
      %59 = vst [vmem:[#allocation2] sm:$0xff] 0.0
      %60 = vst [vmem:[#allocation2 + $0x8] sm:$0xff] 0.0
      %61 = vst [vmem:[#allocation2 + $0x10] sm:$0xff] 0.0
      %62 = vst [vmem:[#allocation2 + $0x18] sm:$0xff] 0.0
    $region37: #{decoder_layer.10} parent=1 // pred_fallthru
      _
    %v63 = vld [vmem:[#allocation2] sm:$0xff]
    %v64 = vld [vmem:[#allocation2 + $0x8] sm:$0xff]
    %v65 = vld [vmem:[#allocation2 + $0x10] sm:$0xff]
    %v66 = vld [vmem:[#allocation2 + $0x18] sm:$0xff]
    %v67 = vld [vmem:[%s0] sm:$0xff]
    %v68 = vld [vmem:[%s0 + $0x8] sm:$0xff]
    %v69 = vld [vmem:[#allocation3] sm:$0xff]
    %v70 = vld [vmem:[#allocation3 + $0x8] sm:$0xff]
    %v71 = vld [vmem:[#allocation3 + $0x10] sm:$0xff]
    %v72 = vld [vmem:[#allocation3 + $0x18] sm:$0xff]
    %v73 = vld [vmem:[#allocation3 + $0x20] sm:$0xff]
    %v74 = vld [vmem:[#allocation3 + $0x28] sm:$0xff]
    %v75 = vld [vmem:[#allocation3 + $0x30] sm:$0xff]
    %v76 = vld [vmem:[#allocation3 + $0x38] sm:$0xff]
    %v77 = vld [vmem:[#allocation3 + $0x40] sm:$0xff]
    %v78 = vld [vmem:[#allocation3 + $0x48] sm:$0xff]
    %v79 = vld [vmem:[#allocation3 + $0x50] sm:$0xff]
    %v80 = vld [vmem:[#allocation3 + $0x58] sm:$0xff]
    %v81 = vld [vmem:[#allocation3 + $0x60] sm:$0xff]
    %v82 = vld [vmem:[#allocation3 + $0x68] sm:$0xff]
    %v83 = vld [vmem:[#allocation3 + $0x70] sm:$0xff]
    %v84 = vld [vmem:[#allocation3 + $0x78] sm:$0xff]
    %v85 = vld [vmem:[#allocation3 + $0x80] sm:$0xff]
    %v86 = vld [vmem:[#allocation3 + $0x88] sm:$0xff]
    %v87 = vld [vmem:[#allocation3 + $0x90] sm:$0xff]
    %v88 = vld [vmem:[#allocation3 + $0x98] sm:$0xff]
    %v89 = vld [vmem:[#allocation3 + $0xa0] sm:$0xff]
    %v90 = vld [vmem:[#allocation3 + $0xa8] sm:$0xff]
    %v91 = vld [vmem:[#allocation3 + $0xb0] sm:$0xff]
    %v92 = vld [vmem:[#allocation3 + $0xb8] sm:$0xff]
    %v93 = vld [vmem:[#allocation3 + $0xc0] sm:$0xff]
    %v94 = vld [vmem:[#allocation3 + $0xc8] sm:$0xff]
    %v95 = vld [vmem:[#allocation3 + $0xd0] sm:$0xff]
    %v96 = vld [vmem:[#allocation3 + $0xd8] sm:$0xff]
    %v97 = vld [vmem:[#allocation3 + $0xe0] sm:$0xff]
    %v98 = vld [vmem:[#allocation3 + $0xe8] sm:$0xff]
    %v99 = vld [vmem:[#allocation3 + $0xf0] sm:$0xff]
    %v100 = vld [vmem:[#allocation3 + $0xf8] sm:$0xff]
    %v103 = vunpack.c.l.b16 %v67
    %v104 = vunpack.c.h.b16 %v67
    %v105 = vunpack.c.l.b16 %v68
    %v106 = vunpack.c.h.b16 %v68
    %v107 = vpack.c.b16 %v105, %v103
    %v108 = vpack.c.b16 %v106, %v104
    %v143 = vunpack.c.l.b16 %v69
    %v144 = vunpack.c.h.b16 %v69
    %v145 = vunpack.c.l.b16 %v70
    %v146 = vunpack.c.h.b16 %v70
    %v147 = vunpack.c.l.b16 %v71
    %v148 = vunpack.c.h.b16 %v71
    %v149 = vunpack.c.l.b16 %v72
    %v150 = vunpack.c.h.b16 %v72
    %v151 = vunpack.c.l.b16 %v73
    %v152 = vunpack.c.h.b16 %v73
    %v153 = vunpack.c.l.b16 %v74
    %v154 = vunpack.c.h.b16 %v74
    %v155 = vunpack.c.l.b16 %v75
    %v156 = vunpack.c.h.b16 %v75
    %v157 = vunpack.c.l.b16 %v76
    %v158 = vunpack.c.h.b16 %v76
    %v159 = vunpack.c.l.b16 %v77
    %v160 = vunpack.c.h.b16 %v77
    %v161 = vunpack.c.l.b16 %v78
    %v162 = vunpack.c.h.b16 %v78
    %v163 = vunpack.c.l.b16 %v79
    %v164 = vunpack.c.h.b16 %v79
    %v165 = vunpack.c.l.b16 %v80
    %v166 = vunpack.c.h.b16 %v80
    %v167 = vunpack.c.l.b16 %v81
    %v168 = vunpack.c.h.b16 %v81
    %v169 = vunpack.c.l.b16 %v82
    %v170 = vunpack.c.h.b16 %v82
    %v171 = vunpack.c.l.b16 %v83
    %v172 = vunpack.c.h.b16 %v83
    %v173 = vunpack.c.l.b16 %v84
    %v174 = vunpack.c.h.b16 %v84
    %v175 = vunpack.c.l.b16 %v85
    %v176 = vunpack.c.h.b16 %v85
    %v177 = vunpack.c.l.b16 %v86
    %v178 = vunpack.c.h.b16 %v86
    %v179 = vunpack.c.l.b16 %v87
    %v180 = vunpack.c.h.b16 %v87
    %v181 = vunpack.c.l.b16 %v88
    %v182 = vunpack.c.h.b16 %v88
    %v183 = vunpack.c.l.b16 %v89
    %v184 = vunpack.c.h.b16 %v89
    %v185 = vunpack.c.l.b16 %v90
    %v186 = vunpack.c.h.b16 %v90
    %v187 = vunpack.c.l.b16 %v91
    %v188 = vunpack.c.h.b16 %v91
    %v189 = vunpack.c.l.b16 %v92
    %v190 = vunpack.c.h.b16 %v92
    %v191 = vunpack.c.l.b16 %v93
    %v192 = vunpack.c.h.b16 %v93
    %v193 = vunpack.c.l.b16 %v94
    %v194 = vunpack.c.h.b16 %v94
    %v195 = vunpack.c.l.b16 %v95
    %v196 = vunpack.c.h.b16 %v95
    %v197 = vunpack.c.l.b16 %v96
    %v198 = vunpack.c.h.b16 %v96
    %v199 = vunpack.c.l.b16 %v97
    %v200 = vunpack.c.h.b16 %v97
    %v201 = vunpack.c.l.b16 %v98
    %v202 = vunpack.c.h.b16 %v98
    %v203 = vunpack.c.l.b16 %v99
    %v204 = vunpack.c.h.b16 %v99
    %v205 = vunpack.c.l.b16 %v100
    %v206 = vunpack.c.h.b16 %v100
    %v207 = vpack.c.b16 %v145, %v143
    %v208 = vpack.c.b16 %v146, %v144
    %v209 = vpack.c.b16 %v149, %v147
    %v210 = vpack.c.b16 %v150, %v148
    %v211 = vpack.c.b16 %v153, %v151
    %v212 = vpack.c.b16 %v154, %v152
    %v213 = vpack.c.b16 %v157, %v155
    %v214 = vpack.c.b16 %v158, %v156
    %v215 = vpack.c.b16 %v161, %v159
    %v216 = vpack.c.b16 %v162, %v160
    %v217 = vpack.c.b16 %v165, %v163
    %v218 = vpack.c.b16 %v166, %v164
    %v219 = vpack.c.b16 %v169, %v167
    %v220 = vpack.c.b16 %v170, %v168
    %v221 = vpack.c.b16 %v173, %v171
    %v222 = vpack.c.b16 %v174, %v172
    %v223 = vpack.c.b16 %v177, %v175
    %v224 = vpack.c.b16 %v178, %v176
    %v225 = vpack.c.b16 %v181, %v179
    %v226 = vpack.c.b16 %v182, %v180
    %v227 = vpack.c.b16 %v185, %v183
    %v228 = vpack.c.b16 %v186, %v184
    %v229 = vpack.c.b16 %v189, %v187
    %v230 = vpack.c.b16 %v190, %v188
    %v231 = vpack.c.b16 %v193, %v191
    %v232 = vpack.c.b16 %v194, %v192
    %v233 = vpack.c.b16 %v197, %v195
    %v234 = vpack.c.b16 %v198, %v196
    %v235 = vpack.c.b16 %v201, %v199
    %v236 = vpack.c.b16 %v202, %v200
    %v237 = vpack.c.b16 %v205, %v203
    %v238 = vpack.c.b16 %v206, %v204
    %271 = vmatpush.bf16.msra.mxu0 %v221
    %272 = vmatpush.bf16.msra.mxu0 %v219
    %273 = vmatpush.bf16.msra.mxu0 %v217
    %274 = vmatpush.bf16.msra.mxu0 %v215
    %275 = vmatpush.bf16.msra.mxu0 %v213
    %276 = vmatpush.bf16.msra.mxu0 %v211
    %277 = vmatpush.bf16.msra.mxu0 %v209
    %278 = vmatpush.bf16.msra.mxu0 %v207
    %279 = vmatmul.bf16.gmra.mxu0 %v107
    %v280 = vpop.f32.mrf.mxu0
    %v281 = vadd.f32 0.0, %v280
    %v282 = vpop.f32.mrf.mxu0
    %v283 = vadd.f32 0.0, %v282
    %284 = vdwg.mxu0
    %285 = vmatpush.bf16.msra.mxu0 %v237
    %286 = vmatpush.bf16.msra.mxu0 %v235
    %287 = vmatpush.bf16.msra.mxu0 %v233
    %288 = vmatpush.bf16.msra.mxu0 %v231
    %289 = vmatpush.bf16.msra.mxu0 %v229
    %290 = vmatpush.bf16.msra.mxu0 %v227
    %291 = vmatpush.bf16.msra.mxu0 %v225
    %292 = vmatpush.bf16.msra.mxu0 %v223
    %293 = vmatmul.bf16.gmra.mxu0 %v108
    %v294 = vpop.f32.mrf.mxu0
    %v295 = vadd.f32 %v281, %v294
    %v296 = vpop.f32.mrf.mxu0
    %v297 = vadd.f32 %v283, %v296
    %298 = vdwg.mxu0
    %299 = vmatpush.bf16.msra.mxu0 %v222
    %300 = vmatpush.bf16.msra.mxu0 %v220
    %301 = vmatpush.bf16.msra.mxu0 %v218
    %302 = vmatpush.bf16.msra.mxu0 %v216
    %303 = vmatpush.bf16.msra.mxu0 %v214
    %304 = vmatpush.bf16.msra.mxu0 %v212
    %305 = vmatpush.bf16.msra.mxu0 %v210
    %306 = vmatpush.bf16.msra.mxu0 %v208
    %307 = vmatmul.bf16.gmra.mxu0 %v107
    %v308 = vpop.f32.mrf.mxu0
    %v309 = vadd.f32 0.0, %v308
    %v310 = vpop.f32.mrf.mxu0
    %v311 = vadd.f32 0.0, %v310
    %312 = vdwg.mxu0
    %313 = vmatpush.bf16.msra.mxu0 %v238
    %314 = vmatpush.bf16.msra.mxu0 %v236
    %315 = vmatpush.bf16.msra.mxu0 %v234
    %316 = vmatpush.bf16.msra.mxu0 %v232
    %317 = vmatpush.bf16.msra.mxu0 %v230
    %318 = vmatpush.bf16.msra.mxu0 %v228
    %319 = vmatpush.bf16.msra.mxu0 %v226
    %320 = vmatpush.bf16.msra.mxu0 %v224
    %321 = vmatmul.bf16.gmra.mxu0 %v108
    %v322 = vpop.f32.mrf.mxu0
    %v323 = vadd.f32 %v309, %v322
    %v324 = vpop.f32.mrf.mxu0
    %v325 = vadd.f32 %v311, %v324
    %326 = vdwg.mxu0
    %v327 = vadd.f32 %v63, %v295
    %v328 = vadd.f32 %v64, %v323
    %v329 = vadd.f32 %v65, %v297
    %v330 = vadd.f32 %v66, %v325
    %331 = vst [vmem:[#allocation2] sm:$0xff] %v327
    %332 = vst [vmem:[#allocation2 + $0x8] sm:$0xff] %v328
    %333 = vst [vmem:[#allocation2 + $0x10] sm:$0xff] %v329
    %334 = vst [vmem:[#allocation2 + $0x18] sm:$0xff] %v330
    // Predicated region
    $region38: #{decoder_layer.10} parent=1 // pred_check
      %p335 = pneg %p55
    $region39: #{decoder_layer.10} parent=1 // pred_check_branch
      %337 = sbr.rel (%p335) target = $region41
    $region40: #{decoder_layer.10} parent=1 // pred_region
      %v338 = vld [vmem:[#allocation2] sm:$0xff]
      %v339 = vld [vmem:[#allocation2 + $0x8] sm:$0xff]
      %v340 = vld [vmem:[#allocation2 + $0x10] sm:$0xff]
      %v341 = vld [vmem:[#allocation2 + $0x18] sm:$0xff]
      %v342 = vld [vmem:[%s2] sm:$0x3]
      %v344 = vperm.slane %v342, 0
      %v345 = vperm.slane %v342, 1
      %v348 = vadd.f32 %v338, %v344
      %v349 = vadd.f32 %v339, %v345
      %v350 = vadd.f32 %v340, %v344
      %v351 = vadd.f32 %v341, %v345
      %v352 = vld [vmem:[#allocation5] sm:$0xff]
      %v353 = vld [vmem:[#allocation5 + $0x8] sm:$0xff]
      %v354 = vld [vmem:[#allocation5 + $0x10] sm:$0xff]
      %v355 = vld [vmem:[#allocation5 + $0x18] sm:$0xff]
      %v356 = vadd.f32 %v348, %v352
      %v357 = vadd.f32 %v349, %v353
      %v358 = vadd.f32 %v350, %v354
      %v359 = vadd.f32 %v351, %v355
      %v360 = vld [vmem:[%s4] sm:$0x3]
      %v361 = vld [vmem:[%s5] sm:$0x3]
      %v362 = vadd.f32 %v356, %v357
      %363 = vadd.xlane.f32.xlu0 %v362
      %v364 = vpop.xlane.xlu0 %363
      %v365 = vadd.f32 %v358, %v359
      %366 = vadd.xlane.f32.xlu0 %v365
      %v367 = vpop.xlane.xlu0 %366
      %v368 = vrcp.pop 256.0
      %v369 = vmul.f32 256.0, %v368
      %v370 = vsub.f32 1.0, %v369
      %v371 = vmul.f32 %v368, %v370
      %v372 = vadd.f32 %v368, %v371
      %vm373 = vweird.f32 %v368
      %v374 = vsel %vm373, %v368, %v372
      %v375 = vmul.f32 %v364, %v374
      %v376 = vmul.f32 %v367, %v374
      %v377 = vmul.f32 %v356, %v356
      %v378 = vmul.f32 %v357, %v357
      %v379 = vmul.f32 %v358, %v358
      %v380 = vmul.f32 %v359, %v359
      %v381 = vadd.f32 %v377, %v378
      %382 = vadd.xlane.f32.xlu0 %v381
      %v383 = vpop.xlane.xlu0 %382
      %v384 = vadd.f32 %v379, %v380
      %385 = vadd.xlane.f32.xlu0 %v384
      %v386 = vpop.xlane.xlu0 %385
      %v387 = vmul.f32 %v383, %v374
      %v388 = vmul.f32 %v386, %v374
      %v389 = vmul.f32 %v375, %v375
      %v390 = vmul.f32 %v376, %v376
      %v391 = vsub.f32 %v387, %v389
      %v392 = vsub.f32 %v388, %v390
      %v393 = vadd.f32 %v391, 1e-05
      %v394 = vadd.f32 %v392, 1e-05
      %v395 = vrsqrt.pop %v393
      %v396 = vmul.f32 %v395, %v393
      %v397 = vmul.f32 %v396, %v395
      %v398 = vmul.f32 0.5, %v397
      %v399 = vsub.f32 1.5, %v398
      %v400 = vmul.f32 %v395, %v399
      %vm401 = vweird.f32 %v393
      %vm402 = vweird.f32 %v395
      %vm403 = vmor %vm401, %vm402
      %v404 = vsel %vm403, %v395, %v400
      %v405 = vrsqrt.pop %v394
      %v406 = vmul.f32 %v405, %v394
      %v407 = vmul.f32 %v406, %v405
      %v408 = vmul.f32 0.5, %v407
      %v409 = vsub.f32 1.5, %v408
      %v410 = vmul.f32 %v405, %v409
      %vm411 = vweird.f32 %v394
      %vm412 = vweird.f32 %v405
      %vm413 = vmor %vm411, %vm412
      %v414 = vsel %vm413, %v405, %v410
      %v415 = vsub.f32 %v356, %v375
      %v416 = vsub.f32 %v357, %v375
      %v417 = vsub.f32 %v358, %v376
      %v418 = vsub.f32 %v359, %v376
      %v419 = vmul.f32 %v415, %v404
      %v420 = vmul.f32 %v416, %v404
      %v421 = vmul.f32 %v417, %v414
      %v422 = vmul.f32 %v418, %v414
      %v424 = vperm.slane %v360, 0
      %v425 = vperm.slane %v360, 1
      %v428 = vmul.f32 %v419, %v424
      %v429 = vmul.f32 %v420, %v425
      %v430 = vmul.f32 %v421, %v424
      %v431 = vmul.f32 %v422, %v425
      %v433 = vperm.slane %v361, 0
      %v434 = vperm.slane %v361, 1
      %v437 = vadd.f32 %v428, %v433
      %v438 = vadd.f32 %v429, %v434
      %v439 = vadd.f32 %v430, %v433
      %v440 = vadd.f32 %v431, %v434
      %441 = vst [vmem:[%s6] sm:$0xff] %v437
      %442 = vst [vmem:[%s6 + $0x8] sm:$0xff] %v438
      %443 = vst [vmem:[%s6 + $0x10] sm:$0xff] %v439
      %444 = vst [vmem:[%s6 + $0x18] sm:$0xff] %v440
    $region41: #{decoder_layer.10} parent=1 // pred_fallthru
      _
    // Predicated region
    $region42: #{decoder_layer.10} parent=1 // pred_check
      _
    $region43: #{decoder_layer.10} parent=1 // pred_check_branch
      %446 = sbr.rel (0) target = $region45
    $region44: #{decoder_layer.10} parent=1 // pred_region
      _
    $region45: #{decoder_layer.10} parent=1 // pred_fallthru
      _
    // Predicated region
    $region46: #{decoder_layer.10} parent=1 // pred_check
      _
    $region47: #{decoder_layer.10} parent=1 // pred_check_branch
      %448 = sbr.rel (0) target = $region49
    $region48: #{decoder_layer.10} parent=1 // pred_region
      _
    $region49: #{decoder_layer.10} parent=1 // pred_fallthru
      _
    %449 = vsyncpa [#allocation4], 1
    %450 = vsyncpa [#allocation6], 1

// kernel: decoder_layer.13
$region0: #{decoder_layer.13}
  #allocation0 [shape = 'u32[]', space=smem, size = 0x4, offset = 0x4, fixed_abs, tag = 'smem constant byte address 0x4 - core index']
  #allocation1 [shape = 'u32[72,128]{1,0:T(1,128)}', space=vmem, size = 0x9000, scoped, tag = 'internal scratch']
  #allocation2 [shape = 'f32[8,1]{1,0:T(8,128)}', space=vmem, size = 0x1000, scoped, tag = 'scratch operand']
  #allocation3 [shape = 'f32[8,1]{1,0:T(8,128)}', space=vmem, size = 0x1000, scoped, tag = 'scratch operand']
  #allocation4 [shape = 'f32[8,128]{1,0:T(8,128)}', space=vmem, size = 0x1000, scoped, tag = 'scratch operand']
  %s0 = inlined_call_operand.vmem [shape: bf16[16,256], index: 0, kind: input, shape index: {}]
  %s1 = inlined_call_operand.vmem [shape: bf16[16,512], index: 1, kind: input, shape index: {}, may-alias: {1,2}]
  %s2 = inlined_call_operand.vmem [shape: bf16[16,512], index: 2, kind: input, shape index: {}, may-alias: {1,2}]
  %s3 = inlined_call_operand.vmem [shape: bf16[16,256], index: 3, kind: output, shape index: {}]
  %s4 = sld [smem:[#allocation0]]
  $region53: #{decoder_layer.13} parent=0
    _
  %s6 = ssub.s32 1, %s4
  %s7 = scalar_select 0, %s6, %s4
  loop: start=0, step=1, limit=6
  $region2: #{decoder_layer.13} parent=0 // loop_pre_header
    _
  $region3: #{decoder_layer.13} parent=0 // loop_header
    %s9 = sphi 0, %s13
    %p10 = scmp.ge.s32.totalorder %s9, 6
    %s16 = sphi 0, %s42
    %s17 = sphi 0, %s38
    %s18 = sphi 0, %s34
    %s19 = sphi 0, %s30
    %s20 = sphi 0, %s16
    %s21 = sphi 0, %s17
    %s22 = sphi 0, %s18
    %s23 = sphi 0, %s19
    %s24 = sphi 0, %s20
    %s25 = sphi 0, %s21
    %s26 = sphi 0, %s22
    %s27 = sphi 0, %s23
    %s49 = sphi 0, %s51
    %s52 = sphi 0, %s49
    %s53 = sphi 0, %s52
    %s69 = sphi 0, %s53
    %s79 = sphi 0, %s81
    %s82 = sphi 0, %s79
    %s83 = sphi 0, %s82
    %s99 = sphi 0, %s83
    %s111 = sphi 0, %s113
    %s114 = sphi 0, %s111
    %s115 = sphi 0, %s114
    %s131 = sphi 0, %s115
    %s141 = sphi 0, %s143
    %s144 = sphi 0, %s141
    %s145 = sphi 0, %s144
    %s161 = sphi 0, %s145
  $region4: #{decoder_layer.13} parent=0 // loop_header_branch
    %12 = sbr.rel (%p10) target = $region8
  $region5: #{decoder_layer.13} parent=0 // loop_body
    %s14 = ssub.s32 %s9, 1
    %s15 = ssub.s32 %s9, 2
    %s28 = sadd.s32 1, %s19
    %p29 = scmp.ge.s32.totalorder %s28, 1
    %s30 = scalar_select %p29, 0, %s28
    %s31 = sadd.s32 1, %s18
    %s32 = scalar_select %p29, %s31, %s18
    %p33 = scmp.ge.s32.totalorder %s32, 1
    %s34 = scalar_select %p33, 0, %s32
    %s35 = sadd.s32 1, %s17
    %s36 = scalar_select %p33, %s35, %s17
    %p37 = scmp.ge.s32.totalorder %s36, 2
    %s38 = scalar_select %p37, 0, %s36
    %s39 = sadd.s32 1, %s16
    %s40 = scalar_select %p37, %s39, %s16
    %p41 = scmp.ge.s32.totalorder %s40, 2
    %s42 = scalar_select %p41, 0, %s40
    %s43 = sadd.s32 %s16, %s18
    %s44 = sadd.s32 %s42, %s34
    %s45 = ssub.s32 %s43, %s44
    %s46 = ssub.s32 %s17, %s38
    %s47 = sor.u32 %s45, %s46
    %p48 = scmp.eq.s32.totalorder %s47, 0
    %s50 = sadd.s32 %s49, 1
    %s51 = scalar_select %p48, %s49, %s50
    %p54 = pneg %p48
    %p55 = scmp.eq.s32.totalorder %s9, 3
    %p56 = por %p54, %p55
    %p57 = scmp.ne.s32.totalorder %s49, %s52
    %p58 = scmp.eq.s32.totalorder %s9, 0
    %p59 = por %p57, %p58
    %p60 = scmp.ne.s32.totalorder %s49, %s52
    %p61 = scmp.eq.s32.totalorder %s14, 3
    %p62 = por %p60, %p61
    %p63 = scmp.ne.s32.totalorder %s52, %s53
    %p64 = scmp.eq.s32.totalorder %s14, 0
    %p65 = por %p63, %p64
    %p66 = scmp.ne.s32.totalorder %s52, %s53
    %p67 = scmp.eq.s32.totalorder %s15, 3
    %p68 = por %p66, %p67
    %p70 = scmp.ne.s32.totalorder %s53, %s69
    %p71 = scmp.eq.s32.totalorder %s15, 0
    %p72 = por %p70, %p71
    %s73 = sadd.s32 %s16, %s19
    %s74 = sadd.s32 %s42, %s30
    %s75 = ssub.s32 %s73, %s74
    %s76 = ssub.s32 %s17, %s38
    %s77 = sor.u32 %s75, %s76
    %p78 = scmp.eq.s32.totalorder %s77, 0
    %s80 = sadd.s32 %s79, 1
    %s81 = scalar_select %p78, %s79, %s80
    %p84 = pneg %p78
    %p85 = scmp.eq.s32.totalorder %s9, 3
    %p86 = por %p84, %p85
    %p87 = scmp.ne.s32.totalorder %s79, %s82
    %p88 = scmp.eq.s32.totalorder %s9, 0
    %p89 = por %p87, %p88
    %p90 = scmp.ne.s32.totalorder %s79, %s82
    %p91 = scmp.eq.s32.totalorder %s14, 3
    %p92 = por %p90, %p91
    %p93 = scmp.ne.s32.totalorder %s82, %s83
    %p94 = scmp.eq.s32.totalorder %s14, 0
    %p95 = por %p93, %p94
    %p96 = scmp.ne.s32.totalorder %s82, %s83
    %p97 = scmp.eq.s32.totalorder %s15, 3
    %p98 = por %p96, %p97
    %p100 = scmp.ne.s32.totalorder %s83, %s99
    %p101 = scmp.eq.s32.totalorder %s15, 0
    %p102 = por %p100, %p101
    %s103 = sadd.s32 %s16, %s19
    %s104 = sadd.s32 %s17, 2
    %s105 = sadd.s32 %s42, %s30
    %s106 = sadd.s32 %s38, 2
    %s107 = ssub.s32 %s103, %s105
    %s108 = ssub.s32 %s104, %s106
    %s109 = sor.u32 %s107, %s108
    %p110 = scmp.eq.s32.totalorder %s109, 0
    %s112 = sadd.s32 %s111, 1
    %s113 = scalar_select %p110, %s111, %s112
    %p116 = pneg %p110
    %p117 = scmp.eq.s32.totalorder %s9, 3
    %p118 = por %p116, %p117
    %p119 = scmp.ne.s32.totalorder %s111, %s114
    %p120 = scmp.eq.s32.totalorder %s9, 0
    %p121 = por %p119, %p120
    %p122 = scmp.ne.s32.totalorder %s111, %s114
    %p123 = scmp.eq.s32.totalorder %s14, 3
    %p124 = por %p122, %p123
    %p125 = scmp.ne.s32.totalorder %s114, %s115
    %p126 = scmp.eq.s32.totalorder %s14, 0
    %p127 = por %p125, %p126
    %p128 = scmp.ne.s32.totalorder %s114, %s115
    %p129 = scmp.eq.s32.totalorder %s15, 3
    %p130 = por %p128, %p129
    %p132 = scmp.ne.s32.totalorder %s115, %s131
    %p133 = scmp.eq.s32.totalorder %s15, 0
    %p134 = por %p132, %p133
    %s135 = sadd.s32 %s16, %s18
    %s136 = sadd.s32 %s42, %s34
    %s137 = ssub.s32 %s135, %s136
    %s138 = ssub.s32 %s17, %s38
    %s139 = sor.u32 %s137, %s138
    %p140 = scmp.eq.s32.totalorder %s139, 0
    %s142 = sadd.s32 %s141, 1
    %s143 = scalar_select %p140, %s141, %s142
    %p146 = pneg %p140
    %p147 = scmp.eq.s32.totalorder %s9, 3
    %p148 = por %p146, %p147
    %p149 = scmp.ne.s32.totalorder %s141, %s144
    %p150 = scmp.eq.s32.totalorder %s9, 0
    %p151 = por %p149, %p150
    %p152 = scmp.ne.s32.totalorder %s141, %s144
    %p153 = scmp.eq.s32.totalorder %s14, 3
    %p154 = por %p152, %p153
    %p155 = scmp.ne.s32.totalorder %s144, %s145
    %p156 = scmp.eq.s32.totalorder %s14, 0
    %p157 = por %p155, %p156
    %p158 = scmp.ne.s32.totalorder %s144, %s145
    %p159 = scmp.eq.s32.totalorder %s15, 3
    %p160 = por %p158, %p159
    %p162 = scmp.ne.s32.totalorder %s145, %s161
    %p163 = scmp.eq.s32.totalorder %s15, 0
    %p164 = por %p162, %p163
    %p165 = scmp.le.s32.totalorder 1, %s9
    %p166 = scmp.lt.s32.totalorder %s9, 5
    %p167 = pnand %p165, %p166
    %p168 = pneg %p167
    // Predicated region
    $region9: #{decoder_layer.13} parent=5 // pred_check
      _
    $region10: #{decoder_layer.13} parent=5 // pred_check_branch
      %170 = sbr.rel (%p167) target = $region12
    $region11: #{decoder_layer.13} parent=5 // pred_region
      %s171 = ssub.s32 %s9, 1
    $region12: #{decoder_layer.13} parent=5 // pred_fallthru
      _
    %p172 = scmp.lt.s32.totalorder %s9, 4
    // Predicated region
    $region13: #{decoder_layer.13} parent=5 // pred_check
      %p173 = pneg %p172
    $region14: #{decoder_layer.13} parent=5 // pred_check_branch
      %175 = sbr.rel (%p173) target = $region16
    $region15: #{decoder_layer.13} parent=5 // pred_region
      // Predicated region
      $region17: #{decoder_layer.13} parent=15 // pred_check
        %p176 = pneg %p59
      $region18: #{decoder_layer.13} parent=15 // pred_check_branch
        %178 = sbr.rel (%p176) target = $region20
      $region19: #{decoder_layer.13} parent=15 // pred_region
        %s179 = sadd.s32 %s16, %s18
        %p180 = scmp.lt.s32.totalorder %s179, 1
        %s181 = scalar_select %p180, %s179, 1
        %p182 = scmp.lt.s32.totalorder %s17, 1
        %s183 = scalar_select %p182, %s17, 1
        %s184 = smul.addr %s181, 2
        %s185 = sadd.s32 %s183, %s184
        %s186 = smul.addr %s185, 4
        %s187 = scalar_lea.vmem %s0, %s186
        %s188 = sadd.s32 %s16, %s18
      $region20: #{decoder_layer.13} parent=15 // pred_fallthru
        _
      // Predicated region
      $region21: #{decoder_layer.13} parent=15 // pred_check
        %p189 = pneg %p89
      $region22: #{decoder_layer.13} parent=15 // pred_check_branch
        %191 = sbr.rel (%p189) target = $region24
      $region23: #{decoder_layer.13} parent=15 // pred_region
        %s192 = sadd.s32 %s16, %s19
        %p193 = scmp.lt.s32.totalorder %s192, 1
        %s194 = scalar_select %p193, %s192, 1
        %p195 = scmp.lt.s32.totalorder %s17, 3
        %s196 = scalar_select %p195, %s17, 3
        %s197 = smul.addr %s194, 4
        %s198 = sadd.s32 %s196, %s197
        %s199 = smul.addr %s198, 4
        %s200 = scalar_lea.vmem %s1, %s199
        %s201 = sadd.s32 %s16, %s19
      $region24: #{decoder_layer.13} parent=15 // pred_fallthru
        _
      // Predicated region
      $region25: #{decoder_layer.13} parent=15 // pred_check
        %p202 = pneg %p121
      $region26: #{decoder_layer.13} parent=15 // pred_check_branch
        %204 = sbr.rel (%p202) target = $region28
      $region27: #{decoder_layer.13} parent=15 // pred_region
        %s205 = sadd.s32 %s16, %s19
        %s206 = sadd.s32 %s17, 2
        %p207 = scmp.lt.s32.totalorder %s205, 1
        %s208 = scalar_select %p207, %s205, 1
        %p209 = scmp.lt.s32.totalorder %s206, 3
        %s210 = scalar_select %p209, %s206, 3
        %s211 = smul.addr %s208, 4
        %s212 = sadd.s32 %s210, %s211
        %s213 = smul.addr %s212, 4
        %s214 = scalar_lea.vmem %s2, %s213
        %s215 = sadd.s32 %s16, %s19
        %s216 = sadd.s32 %s17, 2
      $region28: #{decoder_layer.13} parent=15 // pred_fallthru
        _
    $region16: #{decoder_layer.13} parent=5 // pred_fallthru
      _
    %p217 = scmp.le.s32.totalorder 1, %s9
    %p218 = scmp.lt.s32.totalorder %s9, 5
    %p219 = pnand %p217, %p218
    %p220 = pneg %p219
    // Predicated region
    $region29: #{decoder_layer.13} parent=5 // pred_check
      _
    $region30: #{decoder_layer.13} parent=5 // pred_check_branch
      %222 = sbr.rel (%p219) target = $region32
    $region31: #{decoder_layer.13} parent=5 // pred_region
      %s223 = ssub.s32 %s9, 1
      %s224 = sadd.s32 %s20, %s22
      %p225 = scmp.lt.s32.totalorder %s224, 1
      %s226 = scalar_select %p225, %s224, 1
      %p227 = scmp.lt.s32.totalorder %s21, 1
      %s228 = scalar_select %p227, %s21, 1
      %s229 = smul.addr %s226, 2
      %s230 = sadd.s32 %s228, %s229
      %s231 = smul.addr %s230, 4
      %s232 = scalar_lea.vmem %s0, %s231
      %p233 = pneg %p65
      %p234 = pneg %p62
      %s235 = sadd.s32 %s20, %s23
      %p236 = scmp.lt.s32.totalorder %s235, 1
      %s237 = scalar_select %p236, %s235, 1
      %p238 = scmp.lt.s32.totalorder %s21, 3
      %s239 = scalar_select %p238, %s21, 3
      %s240 = smul.addr %s237, 4
      %s241 = sadd.s32 %s239, %s240
      %s242 = smul.addr %s241, 4
      %s243 = scalar_lea.vmem %s1, %s242
      %p244 = pneg %p95
      %p245 = pneg %p92
      %s246 = sadd.s32 %s20, %s23
      %s247 = sadd.s32 %s21, 2
      %p248 = scmp.lt.s32.totalorder %s246, 1
      %s249 = scalar_select %p248, %s246, 1
      %p250 = scmp.lt.s32.totalorder %s247, 3
      %s251 = scalar_select %p250, %s247, 3
      %s252 = smul.addr %s249, 4
      %s253 = sadd.s32 %s251, %s252
      %s254 = smul.addr %s253, 4
      %s255 = scalar_lea.vmem %s2, %s254
      %p256 = pneg %p127
      %p257 = pneg %p124
      %p258 = pneg %p157
      %p259 = pneg %p154
      %s260 = sadd.s32 %s20, %s22
      %p261 = scmp.lt.s32.totalorder %s260, 1
      %s262 = scalar_select %p261, %s260, 1
      %p263 = scmp.lt.s32.totalorder %s21, 1
      %s264 = scalar_select %p263, %s21, 1
      %s265 = smul.addr %s262, 2
      %s266 = sadd.s32 %s264, %s265
      %s267 = smul.addr %s266, 4
      %s268 = scalar_lea.vmem %s3, %s267
      %s269 = sadd.s32 %s20, %s22
      %p270 = scmp.lt.s32.totalorder %s269, 1
      %s271 = scalar_select %p270, %s269, 1
      %p272 = scmp.lt.s32.totalorder %s21, 1
      %s273 = scalar_select %p272, %s21, 1
      %s274 = smul.addr %s271, 2
      %s275 = sadd.s32 %s273, %s274
      %s276 = smul.addr %s275, 4
      %s277 = scalar_lea.vmem %s0, %s276
      %s278 = sadd.s32 %s20, %s22
      %s279 = sadd.s32 %s20, %s23
      %p280 = scmp.lt.s32.totalorder %s279, 1
      %s281 = scalar_select %p280, %s279, 1
      %p282 = scmp.lt.s32.totalorder %s21, 3
      %s283 = scalar_select %p282, %s21, 3
      %s284 = smul.addr %s281, 4
      %s285 = sadd.s32 %s283, %s284
      %s286 = smul.addr %s285, 4
      %s287 = scalar_lea.vmem %s1, %s286
      %s288 = sadd.s32 %s20, %s23
      %s289 = sadd.s32 %s20, %s23
      %s290 = sadd.s32 %s21, 2
      %p291 = scmp.lt.s32.totalorder %s289, 1
      %s292 = scalar_select %p291, %s289, 1
      %p293 = scmp.lt.s32.totalorder %s290, 3
      %s294 = scalar_select %p293, %s290, 3
      %s295 = smul.addr %s292, 4
      %s296 = sadd.s32 %s294, %s295
      %s297 = smul.addr %s296, 4
      %s298 = scalar_lea.vmem %s2, %s297
      %s299 = sadd.s32 %s20, %s23
      %s300 = sadd.s32 %s21, 2
      %s301 = sadd.s32 %s20, %s22
      %p302 = scmp.lt.s32.totalorder %s301, 1
      %s303 = scalar_select %p302, %s301, 1
      %p304 = scmp.lt.s32.totalorder %s21, 1
      %s305 = scalar_select %p304, %s21, 1
      %s306 = smul.addr %s303, 2
      %s307 = sadd.s32 %s305, %s306
      %s308 = smul.addr %s307, 4
      %s309 = scalar_lea.vmem %s3, %s308
      %s310 = sadd.s32 %s20, %s22
      %p312 = scmp.eq.s32.totalorder %s23, 0
      // Predicated region
      $region33: #{decoder_layer.13} parent=31 // pred_check
        %p313 = pneg %p312
      $region34: #{decoder_layer.13} parent=31 // pred_check_branch
        %315 = sbr.rel (%p313) target = $region36
      $region35: #{decoder_layer.13} parent=31 // pred_region
        %vm316 = vcmask 7168
        %317 = vst.msk [vmem:[#allocation2] sm:$0xff] %vm316, -inf
        %318 = vst.msk [vmem:[#allocation3] sm:$0xff] %vm316, 0.0
        %319 = vst [vmem:[#allocation4] sm:$0xff] 0.0
      $region36: #{decoder_layer.13} parent=31 // pred_fallthru
        _
      %v320 = vld [vmem:[%s277] sm:$0xf]
      %v321 = vunpack.c.l.bf16 %v320
      %v322 = vmul.f32 %v321, 0.088388346
      %v323 = vpack.c.bf16 %v322, %v322
      %v324 = vld [vmem:[%s287] sm:$0xf]
      %325 = vmatpush.bf16.xpose.msra.mxu0 0
      %326 = vmatpush.bf16.xpose.msra.mxu0 0
      %327 = vmatpush.bf16.xpose.msra.mxu0 0
      %328 = vmatpush.bf16.xpose.msra.mxu0 0
      %329 = vmatpush.bf16.xpose.msra.mxu0 0
      %330 = vmatpush.bf16.xpose.msra.mxu0 0
      %331 = vmatpush.bf16.xpose.msra.mxu0 0
      %332 = vmatpush.bf16.xpose.msra.mxu0 %v324
      %333 = vmatmul.bf16.gmra.mxu0 %v323
      %v334 = vpop.f32.mrf.mxu0
      %v335 = vadd.f32 0.0, %v334
      %v336 = vpop.f32.mrf.mxu0
      %337 = vdwg.mxu0
      %v338 = vld [vmem:[#allocation2] sm:$0xff]
      %vm339 = vcmask 64512
      %v340 = vsel %vm339, %v335, -inf
      %341 = vmax.xlane.f32.xlu0 %v340
      %v342 = vpop.xlane.xlu0 %341
      %v343 = vmax.f32 %v338, %v342
      %v344 = vsub.f32 %v338, %v343
      %v345 = vmul.f32 %v344, 1.442695
      %v346 = vpow.pop %v345
      %348 = vset.pattern.permute.xlu0 0
      %349 = vperm.xlu0 %348, %v343
      %v350 = vpop.permute.xlu0 %349
      %v352 = vsub.f32 %v335, %v350
      %v353 = vmul.f32 %v352, 1.442695
      %v354 = vpow.pop %v353
      %v355 = vld [vmem:[#allocation3] sm:$0xff]
      %v356 = vmul.f32 %v346, %v355
      %v357 = vsel %vm339, %v354, 0.0
      %358 = vadd.xlane.f32.xlu0 %v357
      %v359 = vpop.xlane.xlu0 %358
      %v360 = vadd.f32 %v356, %v359
      %vm361 = vcmask 7168
      %362 = vst.msk [vmem:[#allocation3] sm:$0xff] %vm361, %v360
      %v363 = vld [vmem:[#allocation4] sm:$0xff]
      %365 = vset.pattern.permute.xlu0 0
      %366 = vperm.xlu0 %365, %v346
      %v367 = vpop.permute.xlu0 %366
      %v369 = vmul.f32 %v367, %v363
      %v370 = vpack.c.bf16 %v354, %v354
      %v371 = vld [vmem:[%s298] sm:$0xf]
      %v373 = vsel %vm339, %v370, 0
      %vm375 = vcmask 1043456
      %v377 = vsel %vm375, %v371, 0
      %379 = vmatpush.bf16.msra.mxu0 0
      %380 = vmatpush.bf16.msra.mxu0 0
      %381 = vmatpush.bf16.msra.mxu0 0
      %382 = vmatpush.bf16.msra.mxu0 0
      %383 = vmatpush.bf16.msra.mxu0 0
      %384 = vmatpush.bf16.msra.mxu0 0
      %385 = vmatpush.bf16.msra.mxu0 0
      %386 = vmatpush.bf16.msra.mxu0 %v377
      %387 = vmatmul.bf16.gmra.mxu0 %v373
      %v388 = vpop.f32.mrf.mxu0
      %v389 = vadd.f32 0.0, %v388
      %v390 = vpop.f32.mrf.mxu0
      %391 = vdwg.mxu0
      %v392 = vadd.f32 %v369, %v389
      %393 = vst [vmem:[#allocation4] sm:$0xff] %v392
      %394 = vst.msk [vmem:[#allocation2] sm:$0xff] %vm361, %v343
      // Predicated region
      $region37: #{decoder_layer.13} parent=31 // pred_check
        %p395 = pneg %p312
      $region38: #{decoder_layer.13} parent=31 // pred_check_branch
        %397 = sbr.rel (%p395) target = $region40
      $region39: #{decoder_layer.13} parent=31 // pred_region
        %v398 = vld [vmem:[#allocation4] sm:$0xff]
        %v399 = vld [vmem:[#allocation3] sm:$0xff]
        %401 = vset.pattern.permute.xlu0 0
        %402 = vperm.xlu0 %401, %v399
        %v403 = vpop.permute.xlu0 %402
        %v405 = vrcp.pop %v403
        %v406 = vmul.f32 %v403, %v405
        %v407 = vsub.f32 1.0, %v406
        %v408 = vmul.f32 %v405, %v407
        %v409 = vadd.f32 %v405, %v408
        %vm410 = vweird.f32 %v403
        %vm411 = vweird.f32 %v405
        %vm412 = vmor %vm410, %vm411
        %v413 = vsel %vm412, %v405, %v409
        %v414 = vand.u32 2147483647, %v403
        %vm415 = vcmp.eq.f32.partialorder %v414, 8.507059e+37
        %v416 = vand.u32 %v403, 2147483648
        %v417 = vor.u32 1.1754944e-38, %v416
        %v418 = vsel %vm415, %v417, %v413
        %v419 = vmul.f32 %v398, %v418
        %v420 = vpack.c.bf16 %v419, %v419
        %421 = vst [vmem:[%s309] sm:$0xf] %v420
      $region40: #{decoder_layer.13} parent=31 // pred_fallthru
        _
      %s422 = sadd.s32 %s20, %s22
      %p423 = scmp.lt.s32.totalorder %s422, 1
      %s424 = scalar_select %p423, %s422, 1
      %p425 = scmp.lt.s32.totalorder %s21, 1
      %s426 = scalar_select %p425, %s21, 1
      %s427 = smul.addr %s424, 2
      %s428 = sadd.s32 %s426, %s427
      %s429 = smul.addr %s428, 4
      %s430 = scalar_lea.vmem %s3, %s429
      // Predicated region
      $region41: #{decoder_layer.13} parent=31 // pred_check
        %p431 = pneg %p154
      $region42: #{decoder_layer.13} parent=31 // pred_check_branch
        %433 = sbr.rel (%p431) target = $region44
      $region43: #{decoder_layer.13} parent=31 // pred_region
        %s434 = sadd.s32 %s20, %s22
      $region44: #{decoder_layer.13} parent=31 // pred_fallthru
        _
    $region32: #{decoder_layer.13} parent=5 // pred_fallthru
      _
    %p435 = scmp.le.s32.totalorder 2, %s9
    // Predicated region
    $region45: #{decoder_layer.13} parent=5 // pred_check
      %p436 = pneg %p435
    $region46: #{decoder_layer.13} parent=5 // pred_check_branch
      %438 = sbr.rel (%p436) target = $region48
    $region47: #{decoder_layer.13} parent=5 // pred_region
      %s439 = ssub.s32 %s9, 2
      // Predicated region
      $region49: #{decoder_layer.13} parent=47 // pred_check
        %p440 = pneg %p160
      $region50: #{decoder_layer.13} parent=47 // pred_check_branch
        %442 = sbr.rel (%p440) target = $region52
      $region51: #{decoder_layer.13} parent=47 // pred_region
        %s443 = sadd.s32 %s24, %s26
        %p444 = scmp.lt.s32.totalorder %s443, 1
        %s445 = scalar_select %p444, %s443, 1
        %p446 = scmp.lt.s32.totalorder %s25, 1
        %s447 = scalar_select %p446, %s25, 1
        %s448 = smul.addr %s445, 2
        %s449 = sadd.s32 %s447, %s448
        %s450 = smul.addr %s449, 4
        %s451 = scalar_lea.vmem %s3, %s450
      $region52: #{decoder_layer.13} parent=47 // pred_fallthru
        _
    $region48: #{decoder_layer.13} parent=5 // pred_fallthru
      _
  $region6: #{decoder_layer.13} parent=0 // loop_footer
    %s13 = sadd.s32 1, %s9
  $region7: #{decoder_layer.13} parent=0 // loop_footer_branch
    %8 = sbr.rel target = $region3
  $region8: #{decoder_layer.13} parent=0 // loop_exit
    _

// kernel: decoder_layer.11
$region0: #{decoder_layer.11}
  #allocation0 [shape = 'u32[]', space=smem, size = 0x4, offset = 0x4, fixed_abs, tag = 'smem constant byte address 0x4 - core index']
  #allocation1 [shape = 'u32[72,128]{1,0:T(1,128)}', space=vmem, size = 0x9000, scoped, tag = 'internal scratch']
  #allocation2 [shape = 'f32[16,256]{1,0:T(8,128)}', space=vmem, size = 0x4000, scoped, tag = 'scratch operand']
  %s0 = inlined_call_operand.vmem [shape: f32[16,256], index: 0, kind: input, shape index: {}]
  %s1 = inlined_call_operand.hbm [shape: bf16[256,256], index: 1, kind: input, shape index: {}]
  %s2 = inlined_call_operand.vmem [shape: f32[1,256], index: 2, kind: input, shape index: {}]
  %s3 = inlined_call_operand.vmem [shape: bf16[16,256], index: 3, kind: output, shape index: {}]
  %s4 = sld [smem:[#allocation0]]
  $region34: #{decoder_layer.11} parent=0
    _
  %s6 = ssub.s32 1, %s4
  %s7 = scalar_select 0, %s6, %s4
  $region1: #{decoder_layer.11} parent=0
    #allocation3 [shape = 'u8[131072]{0}', space=vmem, size = 0x20000, scoped, tag = 'input window, operand 1, single buffered']
    #allocation4 [shape = 's32[1]{0}', space=sflag, size = 0x4, scoped, tag = 'scoped memory for decoder_layer.11']
    %8 = vsyncpa [#allocation4], 0
    // Predicated region
    $region2: #{decoder_layer.11} parent=1 // pred_check
      _
    $region3: #{decoder_layer.11} parent=1 // pred_check_branch
      %10 = sbr.rel (0) target = $region5
    $region4: #{decoder_layer.11} parent=1 // pred_region
      _
    $region5: #{decoder_layer.11} parent=1 // pred_fallthru
      _
    // Predicated region
    $region6: #{decoder_layer.11} parent=1 // pred_check
      _
    $region7: #{decoder_layer.11} parent=1 // pred_check_branch
      %12 = sbr.rel (0) target = $region9
    $region8: #{decoder_layer.11} parent=1 // pred_region
      %14 = vsyncadd [#allocation4], 0
      %s15 = sshll.u32 %s1, 4
      %s16 = int_to_ptr.hbm [resolvable:$true] %s15
      %s17 = sshll.u32 [#allocation3], 4
      %s18 = int_to_ptr.vmem [resolvable:$true] %s17
      %23 = dma.hbm_to_vmem [thread:$0]  %s16, 4096, %s18, [#allocation4], 128, 128, 8
    $region9: #{decoder_layer.11} parent=1 // pred_fallthru
      _
    // Predicated region
    $region10: #{decoder_layer.11} parent=1 // pred_check
      _
    $region11: #{decoder_layer.11} parent=1 // pred_check_branch
      %25 = sbr.rel (0) target = $region13
    $region12: #{decoder_layer.11} parent=1 // pred_region
      _
    $region13: #{decoder_layer.11} parent=1 // pred_fallthru
      _
    // Predicated region
    $region14: #{decoder_layer.11} parent=1 // pred_check
      _
    $region15: #{decoder_layer.11} parent=1 // pred_check_branch
      %27 = sbr.rel (0) target = $region17
    $region16: #{decoder_layer.11} parent=1 // pred_region
      %29 = dma.done [#allocation4], 4096
    $region17: #{decoder_layer.11} parent=1 // pred_fallthru
      _
    %p30 = scmp.eq.s32.totalorder 0, 0
    // Predicated region
    $region18: #{decoder_layer.11} parent=1 // pred_check
      %p31 = pneg %p30
    $region19: #{decoder_layer.11} parent=1 // pred_check_branch
      %33 = sbr.rel (%p31) target = $region21
    $region20: #{decoder_layer.11} parent=1 // pred_region
      %34 = vst [vmem:[#allocation2] sm:$0xff] 0.0
      %35 = vst [vmem:[#allocation2 + $0x8] sm:$0xff] 0.0
      %36 = vst [vmem:[#allocation2 + $0x10] sm:$0xff] 0.0
      %37 = vst [vmem:[#allocation2 + $0x18] sm:$0xff] 0.0
    $region21: #{decoder_layer.11} parent=1 // pred_fallthru
      _
    %v38 = vld [vmem:[#allocation2] sm:$0xff]
    %v39 = vld [vmem:[#allocation2 + $0x8] sm:$0xff]
    %v40 = vld [vmem:[#allocation2 + $0x10] sm:$0xff]
    %v41 = vld [vmem:[#allocation2 + $0x18] sm:$0xff]
    %v42 = vld [vmem:[%s0] sm:$0xff]
    %v43 = vld [vmem:[%s0 + $0x8] sm:$0xff]
    %v44 = vld [vmem:[%s0 + $0x10] sm:$0xff]
    %v45 = vld [vmem:[%s0 + $0x18] sm:$0xff]
    %v46 = vpack.c.bf16 %v44, %v42
    %v47 = vpack.c.bf16 %v45, %v43
    %v48 = vld [vmem:[#allocation3] sm:$0xff]
    %v49 = vld [vmem:[#allocation3 + $0x8] sm:$0xff]
    %v50 = vld [vmem:[#allocation3 + $0x10] sm:$0xff]
    %v51 = vld [vmem:[#allocation3 + $0x18] sm:$0xff]
    %v52 = vld [vmem:[#allocation3 + $0x20] sm:$0xff]
    %v53 = vld [vmem:[#allocation3 + $0x28] sm:$0xff]
    %v54 = vld [vmem:[#allocation3 + $0x30] sm:$0xff]
    %v55 = vld [vmem:[#allocation3 + $0x38] sm:$0xff]
    %v56 = vld [vmem:[#allocation3 + $0x40] sm:$0xff]
    %v57 = vld [vmem:[#allocation3 + $0x48] sm:$0xff]
    %v58 = vld [vmem:[#allocation3 + $0x50] sm:$0xff]
    %v59 = vld [vmem:[#allocation3 + $0x58] sm:$0xff]
    %v60 = vld [vmem:[#allocation3 + $0x60] sm:$0xff]
    %v61 = vld [vmem:[#allocation3 + $0x68] sm:$0xff]
    %v62 = vld [vmem:[#allocation3 + $0x70] sm:$0xff]
    %v63 = vld [vmem:[#allocation3 + $0x78] sm:$0xff]
    %v64 = vld [vmem:[#allocation3 + $0x80] sm:$0xff]
    %v65 = vld [vmem:[#allocation3 + $0x88] sm:$0xff]
    %v66 = vld [vmem:[#allocation3 + $0x90] sm:$0xff]
    %v67 = vld [vmem:[#allocation3 + $0x98] sm:$0xff]
    %v68 = vld [vmem:[#allocation3 + $0xa0] sm:$0xff]
    %v69 = vld [vmem:[#allocation3 + $0xa8] sm:$0xff]
    %v70 = vld [vmem:[#allocation3 + $0xb0] sm:$0xff]
    %v71 = vld [vmem:[#allocation3 + $0xb8] sm:$0xff]
    %v72 = vld [vmem:[#allocation3 + $0xc0] sm:$0xff]
    %v73 = vld [vmem:[#allocation3 + $0xc8] sm:$0xff]
    %v74 = vld [vmem:[#allocation3 + $0xd0] sm:$0xff]
    %v75 = vld [vmem:[#allocation3 + $0xd8] sm:$0xff]
    %v76 = vld [vmem:[#allocation3 + $0xe0] sm:$0xff]
    %v77 = vld [vmem:[#allocation3 + $0xe8] sm:$0xff]
    %v78 = vld [vmem:[#allocation3 + $0xf0] sm:$0xff]
    %v79 = vld [vmem:[#allocation3 + $0xf8] sm:$0xff]
    %v112 = vunpack.c.l.b16 %v48
    %v113 = vunpack.c.h.b16 %v48
    %v114 = vunpack.c.l.b16 %v49
    %v115 = vunpack.c.h.b16 %v49
    %v116 = vunpack.c.l.b16 %v50
    %v117 = vunpack.c.h.b16 %v50
    %v118 = vunpack.c.l.b16 %v51
    %v119 = vunpack.c.h.b16 %v51
    %v120 = vunpack.c.l.b16 %v52
    %v121 = vunpack.c.h.b16 %v52
    %v122 = vunpack.c.l.b16 %v53
    %v123 = vunpack.c.h.b16 %v53
    %v124 = vunpack.c.l.b16 %v54
    %v125 = vunpack.c.h.b16 %v54
    %v126 = vunpack.c.l.b16 %v55
    %v127 = vunpack.c.h.b16 %v55
    %v128 = vunpack.c.l.b16 %v56
    %v129 = vunpack.c.h.b16 %v56
    %v130 = vunpack.c.l.b16 %v57
    %v131 = vunpack.c.h.b16 %v57
    %v132 = vunpack.c.l.b16 %v58
    %v133 = vunpack.c.h.b16 %v58
    %v134 = vunpack.c.l.b16 %v59
    %v135 = vunpack.c.h.b16 %v59
    %v136 = vunpack.c.l.b16 %v60
    %v137 = vunpack.c.h.b16 %v60
    %v138 = vunpack.c.l.b16 %v61
    %v139 = vunpack.c.h.b16 %v61
    %v140 = vunpack.c.l.b16 %v62
    %v141 = vunpack.c.h.b16 %v62
    %v142 = vunpack.c.l.b16 %v63
    %v143 = vunpack.c.h.b16 %v63
    %v144 = vunpack.c.l.b16 %v64
    %v145 = vunpack.c.h.b16 %v64
    %v146 = vunpack.c.l.b16 %v65
    %v147 = vunpack.c.h.b16 %v65
    %v148 = vunpack.c.l.b16 %v66
    %v149 = vunpack.c.h.b16 %v66
    %v150 = vunpack.c.l.b16 %v67
    %v151 = vunpack.c.h.b16 %v67
    %v152 = vunpack.c.l.b16 %v68
    %v153 = vunpack.c.h.b16 %v68
    %v154 = vunpack.c.l.b16 %v69
    %v155 = vunpack.c.h.b16 %v69
    %v156 = vunpack.c.l.b16 %v70
    %v157 = vunpack.c.h.b16 %v70
    %v158 = vunpack.c.l.b16 %v71
    %v159 = vunpack.c.h.b16 %v71
    %v160 = vunpack.c.l.b16 %v72
    %v161 = vunpack.c.h.b16 %v72
    %v162 = vunpack.c.l.b16 %v73
    %v163 = vunpack.c.h.b16 %v73
    %v164 = vunpack.c.l.b16 %v74
    %v165 = vunpack.c.h.b16 %v74
    %v166 = vunpack.c.l.b16 %v75
    %v167 = vunpack.c.h.b16 %v75
    %v168 = vunpack.c.l.b16 %v76
    %v169 = vunpack.c.h.b16 %v76
    %v170 = vunpack.c.l.b16 %v77
    %v171 = vunpack.c.h.b16 %v77
    %v172 = vunpack.c.l.b16 %v78
    %v173 = vunpack.c.h.b16 %v78
    %v174 = vunpack.c.l.b16 %v79
    %v175 = vunpack.c.h.b16 %v79
    %v176 = vpack.c.b16 %v114, %v112
    %v177 = vpack.c.b16 %v115, %v113
    %v178 = vpack.c.b16 %v118, %v116
    %v179 = vpack.c.b16 %v119, %v117
    %v180 = vpack.c.b16 %v122, %v120
    %v181 = vpack.c.b16 %v123, %v121
    %v182 = vpack.c.b16 %v126, %v124
    %v183 = vpack.c.b16 %v127, %v125
    %v184 = vpack.c.b16 %v130, %v128
    %v185 = vpack.c.b16 %v131, %v129
    %v186 = vpack.c.b16 %v134, %v132
    %v187 = vpack.c.b16 %v135, %v133
    %v188 = vpack.c.b16 %v138, %v136
    %v189 = vpack.c.b16 %v139, %v137
    %v190 = vpack.c.b16 %v142, %v140
    %v191 = vpack.c.b16 %v143, %v141
    %v192 = vpack.c.b16 %v146, %v144
    %v193 = vpack.c.b16 %v147, %v145
    %v194 = vpack.c.b16 %v150, %v148
    %v195 = vpack.c.b16 %v151, %v149
    %v196 = vpack.c.b16 %v154, %v152
    %v197 = vpack.c.b16 %v155, %v153
    %v198 = vpack.c.b16 %v158, %v156
    %v199 = vpack.c.b16 %v159, %v157
    %v200 = vpack.c.b16 %v162, %v160
    %v201 = vpack.c.b16 %v163, %v161
    %v202 = vpack.c.b16 %v166, %v164
    %v203 = vpack.c.b16 %v167, %v165
    %v204 = vpack.c.b16 %v170, %v168
    %v205 = vpack.c.b16 %v171, %v169
    %v206 = vpack.c.b16 %v174, %v172
    %v207 = vpack.c.b16 %v175, %v173
    %240 = vmatpush.bf16.msra.mxu0 %v190
    %241 = vmatpush.bf16.msra.mxu0 %v188
    %242 = vmatpush.bf16.msra.mxu0 %v186
    %243 = vmatpush.bf16.msra.mxu0 %v184
    %244 = vmatpush.bf16.msra.mxu0 %v182
    %245 = vmatpush.bf16.msra.mxu0 %v180
    %246 = vmatpush.bf16.msra.mxu0 %v178
    %247 = vmatpush.bf16.msra.mxu0 %v176
    %248 = vmatmul.bf16.gmra.mxu0 %v46
    %v249 = vpop.f32.mrf.mxu0
    %v250 = vadd.f32 0.0, %v249
    %v251 = vpop.f32.mrf.mxu0
    %v252 = vadd.f32 0.0, %v251
    %253 = vdwg.mxu0
    %254 = vmatpush.bf16.msra.mxu0 %v206
    %255 = vmatpush.bf16.msra.mxu0 %v204
    %256 = vmatpush.bf16.msra.mxu0 %v202
    %257 = vmatpush.bf16.msra.mxu0 %v200
    %258 = vmatpush.bf16.msra.mxu0 %v198
    %259 = vmatpush.bf16.msra.mxu0 %v196
    %260 = vmatpush.bf16.msra.mxu0 %v194
    %261 = vmatpush.bf16.msra.mxu0 %v192
    %262 = vmatmul.bf16.gmra.mxu0 %v47
    %v263 = vpop.f32.mrf.mxu0
    %v264 = vadd.f32 %v250, %v263
    %v265 = vpop.f32.mrf.mxu0
    %v266 = vadd.f32 %v252, %v265
    %267 = vdwg.mxu0
    %268 = vmatpush.bf16.msra.mxu0 %v191
    %269 = vmatpush.bf16.msra.mxu0 %v189
    %270 = vmatpush.bf16.msra.mxu0 %v187
    %271 = vmatpush.bf16.msra.mxu0 %v185
    %272 = vmatpush.bf16.msra.mxu0 %v183
    %273 = vmatpush.bf16.msra.mxu0 %v181
    %274 = vmatpush.bf16.msra.mxu0 %v179
    %275 = vmatpush.bf16.msra.mxu0 %v177
    %276 = vmatmul.bf16.gmra.mxu0 %v46
    %v277 = vpop.f32.mrf.mxu0
    %v278 = vadd.f32 0.0, %v277
    %v279 = vpop.f32.mrf.mxu0
    %v280 = vadd.f32 0.0, %v279
    %281 = vdwg.mxu0
    %282 = vmatpush.bf16.msra.mxu0 %v207
    %283 = vmatpush.bf16.msra.mxu0 %v205
    %284 = vmatpush.bf16.msra.mxu0 %v203
    %285 = vmatpush.bf16.msra.mxu0 %v201
    %286 = vmatpush.bf16.msra.mxu0 %v199
    %287 = vmatpush.bf16.msra.mxu0 %v197
    %288 = vmatpush.bf16.msra.mxu0 %v195
    %289 = vmatpush.bf16.msra.mxu0 %v193
    %290 = vmatmul.bf16.gmra.mxu0 %v47
    %v291 = vpop.f32.mrf.mxu0
    %v292 = vadd.f32 %v278, %v291
    %v293 = vpop.f32.mrf.mxu0
    %v294 = vadd.f32 %v280, %v293
    %295 = vdwg.mxu0
    %v296 = vadd.f32 %v38, %v264
    %v297 = vadd.f32 %v39, %v292
    %v298 = vadd.f32 %v40, %v266
    %v299 = vadd.f32 %v41, %v294
    %300 = vst [vmem:[#allocation2] sm:$0xff] %v296
    %301 = vst [vmem:[#allocation2 + $0x8] sm:$0xff] %v297
    %302 = vst [vmem:[#allocation2 + $0x10] sm:$0xff] %v298
    %303 = vst [vmem:[#allocation2 + $0x18] sm:$0xff] %v299
    // Predicated region
    $region22: #{decoder_layer.11} parent=1 // pred_check
      %p304 = pneg %p30
    $region23: #{decoder_layer.11} parent=1 // pred_check_branch
      %306 = sbr.rel (%p304) target = $region25
    $region24: #{decoder_layer.11} parent=1 // pred_region
      %v307 = vld [vmem:[#allocation2] sm:$0xff]
      %v308 = vld [vmem:[#allocation2 + $0x8] sm:$0xff]
      %v309 = vld [vmem:[#allocation2 + $0x10] sm:$0xff]
      %v310 = vld [vmem:[#allocation2 + $0x18] sm:$0xff]
      %v311 = vld [vmem:[%s2] sm:$0x3]
      %v313 = vperm.slane %v311, 0
      %v314 = vperm.slane %v311, 1
      %v317 = vadd.f32 %v307, %v313
      %v318 = vadd.f32 %v308, %v314
      %v319 = vadd.f32 %v309, %v313
      %v320 = vadd.f32 %v310, %v314
      %v321 = vpack.c.bf16 %v318, %v317
      %v322 = vpack.c.bf16 %v320, %v319
      %323 = vst [vmem:[%s3] sm:$0xff] %v321
      %324 = vst [vmem:[%s3 + $0x8] sm:$0xff] %v322
    $region25: #{decoder_layer.11} parent=1 // pred_fallthru
      _
    // Predicated region
    $region26: #{decoder_layer.11} parent=1 // pred_check
      _
    $region27: #{decoder_layer.11} parent=1 // pred_check_branch
      %326 = sbr.rel (0) target = $region29
    $region28: #{decoder_layer.11} parent=1 // pred_region
      _
    $region29: #{decoder_layer.11} parent=1 // pred_fallthru
      _
    // Predicated region
    $region30: #{decoder_layer.11} parent=1 // pred_check
      _
    $region31: #{decoder_layer.11} parent=1 // pred_check_branch
      %328 = sbr.rel (0) target = $region33
    $region32: #{decoder_layer.11} parent=1 // pred_region
      _
    $region33: #{decoder_layer.11} parent=1 // pred_fallthru
      _
    %329 = vsyncpa [#allocation4], 1

// kernel: decoder_layer.14
$region0: #{decoder_layer.14}
  #allocation0 [shape = 'u32[]', space=smem, size = 0x4, offset = 0x4, fixed_abs, tag = 'smem constant byte address 0x4 - core index']
  #allocation1 [shape = 'u32[72,128]{1,0:T(1,128)}', space=vmem, size = 0x9000, scoped, tag = 'internal scratch']
  #allocation2 [shape = 'f32[16,256]{1,0:T(8,128)}', space=vmem, size = 0x4000, scoped, tag = 'scratch operand']
  %s0 = inlined_call_operand.vmem [shape: bf16[16,256], index: 0, kind: input, shape index: {}]
  %s1 = inlined_call_operand.hbm [shape: bf16[256,256], index: 1, kind: input, shape index: {}]
  %s2 = inlined_call_operand.vmem [shape: f32[1,256], index: 2, kind: input, shape index: {}]
  %s3 = inlined_call_operand.vmem [shape: f32[16,256], index: 3, kind: input, shape index: {}]
  %s4 = inlined_call_operand.vmem [shape: f32[1,256], index: 4, kind: input, shape index: {}]
  %s5 = inlined_call_operand.vmem [shape: f32[1,256], index: 5, kind: input, shape index: {}]
  %s6 = inlined_call_operand.vmem [shape: f32[16,256], index: 6, kind: output, shape index: {}]
  %s7 = sld [smem:[#allocation0]]
  $region46: #{decoder_layer.14} parent=0
    _
  %s9 = ssub.s32 1, %s7
  %s10 = scalar_select 0, %s9, %s7
  $region1: #{decoder_layer.14} parent=0
    #allocation3 [shape = 'u8[131072]{0}', space=vmem, size = 0x20000, scoped, tag = 'input window, operand 1, single buffered']
    #allocation4 [shape = 's32[1]{0}', space=sflag, size = 0x4, scoped, tag = 'scoped memory for decoder_layer.14']
    %11 = vsyncpa [#allocation4], 0
    // Predicated region
    $region2: #{decoder_layer.14} parent=1 // pred_check
      _
    $region3: #{decoder_layer.14} parent=1 // pred_check_branch
      %13 = sbr.rel (0) target = $region5
    $region4: #{decoder_layer.14} parent=1 // pred_region
      _
    $region5: #{decoder_layer.14} parent=1 // pred_fallthru
      _
    // Predicated region
    $region6: #{decoder_layer.14} parent=1 // pred_check
      _
    $region7: #{decoder_layer.14} parent=1 // pred_check_branch
      %15 = sbr.rel (0) target = $region9
    $region8: #{decoder_layer.14} parent=1 // pred_region
      %17 = vsyncadd [#allocation4], 0
      %s18 = sshll.u32 %s1, 4
      %s19 = int_to_ptr.hbm [resolvable:$true] %s18
      %s20 = sshll.u32 [#allocation3], 4
      %s21 = int_to_ptr.vmem [resolvable:$true] %s20
      %26 = dma.hbm_to_vmem [thread:$0]  %s19, 4096, %s21, [#allocation4], 128, 128, 8
    $region9: #{decoder_layer.14} parent=1 // pred_fallthru
      _
    // Predicated region
    $region10: #{decoder_layer.14} parent=1 // pred_check
      _
    $region11: #{decoder_layer.14} parent=1 // pred_check_branch
      %28 = sbr.rel (0) target = $region13
    $region12: #{decoder_layer.14} parent=1 // pred_region
      _
    $region13: #{decoder_layer.14} parent=1 // pred_fallthru
      _
    // Predicated region
    $region14: #{decoder_layer.14} parent=1 // pred_check
      _
    $region15: #{decoder_layer.14} parent=1 // pred_check_branch
      %30 = sbr.rel (0) target = $region17
    $region16: #{decoder_layer.14} parent=1 // pred_region
      _
    $region17: #{decoder_layer.14} parent=1 // pred_fallthru
      _
    // Predicated region
    $region18: #{decoder_layer.14} parent=1 // pred_check
      _
    $region19: #{decoder_layer.14} parent=1 // pred_check_branch
      %32 = sbr.rel (0) target = $region21
    $region20: #{decoder_layer.14} parent=1 // pred_region
      _
    $region21: #{decoder_layer.14} parent=1 // pred_fallthru
      _
    // Predicated region
    $region22: #{decoder_layer.14} parent=1 // pred_check
      _
    $region23: #{decoder_layer.14} parent=1 // pred_check_branch
      %34 = sbr.rel (0) target = $region25
    $region24: #{decoder_layer.14} parent=1 // pred_region
      _
    $region25: #{decoder_layer.14} parent=1 // pred_fallthru
      _
    // Predicated region
    $region26: #{decoder_layer.14} parent=1 // pred_check
      _
    $region27: #{decoder_layer.14} parent=1 // pred_check_branch
      %36 = sbr.rel (0) target = $region29
    $region28: #{decoder_layer.14} parent=1 // pred_region
      %38 = dma.done [#allocation4], 4096
    $region29: #{decoder_layer.14} parent=1 // pred_fallthru
      _
    %p39 = scmp.eq.s32.totalorder 0, 0
    // Predicated region
    $region30: #{decoder_layer.14} parent=1 // pred_check
      %p40 = pneg %p39
    $region31: #{decoder_layer.14} parent=1 // pred_check_branch
      %42 = sbr.rel (%p40) target = $region33
    $region32: #{decoder_layer.14} parent=1 // pred_region
      %43 = vst [vmem:[#allocation2] sm:$0xff] 0.0
      %44 = vst [vmem:[#allocation2 + $0x8] sm:$0xff] 0.0
      %45 = vst [vmem:[#allocation2 + $0x10] sm:$0xff] 0.0
      %46 = vst [vmem:[#allocation2 + $0x18] sm:$0xff] 0.0
    $region33: #{decoder_layer.14} parent=1 // pred_fallthru
      _
    %v47 = vld [vmem:[#allocation2] sm:$0xff]
    %v48 = vld [vmem:[#allocation2 + $0x8] sm:$0xff]
    %v49 = vld [vmem:[#allocation2 + $0x10] sm:$0xff]
    %v50 = vld [vmem:[#allocation2 + $0x18] sm:$0xff]
    %v51 = vld [vmem:[%s0] sm:$0xff]
    %v52 = vld [vmem:[%s0 + $0x8] sm:$0xff]
    %v53 = vld [vmem:[#allocation3] sm:$0xff]
    %v54 = vld [vmem:[#allocation3 + $0x8] sm:$0xff]
    %v55 = vld [vmem:[#allocation3 + $0x10] sm:$0xff]
    %v56 = vld [vmem:[#allocation3 + $0x18] sm:$0xff]
    %v57 = vld [vmem:[#allocation3 + $0x20] sm:$0xff]
    %v58 = vld [vmem:[#allocation3 + $0x28] sm:$0xff]
    %v59 = vld [vmem:[#allocation3 + $0x30] sm:$0xff]
    %v60 = vld [vmem:[#allocation3 + $0x38] sm:$0xff]
    %v61 = vld [vmem:[#allocation3 + $0x40] sm:$0xff]
    %v62 = vld [vmem:[#allocation3 + $0x48] sm:$0xff]
    %v63 = vld [vmem:[#allocation3 + $0x50] sm:$0xff]
    %v64 = vld [vmem:[#allocation3 + $0x58] sm:$0xff]
    %v65 = vld [vmem:[#allocation3 + $0x60] sm:$0xff]
    %v66 = vld [vmem:[#allocation3 + $0x68] sm:$0xff]
    %v67 = vld [vmem:[#allocation3 + $0x70] sm:$0xff]
    %v68 = vld [vmem:[#allocation3 + $0x78] sm:$0xff]
    %v69 = vld [vmem:[#allocation3 + $0x80] sm:$0xff]
    %v70 = vld [vmem:[#allocation3 + $0x88] sm:$0xff]
    %v71 = vld [vmem:[#allocation3 + $0x90] sm:$0xff]
    %v72 = vld [vmem:[#allocation3 + $0x98] sm:$0xff]
    %v73 = vld [vmem:[#allocation3 + $0xa0] sm:$0xff]
    %v74 = vld [vmem:[#allocation3 + $0xa8] sm:$0xff]
    %v75 = vld [vmem:[#allocation3 + $0xb0] sm:$0xff]
    %v76 = vld [vmem:[#allocation3 + $0xb8] sm:$0xff]
    %v77 = vld [vmem:[#allocation3 + $0xc0] sm:$0xff]
    %v78 = vld [vmem:[#allocation3 + $0xc8] sm:$0xff]
    %v79 = vld [vmem:[#allocation3 + $0xd0] sm:$0xff]
    %v80 = vld [vmem:[#allocation3 + $0xd8] sm:$0xff]
    %v81 = vld [vmem:[#allocation3 + $0xe0] sm:$0xff]
    %v82 = vld [vmem:[#allocation3 + $0xe8] sm:$0xff]
    %v83 = vld [vmem:[#allocation3 + $0xf0] sm:$0xff]
    %v84 = vld [vmem:[#allocation3 + $0xf8] sm:$0xff]
    %v87 = vunpack.c.l.b16 %v51
    %v88 = vunpack.c.h.b16 %v51
    %v89 = vunpack.c.l.b16 %v52
    %v90 = vunpack.c.h.b16 %v52
    %v91 = vpack.c.b16 %v89, %v87
    %v92 = vpack.c.b16 %v90, %v88
    %v127 = vunpack.c.l.b16 %v53
    %v128 = vunpack.c.h.b16 %v53
    %v129 = vunpack.c.l.b16 %v54
    %v130 = vunpack.c.h.b16 %v54
    %v131 = vunpack.c.l.b16 %v55
    %v132 = vunpack.c.h.b16 %v55
    %v133 = vunpack.c.l.b16 %v56
    %v134 = vunpack.c.h.b16 %v56
    %v135 = vunpack.c.l.b16 %v57
    %v136 = vunpack.c.h.b16 %v57
    %v137 = vunpack.c.l.b16 %v58
    %v138 = vunpack.c.h.b16 %v58
    %v139 = vunpack.c.l.b16 %v59
    %v140 = vunpack.c.h.b16 %v59
    %v141 = vunpack.c.l.b16 %v60
    %v142 = vunpack.c.h.b16 %v60
    %v143 = vunpack.c.l.b16 %v61
    %v144 = vunpack.c.h.b16 %v61
    %v145 = vunpack.c.l.b16 %v62
    %v146 = vunpack.c.h.b16 %v62
    %v147 = vunpack.c.l.b16 %v63
    %v148 = vunpack.c.h.b16 %v63
    %v149 = vunpack.c.l.b16 %v64
    %v150 = vunpack.c.h.b16 %v64
    %v151 = vunpack.c.l.b16 %v65
    %v152 = vunpack.c.h.b16 %v65
    %v153 = vunpack.c.l.b16 %v66
    %v154 = vunpack.c.h.b16 %v66
    %v155 = vunpack.c.l.b16 %v67
    %v156 = vunpack.c.h.b16 %v67
    %v157 = vunpack.c.l.b16 %v68
    %v158 = vunpack.c.h.b16 %v68
    %v159 = vunpack.c.l.b16 %v69
    %v160 = vunpack.c.h.b16 %v69
    %v161 = vunpack.c.l.b16 %v70
    %v162 = vunpack.c.h.b16 %v70
    %v163 = vunpack.c.l.b16 %v71
    %v164 = vunpack.c.h.b16 %v71
    %v165 = vunpack.c.l.b16 %v72
    %v166 = vunpack.c.h.b16 %v72
    %v167 = vunpack.c.l.b16 %v73
    %v168 = vunpack.c.h.b16 %v73
    %v169 = vunpack.c.l.b16 %v74
    %v170 = vunpack.c.h.b16 %v74
    %v171 = vunpack.c.l.b16 %v75
    %v172 = vunpack.c.h.b16 %v75
    %v173 = vunpack.c.l.b16 %v76
    %v174 = vunpack.c.h.b16 %v76
    %v175 = vunpack.c.l.b16 %v77
    %v176 = vunpack.c.h.b16 %v77
    %v177 = vunpack.c.l.b16 %v78
    %v178 = vunpack.c.h.b16 %v78
    %v179 = vunpack.c.l.b16 %v79
    %v180 = vunpack.c.h.b16 %v79
    %v181 = vunpack.c.l.b16 %v80
    %v182 = vunpack.c.h.b16 %v80
    %v183 = vunpack.c.l.b16 %v81
    %v184 = vunpack.c.h.b16 %v81
    %v185 = vunpack.c.l.b16 %v82
    %v186 = vunpack.c.h.b16 %v82
    %v187 = vunpack.c.l.b16 %v83
    %v188 = vunpack.c.h.b16 %v83
    %v189 = vunpack.c.l.b16 %v84
    %v190 = vunpack.c.h.b16 %v84
    %v191 = vpack.c.b16 %v129, %v127
    %v192 = vpack.c.b16 %v130, %v128
    %v193 = vpack.c.b16 %v133, %v131
    %v194 = vpack.c.b16 %v134, %v132
    %v195 = vpack.c.b16 %v137, %v135
    %v196 = vpack.c.b16 %v138, %v136
    %v197 = vpack.c.b16 %v141, %v139
    %v198 = vpack.c.b16 %v142, %v140
    %v199 = vpack.c.b16 %v145, %v143
    %v200 = vpack.c.b16 %v146, %v144
    %v201 = vpack.c.b16 %v149, %v147
    %v202 = vpack.c.b16 %v150, %v148
    %v203 = vpack.c.b16 %v153, %v151
    %v204 = vpack.c.b16 %v154, %v152
    %v205 = vpack.c.b16 %v157, %v155
    %v206 = vpack.c.b16 %v158, %v156
    %v207 = vpack.c.b16 %v161, %v159
    %v208 = vpack.c.b16 %v162, %v160
    %v209 = vpack.c.b16 %v165, %v163
    %v210 = vpack.c.b16 %v166, %v164
    %v211 = vpack.c.b16 %v169, %v167
    %v212 = vpack.c.b16 %v170, %v168
    %v213 = vpack.c.b16 %v173, %v171
    %v214 = vpack.c.b16 %v174, %v172
    %v215 = vpack.c.b16 %v177, %v175
    %v216 = vpack.c.b16 %v178, %v176
    %v217 = vpack.c.b16 %v181, %v179
    %v218 = vpack.c.b16 %v182, %v180
    %v219 = vpack.c.b16 %v185, %v183
    %v220 = vpack.c.b16 %v186, %v184
    %v221 = vpack.c.b16 %v189, %v187
    %v222 = vpack.c.b16 %v190, %v188
    %255 = vmatpush.bf16.msra.mxu0 %v205
    %256 = vmatpush.bf16.msra.mxu0 %v203
    %257 = vmatpush.bf16.msra.mxu0 %v201
    %258 = vmatpush.bf16.msra.mxu0 %v199
    %259 = vmatpush.bf16.msra.mxu0 %v197
    %260 = vmatpush.bf16.msra.mxu0 %v195
    %261 = vmatpush.bf16.msra.mxu0 %v193
    %262 = vmatpush.bf16.msra.mxu0 %v191
    %263 = vmatmul.bf16.gmra.mxu0 %v91
    %v264 = vpop.f32.mrf.mxu0
    %v265 = vadd.f32 0.0, %v264
    %v266 = vpop.f32.mrf.mxu0
    %v267 = vadd.f32 0.0, %v266
    %268 = vdwg.mxu0
    %269 = vmatpush.bf16.msra.mxu0 %v221
    %270 = vmatpush.bf16.msra.mxu0 %v219
    %271 = vmatpush.bf16.msra.mxu0 %v217
    %272 = vmatpush.bf16.msra.mxu0 %v215
    %273 = vmatpush.bf16.msra.mxu0 %v213
    %274 = vmatpush.bf16.msra.mxu0 %v211
    %275 = vmatpush.bf16.msra.mxu0 %v209
    %276 = vmatpush.bf16.msra.mxu0 %v207
    %277 = vmatmul.bf16.gmra.mxu0 %v92
    %v278 = vpop.f32.mrf.mxu0
    %v279 = vadd.f32 %v265, %v278
    %v280 = vpop.f32.mrf.mxu0
    %v281 = vadd.f32 %v267, %v280
    %282 = vdwg.mxu0
    %283 = vmatpush.bf16.msra.mxu0 %v206
    %284 = vmatpush.bf16.msra.mxu0 %v204
    %285 = vmatpush.bf16.msra.mxu0 %v202
    %286 = vmatpush.bf16.msra.mxu0 %v200
    %287 = vmatpush.bf16.msra.mxu0 %v198
    %288 = vmatpush.bf16.msra.mxu0 %v196
    %289 = vmatpush.bf16.msra.mxu0 %v194
    %290 = vmatpush.bf16.msra.mxu0 %v192
    %291 = vmatmul.bf16.gmra.mxu0 %v91
    %v292 = vpop.f32.mrf.mxu0
    %v293 = vadd.f32 0.0, %v292
    %v294 = vpop.f32.mrf.mxu0
    %v295 = vadd.f32 0.0, %v294
    %296 = vdwg.mxu0
    %297 = vmatpush.bf16.msra.mxu0 %v222
    %298 = vmatpush.bf16.msra.mxu0 %v220
    %299 = vmatpush.bf16.msra.mxu0 %v218
    %300 = vmatpush.bf16.msra.mxu0 %v216
    %301 = vmatpush.bf16.msra.mxu0 %v214
    %302 = vmatpush.bf16.msra.mxu0 %v212
    %303 = vmatpush.bf16.msra.mxu0 %v210
    %304 = vmatpush.bf16.msra.mxu0 %v208
    %305 = vmatmul.bf16.gmra.mxu0 %v92
    %v306 = vpop.f32.mrf.mxu0
    %v307 = vadd.f32 %v293, %v306
    %v308 = vpop.f32.mrf.mxu0
    %v309 = vadd.f32 %v295, %v308
    %310 = vdwg.mxu0
    %v311 = vadd.f32 %v47, %v279
    %v312 = vadd.f32 %v48, %v307
    %v313 = vadd.f32 %v49, %v281
    %v314 = vadd.f32 %v50, %v309
    %315 = vst [vmem:[#allocation2] sm:$0xff] %v311
    %316 = vst [vmem:[#allocation2 + $0x8] sm:$0xff] %v312
    %317 = vst [vmem:[#allocation2 + $0x10] sm:$0xff] %v313
    %318 = vst [vmem:[#allocation2 + $0x18] sm:$0xff] %v314
    // Predicated region
    $region34: #{decoder_layer.14} parent=1 // pred_check
      %p319 = pneg %p39
    $region35: #{decoder_layer.14} parent=1 // pred_check_branch
      %321 = sbr.rel (%p319) target = $region37
    $region36: #{decoder_layer.14} parent=1 // pred_region
      %v322 = vld [vmem:[#allocation2] sm:$0xff]
      %v323 = vld [vmem:[#allocation2 + $0x8] sm:$0xff]
      %v324 = vld [vmem:[#allocation2 + $0x10] sm:$0xff]
      %v325 = vld [vmem:[#allocation2 + $0x18] sm:$0xff]
      %v326 = vld [vmem:[%s2] sm:$0x3]
      %v328 = vperm.slane %v326, 0
      %v329 = vperm.slane %v326, 1
      %v332 = vadd.f32 %v322, %v328
      %v333 = vadd.f32 %v323, %v329
      %v334 = vadd.f32 %v324, %v328
      %v335 = vadd.f32 %v325, %v329
      %v336 = vld [vmem:[%s3] sm:$0xff]
      %v337 = vld [vmem:[%s3 + $0x8] sm:$0xff]
      %v338 = vld [vmem:[%s3 + $0x10] sm:$0xff]
      %v339 = vld [vmem:[%s3 + $0x18] sm:$0xff]
      %v340 = vadd.f32 %v332, %v336
      %v341 = vadd.f32 %v333, %v337
      %v342 = vadd.f32 %v334, %v338
      %v343 = vadd.f32 %v335, %v339
      %v344 = vld [vmem:[%s4] sm:$0x3]
      %v345 = vld [vmem:[%s5] sm:$0x3]
      %v346 = vadd.f32 %v340, %v341
      %347 = vadd.xlane.f32.xlu0 %v346
      %v348 = vpop.xlane.xlu0 %347
      %v349 = vadd.f32 %v342, %v343
      %350 = vadd.xlane.f32.xlu0 %v349
      %v351 = vpop.xlane.xlu0 %350
      %v352 = vrcp.pop 256.0
      %v353 = vmul.f32 256.0, %v352
      %v354 = vsub.f32 1.0, %v353
      %v355 = vmul.f32 %v352, %v354
      %v356 = vadd.f32 %v352, %v355
      %vm357 = vweird.f32 %v352
      %v358 = vsel %vm357, %v352, %v356
      %v359 = vmul.f32 %v348, %v358
      %v360 = vmul.f32 %v351, %v358
      %v361 = vmul.f32 %v340, %v340
      %v362 = vmul.f32 %v341, %v341
      %v363 = vmul.f32 %v342, %v342
      %v364 = vmul.f32 %v343, %v343
      %v365 = vadd.f32 %v361, %v362
      %366 = vadd.xlane.f32.xlu0 %v365
      %v367 = vpop.xlane.xlu0 %366
      %v368 = vadd.f32 %v363, %v364
      %369 = vadd.xlane.f32.xlu0 %v368
      %v370 = vpop.xlane.xlu0 %369
      %v371 = vmul.f32 %v367, %v358
      %v372 = vmul.f32 %v370, %v358
      %v373 = vmul.f32 %v359, %v359
      %v374 = vmul.f32 %v360, %v360
      %v375 = vsub.f32 %v371, %v373
      %v376 = vsub.f32 %v372, %v374
      %v377 = vadd.f32 %v375, 1e-05
      %v378 = vadd.f32 %v376, 1e-05
      %v379 = vrsqrt.pop %v377
      %v380 = vmul.f32 %v379, %v377
      %v381 = vmul.f32 %v380, %v379
      %v382 = vmul.f32 0.5, %v381
      %v383 = vsub.f32 1.5, %v382
      %v384 = vmul.f32 %v379, %v383
      %vm385 = vweird.f32 %v377
      %vm386 = vweird.f32 %v379
      %vm387 = vmor %vm385, %vm386
      %v388 = vsel %vm387, %v379, %v384
      %v389 = vrsqrt.pop %v378
      %v390 = vmul.f32 %v389, %v378
      %v391 = vmul.f32 %v390, %v389
      %v392 = vmul.f32 0.5, %v391
      %v393 = vsub.f32 1.5, %v392
      %v394 = vmul.f32 %v389, %v393
      %vm395 = vweird.f32 %v378
      %vm396 = vweird.f32 %v389
      %vm397 = vmor %vm395, %vm396
      %v398 = vsel %vm397, %v389, %v394
      %v399 = vsub.f32 %v340, %v359
      %v400 = vsub.f32 %v341, %v359
      %v401 = vsub.f32 %v342, %v360
      %v402 = vsub.f32 %v343, %v360
      %v403 = vmul.f32 %v399, %v388
      %v404 = vmul.f32 %v400, %v388
      %v405 = vmul.f32 %v401, %v398
      %v406 = vmul.f32 %v402, %v398
      %v408 = vperm.slane %v344, 0
      %v409 = vperm.slane %v344, 1
      %v412 = vmul.f32 %v403, %v408
      %v413 = vmul.f32 %v404, %v409
      %v414 = vmul.f32 %v405, %v408
      %v415 = vmul.f32 %v406, %v409
      %v417 = vperm.slane %v345, 0
      %v418 = vperm.slane %v345, 1
      %v421 = vadd.f32 %v412, %v417
      %v422 = vadd.f32 %v413, %v418
      %v423 = vadd.f32 %v414, %v417
      %v424 = vadd.f32 %v415, %v418
      %425 = vst [vmem:[%s6] sm:$0xff] %v421
      %426 = vst [vmem:[%s6 + $0x8] sm:$0xff] %v422
      %427 = vst [vmem:[%s6 + $0x10] sm:$0xff] %v423
      %428 = vst [vmem:[%s6 + $0x18] sm:$0xff] %v424
    $region37: #{decoder_layer.14} parent=1 // pred_fallthru
      _
    // Predicated region
    $region38: #{decoder_layer.14} parent=1 // pred_check
      _
    $region39: #{decoder_layer.14} parent=1 // pred_check_branch
      %430 = sbr.rel (0) target = $region41
    $region40: #{decoder_layer.14} parent=1 // pred_region
      _
    $region41: #{decoder_layer.14} parent=1 // pred_fallthru
      _
    // Predicated region
    $region42: #{decoder_layer.14} parent=1 // pred_check
      _
    $region43: #{decoder_layer.14} parent=1 // pred_check_branch
      %432 = sbr.rel (0) target = $region45
    $region44: #{decoder_layer.14} parent=1 // pred_region
      _
    $region45: #{decoder_layer.14} parent=1 // pred_fallthru
      _
    %433 = vsyncpa [#allocation4], 1

// kernel: decoder_layer.15
$region0: #{decoder_layer.15}
  #allocation0 [shape = 'u32[]', space=smem, size = 0x4, offset = 0x4, fixed_abs, tag = 'smem constant byte address 0x4 - core index']
  #allocation1 [shape = 'u32[72,128]{1,0:T(1,128)}', space=vmem, size = 0x9000, scoped, tag = 'internal scratch']
  #allocation2 [shape = 'f32[16,256]{1,0:T(8,128)}', space=vmem, size = 0x4000, scoped, tag = 'scratch operand']
  %s0 = inlined_call_operand.vmem [shape: f32[16,256], index: 0, kind: input, shape index: {}]
  %s1 = inlined_call_operand.hbm [shape: bf16[256,1024], index: 1, kind: input, shape index: {}]
  %s2 = inlined_call_operand.vmem [shape: f32[1,1024], index: 2, kind: input, shape index: {}]
  %s3 = inlined_call_operand.hbm [shape: bf16[1024,256], index: 3, kind: input, shape index: {}]
  %s4 = inlined_call_operand.vmem [shape: f32[1,256], index: 4, kind: input, shape index: {}]
  %s5 = inlined_call_operand.vmem [shape: f32[1,256], index: 5, kind: input, shape index: {}]
  %s6 = inlined_call_operand.vmem [shape: f32[1,256], index: 6, kind: input, shape index: {}]
  %s7 = inlined_call_operand.hbm [shape: f32[16,256], index: 7, kind: output, shape index: {}]
  %s8 = sld [smem:[#allocation0]]
  $region77: #{decoder_layer.15} parent=0
    _
  %s10 = ssub.s32 1, %s8
  %s11 = scalar_select 0, %s10, %s8
  $region1: #{decoder_layer.15} parent=0
    #allocation3 [shape = 'u8[262144]{0}', space=vmem, size = 0x40000, scoped, tag = 'input window, operand 1']
    #allocation4 [shape = 's32[2]{0}', space=sflag, size = 0x8, scoped, tag = 'scoped memory for decoder_layer.15']
    #allocation5 [shape = 's32[2]{0}', space=sflag, size = 0x8, scoped, tag = 'scoped memory for decoder_layer.15']
    #allocation6 [shape = 'u8[262144]{0}', space=vmem, size = 0x40000, scoped, tag = 'input window, operand 3']
    #allocation7 [shape = 's32[2]{0}', space=sflag, size = 0x8, scoped, tag = 'scoped memory for decoder_layer.15']
    #allocation8 [shape = 'u8[16384]{0}', space=vmem, size = 0x4000, scoped, tag = 'output window, operand 0, single buffered']
    %12 = vsyncpa [#allocation4], 0
    %s13 = scalar_lea.sflag [#allocation4], 1
    %14 = vsyncpa %s13, 0
    %15 = vsyncpa [#allocation7], 0
    %s16 = scalar_lea.sflag [#allocation7], 1
    %17 = vsyncpa %s16, 0
    %18 = vsyncpa [#allocation5], 0
    loop: start=0, step=1, limit=6
    $region2: #{decoder_layer.15} parent=1 // loop_pre_header
      _
    $region3: #{decoder_layer.15} parent=1 // loop_header
      %s20 = sphi 0, %s24
      %p21 = scmp.ge.s32.totalorder %s20, 6
      %s27 = sphi 0, %s39
      %s28 = sphi 0, %s35
      %s29 = sphi 0, %s27
      %s30 = sphi 0, %s28
      %s31 = sphi 0, %s29
      %s32 = sphi 0, %s30
      %s42 = sphi 0, %s44
      %s45 = sphi 0, %s42
      %s46 = sphi 0, %s45
      %s62 = sphi 0, %s46
      %s68 = sphi 0, %s70
      %s71 = sphi 0, %s68
      %s72 = sphi 0, %s71
      %s88 = sphi 0, %s72
      %s94 = sphi 0, %s96
      %s97 = sphi 0, %s94
      %s98 = sphi 0, %s97
      %s114 = sphi 0, %s98
      %s120 = sphi 0, %s122
      %s123 = sphi 0, %s120
      %s124 = sphi 0, %s123
      %s140 = sphi 0, %s124
      %s144 = sphi 0, %s144
      %s146 = sphi 0, %s144
      %s147 = sphi 0, %s146
      %s161 = sphi 0, %s147
      %s165 = sphi 0, %s165
      %s167 = sphi 0, %s165
      %s168 = sphi 0, %s167
      %s182 = sphi 0, %s168
      %s186 = sphi 0, %s186
      %s188 = sphi 0, %s186
      %s189 = sphi 0, %s188
      %s203 = sphi 0, %s189
      %s209 = sphi 0, %s211
      %s212 = sphi 0, %s209
      %s213 = sphi 0, %s212
      %s229 = sphi 0, %s213
    $region4: #{decoder_layer.15} parent=1 // loop_header_branch
      %23 = sbr.rel (%p21) target = $region8
    $region5: #{decoder_layer.15} parent=1 // loop_body
      %s25 = ssub.s32 %s20, 1
      %s26 = ssub.s32 %s20, 2
      %s33 = sadd.s32 1, %s28
      %p34 = scmp.ge.s32.totalorder %s33, 4
      %s35 = scalar_select %p34, 0, %s33
      %s36 = sadd.s32 1, %s27
      %s37 = scalar_select %p34, %s36, %s27
      %p38 = scmp.ge.s32.totalorder %s37, 1
      %s39 = scalar_select %p38, 0, %s37
      %s40 = ssub.s32 %s27, %s39
      %p41 = scmp.eq.s32.totalorder %s40, 0
      %s43 = sadd.s32 %s42, 1
      %s44 = scalar_select %p41, %s42, %s43
      %p47 = pneg %p41
      %p48 = scmp.eq.s32.totalorder %s20, 3
      %p49 = por %p47, %p48
      %p50 = scmp.ne.s32.totalorder %s42, %s45
      %p51 = scmp.eq.s32.totalorder %s20, 0
      %p52 = por %p50, %p51
      %p53 = scmp.ne.s32.totalorder %s42, %s45
      %p54 = scmp.eq.s32.totalorder %s25, 3
      %p55 = por %p53, %p54
      %p56 = scmp.ne.s32.totalorder %s45, %s46
      %p57 = scmp.eq.s32.totalorder %s25, 0
      %p58 = por %p56, %p57
      %p59 = scmp.ne.s32.totalorder %s45, %s46
      %p60 = scmp.eq.s32.totalorder %s26, 3
      %p61 = por %p59, %p60
      %p63 = scmp.ne.s32.totalorder %s46, %s62
      %p64 = scmp.eq.s32.totalorder %s26, 0
      %p65 = por %p63, %p64
      %s66 = ssub.s32 %s28, %s35
      %p67 = scmp.eq.s32.totalorder %s66, 0
      %s69 = sadd.s32 %s68, 1
      %s70 = scalar_select %p67, %s68, %s69
      %p73 = pneg %p67
      %p74 = scmp.eq.s32.totalorder %s20, 3
      %p75 = por %p73, %p74
      %p76 = scmp.ne.s32.totalorder %s68, %s71
      %p77 = scmp.eq.s32.totalorder %s20, 0
      %p78 = por %p76, %p77
      %p79 = scmp.ne.s32.totalorder %s68, %s71
      %p80 = scmp.eq.s32.totalorder %s25, 3
      %p81 = por %p79, %p80
      %p82 = scmp.ne.s32.totalorder %s71, %s72
      %p83 = scmp.eq.s32.totalorder %s25, 0
      %p84 = por %p82, %p83
      %p85 = scmp.ne.s32.totalorder %s71, %s72
      %p86 = scmp.eq.s32.totalorder %s26, 3
      %p87 = por %p85, %p86
      %p89 = scmp.ne.s32.totalorder %s72, %s88
      %p90 = scmp.eq.s32.totalorder %s26, 0
      %p91 = por %p89, %p90
      %s92 = ssub.s32 %s28, %s35
      %p93 = scmp.eq.s32.totalorder %s92, 0
      %s95 = sadd.s32 %s94, 1
      %s96 = scalar_select %p93, %s94, %s95
      %p99 = pneg %p93
      %p100 = scmp.eq.s32.totalorder %s20, 3
      %p101 = por %p99, %p100
      %p102 = scmp.ne.s32.totalorder %s94, %s97
      %p103 = scmp.eq.s32.totalorder %s20, 0
      %p104 = por %p102, %p103
      %p105 = scmp.ne.s32.totalorder %s94, %s97
      %p106 = scmp.eq.s32.totalorder %s25, 3
      %p107 = por %p105, %p106
      %p108 = scmp.ne.s32.totalorder %s97, %s98
      %p109 = scmp.eq.s32.totalorder %s25, 0
      %p110 = por %p108, %p109
      %p111 = scmp.ne.s32.totalorder %s97, %s98
      %p112 = scmp.eq.s32.totalorder %s26, 3
      %p113 = por %p111, %p112
      %p115 = scmp.ne.s32.totalorder %s98, %s114
      %p116 = scmp.eq.s32.totalorder %s26, 0
      %p117 = por %p115, %p116
      %s118 = ssub.s32 %s28, %s35
      %p119 = scmp.eq.s32.totalorder %s118, 0
      %s121 = sadd.s32 %s120, 1
      %s122 = scalar_select %p119, %s120, %s121
      %p125 = pneg %p119
      %p126 = scmp.eq.s32.totalorder %s20, 3
      %p127 = por %p125, %p126
      %p128 = scmp.ne.s32.totalorder %s120, %s123
      %p129 = scmp.eq.s32.totalorder %s20, 0
      %p130 = por %p128, %p129
      %p131 = scmp.ne.s32.totalorder %s120, %s123
      %p132 = scmp.eq.s32.totalorder %s25, 3
      %p133 = por %p131, %p132
      %p134 = scmp.ne.s32.totalorder %s123, %s124
      %p135 = scmp.eq.s32.totalorder %s25, 0
      %p136 = por %p134, %p135
      %p137 = scmp.ne.s32.totalorder %s123, %s124
      %p138 = scmp.eq.s32.totalorder %s26, 3
      %p139 = por %p137, %p138
      %p141 = scmp.ne.s32.totalorder %s124, %s140
      %p142 = scmp.eq.s32.totalorder %s26, 0
      %p143 = por %p141, %p142
      %s145 = sadd.s32 %s144, 1
      %p148 = scmp.eq.s32.totalorder %s20, 3
      %p149 = scmp.ne.s32.totalorder %s144, %s146
      %p150 = scmp.eq.s32.totalorder %s20, 0
      %p151 = por %p149, %p150
      %p152 = scmp.ne.s32.totalorder %s144, %s146
      %p153 = scmp.eq.s32.totalorder %s25, 3
      %p154 = por %p152, %p153
      %p155 = scmp.ne.s32.totalorder %s146, %s147
      %p156 = scmp.eq.s32.totalorder %s25, 0
      %p157 = por %p155, %p156
      %p158 = scmp.ne.s32.totalorder %s146, %s147
      %p159 = scmp.eq.s32.totalorder %s26, 3
      %p160 = por %p158, %p159
      %p162 = scmp.ne.s32.totalorder %s147, %s161
      %p163 = scmp.eq.s32.totalorder %s26, 0
      %p164 = por %p162, %p163
      %s166 = sadd.s32 %s165, 1
      %p169 = scmp.eq.s32.totalorder %s20, 3
      %p170 = scmp.ne.s32.totalorder %s165, %s167
      %p171 = scmp.eq.s32.totalorder %s20, 0
      %p172 = por %p170, %p171
      %p173 = scmp.ne.s32.totalorder %s165, %s167
      %p174 = scmp.eq.s32.totalorder %s25, 3
      %p175 = por %p173, %p174
      %p176 = scmp.ne.s32.totalorder %s167, %s168
      %p177 = scmp.eq.s32.totalorder %s25, 0
      %p178 = por %p176, %p177
      %p179 = scmp.ne.s32.totalorder %s167, %s168
      %p180 = scmp.eq.s32.totalorder %s26, 3
      %p181 = por %p179, %p180
      %p183 = scmp.ne.s32.totalorder %s168, %s182
      %p184 = scmp.eq.s32.totalorder %s26, 0
      %p185 = por %p183, %p184
      %s187 = sadd.s32 %s186, 1
      %p190 = scmp.eq.s32.totalorder %s20, 3
      %p191 = scmp.ne.s32.totalorder %s186, %s188
      %p192 = scmp.eq.s32.totalorder %s20, 0
      %p193 = por %p191, %p192
      %p194 = scmp.ne.s32.totalorder %s186, %s188
      %p195 = scmp.eq.s32.totalorder %s25, 3
      %p196 = por %p194, %p195
      %p197 = scmp.ne.s32.totalorder %s188, %s189
      %p198 = scmp.eq.s32.totalorder %s25, 0
      %p199 = por %p197, %p198
      %p200 = scmp.ne.s32.totalorder %s188, %s189
      %p201 = scmp.eq.s32.totalorder %s26, 3
      %p202 = por %p200, %p201
      %p204 = scmp.ne.s32.totalorder %s189, %s203
      %p205 = scmp.eq.s32.totalorder %s26, 0
      %p206 = por %p204, %p205
      %s207 = ssub.s32 %s27, %s39
      %p208 = scmp.eq.s32.totalorder %s207, 0
      %s210 = sadd.s32 %s209, 1
      %s211 = scalar_select %p208, %s209, %s210
      %p214 = pneg %p208
      %p215 = scmp.eq.s32.totalorder %s20, 3
      %p216 = por %p214, %p215
      %p217 = scmp.ne.s32.totalorder %s209, %s212
      %p218 = scmp.eq.s32.totalorder %s20, 0
      %p219 = por %p217, %p218
      %p220 = scmp.ne.s32.totalorder %s209, %s212
      %p221 = scmp.eq.s32.totalorder %s25, 3
      %p222 = por %p220, %p221
      %p223 = scmp.ne.s32.totalorder %s212, %s213
      %p224 = scmp.eq.s32.totalorder %s25, 0
      %p225 = por %p223, %p224
      %p226 = scmp.ne.s32.totalorder %s212, %s213
      %p227 = scmp.eq.s32.totalorder %s26, 3
      %p228 = por %p226, %p227
      %p230 = scmp.ne.s32.totalorder %s213, %s229
      %p231 = scmp.eq.s32.totalorder %s26, 0
      %p232 = por %p230, %p231
      %p233 = scmp.le.s32.totalorder 1, %s20
      %p234 = scmp.lt.s32.totalorder %s20, 5
      %p235 = pnand %p233, %p234
      %p236 = pneg %p235
      // Predicated region
      $region9: #{decoder_layer.15} parent=5 // pred_check
        _
      $region10: #{decoder_layer.15} parent=5 // pred_check_branch
        %238 = sbr.rel (%p235) target = $region12
      $region11: #{decoder_layer.15} parent=5 // pred_region
        %s239 = ssub.s32 %s20, 1
        // Predicated region
        $region13: #{decoder_layer.15} parent=11 // pred_check
          %p240 = pneg %p58
        $region14: #{decoder_layer.15} parent=11 // pred_check_branch
          %242 = sbr.rel (%p240) target = $region16
        $region15: #{decoder_layer.15} parent=11 // pred_region
          %s243 = smul.u32 2, %s29
          %p244 = scmp.lt.s32.totalorder %s243, 1
          %s245 = scalar_select %p244, %s243, 1
          %s246 = smul.addr %s245, 2
          %s247 = smul.addr %s246, 8
          %s248 = scalar_lea.vmem %s0, %s247
          %s249 = smul.u32 2, %s29
        $region16: #{decoder_layer.15} parent=11 // pred_fallthru
          _
        // Predicated region
        $region17: #{decoder_layer.15} parent=11 // pred_check
          %p250 = pneg %p157
        $region18: #{decoder_layer.15} parent=11 // pred_check_branch
          %252 = sbr.rel (%p250) target = $region20
        $region19: #{decoder_layer.15} parent=11 // pred_region
          _
        $region20: #{decoder_layer.15} parent=11 // pred_fallthru
          _
        // Predicated region
        $region21: #{decoder_layer.15} parent=11 // pred_check
          %p253 = pneg %p178
        $region22: #{decoder_layer.15} parent=11 // pred_check_branch
          %255 = sbr.rel (%p253) target = $region24
        $region23: #{decoder_layer.15} parent=11 // pred_region
          _
        $region24: #{decoder_layer.15} parent=11 // pred_fallthru
          _
        // Predicated region
        $region25: #{decoder_layer.15} parent=11 // pred_check
          %p256 = pneg %p199
        $region26: #{decoder_layer.15} parent=11 // pred_check_branch
          %258 = sbr.rel (%p256) target = $region28
        $region27: #{decoder_layer.15} parent=11 // pred_region
          _
        $region28: #{decoder_layer.15} parent=11 // pred_fallthru
          _
      $region12: #{decoder_layer.15} parent=5 // pred_fallthru
        _
      %p259 = scmp.lt.s32.totalorder %s20, 4
      // Predicated region
      $region29: #{decoder_layer.15} parent=5 // pred_check
        %p260 = pneg %p259
      $region30: #{decoder_layer.15} parent=5 // pred_check_branch
        %262 = sbr.rel (%p260) target = $region32
      $region31: #{decoder_layer.15} parent=5 // pred_region
        // Predicated region
        $region33: #{decoder_layer.15} parent=31 // pred_check
          %p263 = pneg %p78
        $region34: #{decoder_layer.15} parent=31 // pred_check_branch
          %265 = sbr.rel (%p263) target = $region36
        $region35: #{decoder_layer.15} parent=31 // pred_region
          %s266 = sand.u32 %s68, 1
          %s267 = scalar_lea.sflag [#allocation4], %s266
          %s268 = sand.u32 %s68, 1
          %s269 = smul.addr %s268, 256
          %s270 = scalar_lea.vmem [#allocation3], %s269
          %s271 = smul.u32 2, %s28
          %273 = vsyncadd %s267, 0
          %s274 = smul.addr %s271, 4
          %s275 = scalar_lea.hbm %s1, %s274
          %s276 = sshll.u32 %s275, 4
          %s277 = int_to_ptr.hbm [resolvable:$true] %s276
          %s278 = sshll.u32 %s270, 4
          %s279 = int_to_ptr.vmem [resolvable:$true] %s278
          %284 = dma.hbm_to_vmem [thread:$0]  %s277, 4096, %s279, %s267, 512, 128, 8
        $region36: #{decoder_layer.15} parent=31 // pred_fallthru
          _
        // Predicated region
        $region37: #{decoder_layer.15} parent=31 // pred_check
          %p285 = pneg %p104
        $region38: #{decoder_layer.15} parent=31 // pred_check_branch
          %287 = sbr.rel (%p285) target = $region40
        $region39: #{decoder_layer.15} parent=31 // pred_region
          %s288 = smul.u32 2, %s28
          %p289 = scmp.lt.s32.totalorder %s288, 7
          %s290 = scalar_select %p289, %s288, 7
          %s291 = scalar_lea.vmem %s2, %s290
          %s292 = smul.u32 2, %s28
        $region40: #{decoder_layer.15} parent=31 // pred_fallthru
          _
        // Predicated region
        $region41: #{decoder_layer.15} parent=31 // pred_check
          %p293 = pneg %p130
        $region42: #{decoder_layer.15} parent=31 // pred_check_branch
          %295 = sbr.rel (%p293) target = $region44
        $region43: #{decoder_layer.15} parent=31 // pred_region
          %s296 = sand.u32 %s120, 1
          %s297 = scalar_lea.sflag [#allocation7], %s296
          %s298 = sand.u32 %s120, 1
          %s299 = smul.addr %s298, 256
          %s300 = scalar_lea.vmem [#allocation6], %s299
          %s301 = smul.u32 32, %s28
          %303 = vsyncadd %s297, 0
          %s304 = smul.addr %s301, 2
          %s305 = smul.addr %s304, 4
          %s306 = scalar_lea.hbm %s3, %s305
          %s307 = sshll.u32 %s306, 4
          %s308 = int_to_ptr.hbm [resolvable:$true] %s307
          %s309 = sshll.u32 %s300, 4
          %s310 = int_to_ptr.vmem [resolvable:$true] %s309
          %315 = dma.hbm_to_vmem [thread:$0]  %s308, 4096, %s310, %s297, 128, 128, 8
        $region44: #{decoder_layer.15} parent=31 // pred_fallthru
          _
      $region32: #{decoder_layer.15} parent=5 // pred_fallthru
        _
      %p316 = scmp.le.s32.totalorder 1, %s20
      %p317 = scmp.lt.s32.totalorder %s20, 5
      %p318 = pnand %p316, %p317
      %p319 = pneg %p318
      // Predicated region
      $region45: #{decoder_layer.15} parent=5 // pred_check
        _
      $region46: #{decoder_layer.15} parent=5 // pred_check_branch
        %321 = sbr.rel (%p318) target = $region48
      $region47: #{decoder_layer.15} parent=5 // pred_region
        %s322 = ssub.s32 %s20, 1
        %s323 = sand.u32 %s71, 1
        %s324 = scalar_lea.sflag [#allocation4], %s323
        %s325 = sand.u32 %s71, 1
        %s326 = smul.addr %s325, 256
        %s327 = scalar_lea.vmem [#allocation3], %s326
        // Predicated region
        $region49: #{decoder_layer.15} parent=47 // pred_check
          %p328 = pneg %p84
        $region50: #{decoder_layer.15} parent=47 // pred_check_branch
          %330 = sbr.rel (%p328) target = $region52
        $region51: #{decoder_layer.15} parent=47 // pred_region
          %332 = dma.done %s324, 4096
        $region52: #{decoder_layer.15} parent=47 // pred_fallthru
          _
        %s333 = sand.u32 %s123, 1
        %s334 = scalar_lea.sflag [#allocation7], %s333
        %s335 = sand.u32 %s123, 1
        %s336 = smul.addr %s335, 256
        %s337 = scalar_lea.vmem [#allocation6], %s336
        // Predicated region
        $region53: #{decoder_layer.15} parent=47 // pred_check
          %p338 = pneg %p136
        $region54: #{decoder_layer.15} parent=47 // pred_check_branch
          %340 = sbr.rel (%p338) target = $region56
        $region55: #{decoder_layer.15} parent=47 // pred_region
          %342 = dma.done %s334, 4096
        $region56: #{decoder_layer.15} parent=47 // pred_fallthru
          _
        %s343 = smul.u32 2, %s29
        %p344 = scmp.lt.s32.totalorder %s343, 1
        %s345 = scalar_select %p344, %s343, 1
        %s346 = smul.addr %s345, 2
        %s347 = smul.addr %s346, 8
        %s348 = scalar_lea.vmem %s0, %s347
        %p349 = pneg %p58
        %p350 = pneg %p55
        %s351 = sand.u32 %s71, 1
        %s352 = scalar_lea.sflag [#allocation4], %s351
        %s353 = sand.u32 %s71, 1
        %s354 = smul.addr %s353, 256
        %s355 = scalar_lea.vmem [#allocation3], %s354
        %p356 = pneg %p84
        %p357 = pneg %p81
        %s358 = smul.u32 2, %s30
        %p359 = scmp.lt.s32.totalorder %s358, 7
        %s360 = scalar_select %p359, %s358, 7
        %s361 = scalar_lea.vmem %s2, %s360
        %p362 = pneg %p110
        %p363 = pneg %p107
        %s364 = sand.u32 %s123, 1
        %s365 = scalar_lea.sflag [#allocation7], %s364
        %s366 = sand.u32 %s123, 1
        %s367 = smul.addr %s366, 256
        %s368 = scalar_lea.vmem [#allocation6], %s367
        %p369 = pneg %p136
        %p370 = pneg %p133
        %p371 = pneg %p157
        %p372 = pneg %p154
        %p373 = pneg %p178
        %p374 = pneg %p175
        %p375 = pneg %p199
        %p376 = pneg %p196
        %p377 = pneg %p225
        %p378 = pneg %p222
        %s379 = smul.u32 2, %s29
        %p380 = scmp.lt.s32.totalorder %s379, 1
        %s381 = scalar_select %p380, %s379, 1
        %s382 = smul.addr %s381, 2
        %s383 = smul.addr %s382, 8
        %s384 = scalar_lea.vmem %s0, %s383
        %s385 = smul.u32 2, %s29
        %s386 = smul.u32 2, %s30
        %s387 = smul.u32 2, %s30
        %p388 = scmp.lt.s32.totalorder %s387, 7
        %s389 = scalar_select %p388, %s387, 7
        %s390 = scalar_lea.vmem %s2, %s389
        %s391 = smul.u32 2, %s30
        %s392 = smul.u32 32, %s30
        %s393 = smul.u32 2, %s29
        %p394 = scmp.eq.s32.totalorder %s30, 0
        // Predicated region
        $region57: #{decoder_layer.15} parent=47 // pred_check
          %p395 = pneg %p394
        $region58: #{decoder_layer.15} parent=47 // pred_check_branch
          %397 = sbr.rel (%p395) target = $region60
        $region59: #{decoder_layer.15} parent=47 // pred_region
          %398 = vst [vmem:[#allocation2] sm:$0xff] 0.0
          %399 = vst [vmem:[#allocation2 + $0x8] sm:$0xff] 0.0
          %400 = vst [vmem:[#allocation2 + $0x10] sm:$0xff] 0.0
          %401 = vst [vmem:[#allocation2 + $0x18] sm:$0xff] 0.0
        $region60: #{decoder_layer.15} parent=47 // pred_fallthru
          _
        %v402 = vld [vmem:[%s384] sm:$0xff]
        %v403 = vld [vmem:[%s384 + $0x8] sm:$0xff]
        %v404 = vld [vmem:[%s384 + $0x10] sm:$0xff]
        %v405 = vld [vmem:[%s384 + $0x18] sm:$0xff]
        %v406 = vpack.c.bf16 %v404, %v402
        %v407 = vpack.c.bf16 %v405, %v403
        %v408 = vld [vmem:[%s327] sm:$0xff]
        %v409 = vld [vmem:[%s327 + $0x8] sm:$0xff]
        %v410 = vld [vmem:[%s327 + $0x10] sm:$0xff]
        %v411 = vld [vmem:[%s327 + $0x18] sm:$0xff]
        %v412 = vld [vmem:[%s327 + $0x20] sm:$0xff]
        %v413 = vld [vmem:[%s327 + $0x28] sm:$0xff]
        %v414 = vld [vmem:[%s327 + $0x30] sm:$0xff]
        %v415 = vld [vmem:[%s327 + $0x38] sm:$0xff]
        %v416 = vld [vmem:[%s327 + $0x40] sm:$0xff]
        %v417 = vld [vmem:[%s327 + $0x48] sm:$0xff]
        %v418 = vld [vmem:[%s327 + $0x50] sm:$0xff]
        %v419 = vld [vmem:[%s327 + $0x58] sm:$0xff]
        %v420 = vld [vmem:[%s327 + $0x60] sm:$0xff]
        %v421 = vld [vmem:[%s327 + $0x68] sm:$0xff]
        %v422 = vld [vmem:[%s327 + $0x70] sm:$0xff]
        %v423 = vld [vmem:[%s327 + $0x78] sm:$0xff]
        %v424 = vld [vmem:[%s327 + $0x80] sm:$0xff]
        %v425 = vld [vmem:[%s327 + $0x88] sm:$0xff]
        %v426 = vld [vmem:[%s327 + $0x90] sm:$0xff]
        %v427 = vld [vmem:[%s327 + $0x98] sm:$0xff]
        %v428 = vld [vmem:[%s327 + $0xa0] sm:$0xff]
        %v429 = vld [vmem:[%s327 + $0xa8] sm:$0xff]
        %v430 = vld [vmem:[%s327 + $0xb0] sm:$0xff]
        %v431 = vld [vmem:[%s327 + $0xb8] sm:$0xff]
        %v432 = vld [vmem:[%s327 + $0xc0] sm:$0xff]
        %v433 = vld [vmem:[%s327 + $0xc8] sm:$0xff]
        %v434 = vld [vmem:[%s327 + $0xd0] sm:$0xff]
        %v435 = vld [vmem:[%s327 + $0xd8] sm:$0xff]
        %v436 = vld [vmem:[%s327 + $0xe0] sm:$0xff]
        %v437 = vld [vmem:[%s327 + $0xe8] sm:$0xff]
        %v438 = vld [vmem:[%s327 + $0xf0] sm:$0xff]
        %v439 = vld [vmem:[%s327 + $0xf8] sm:$0xff]
        %v440 = vld [vmem:[%s390] sm:$0x3]
        %v442 = vperm.slane %v440, 0
        %v443 = vperm.slane %v440, 1
        %v478 = vunpack.c.l.b16 %v408
        %v479 = vunpack.c.h.b16 %v408
        %v480 = vunpack.c.l.b16 %v409
        %v481 = vunpack.c.h.b16 %v409
        %v482 = vunpack.c.l.b16 %v410
        %v483 = vunpack.c.h.b16 %v410
        %v484 = vunpack.c.l.b16 %v411
        %v485 = vunpack.c.h.b16 %v411
        %v486 = vunpack.c.l.b16 %v412
        %v487 = vunpack.c.h.b16 %v412
        %v488 = vunpack.c.l.b16 %v413
        %v489 = vunpack.c.h.b16 %v413
        %v490 = vunpack.c.l.b16 %v414
        %v491 = vunpack.c.h.b16 %v414
        %v492 = vunpack.c.l.b16 %v415
        %v493 = vunpack.c.h.b16 %v415
        %v494 = vunpack.c.l.b16 %v416
        %v495 = vunpack.c.h.b16 %v416
        %v496 = vunpack.c.l.b16 %v417
        %v497 = vunpack.c.h.b16 %v417
        %v498 = vunpack.c.l.b16 %v418
        %v499 = vunpack.c.h.b16 %v418
        %v500 = vunpack.c.l.b16 %v419
        %v501 = vunpack.c.h.b16 %v419
        %v502 = vunpack.c.l.b16 %v420
        %v503 = vunpack.c.h.b16 %v420
        %v504 = vunpack.c.l.b16 %v421
        %v505 = vunpack.c.h.b16 %v421
        %v506 = vunpack.c.l.b16 %v422
        %v507 = vunpack.c.h.b16 %v422
        %v508 = vunpack.c.l.b16 %v423
        %v509 = vunpack.c.h.b16 %v423
        %v510 = vunpack.c.l.b16 %v424
        %v511 = vunpack.c.h.b16 %v424
        %v512 = vunpack.c.l.b16 %v425
        %v513 = vunpack.c.h.b16 %v425
        %v514 = vunpack.c.l.b16 %v426
        %v515 = vunpack.c.h.b16 %v426
        %v516 = vunpack.c.l.b16 %v427
        %v517 = vunpack.c.h.b16 %v427
        %v518 = vunpack.c.l.b16 %v428
        %v519 = vunpack.c.h.b16 %v428
        %v520 = vunpack.c.l.b16 %v429
        %v521 = vunpack.c.h.b16 %v429
        %v522 = vunpack.c.l.b16 %v430
        %v523 = vunpack.c.h.b16 %v430
        %v524 = vunpack.c.l.b16 %v431
        %v525 = vunpack.c.h.b16 %v431
        %v526 = vunpack.c.l.b16 %v432
        %v527 = vunpack.c.h.b16 %v432
        %v528 = vunpack.c.l.b16 %v433
        %v529 = vunpack.c.h.b16 %v433
        %v530 = vunpack.c.l.b16 %v434
        %v531 = vunpack.c.h.b16 %v434
        %v532 = vunpack.c.l.b16 %v435
        %v533 = vunpack.c.h.b16 %v435
        %v534 = vunpack.c.l.b16 %v436
        %v535 = vunpack.c.h.b16 %v436
        %v536 = vunpack.c.l.b16 %v437
        %v537 = vunpack.c.h.b16 %v437
        %v538 = vunpack.c.l.b16 %v438
        %v539 = vunpack.c.h.b16 %v438
        %v540 = vunpack.c.l.b16 %v439
        %v541 = vunpack.c.h.b16 %v439
        %v542 = vpack.c.b16 %v480, %v478
        %v543 = vpack.c.b16 %v481, %v479
        %v544 = vpack.c.b16 %v484, %v482
        %v545 = vpack.c.b16 %v485, %v483
        %v546 = vpack.c.b16 %v488, %v486
        %v547 = vpack.c.b16 %v489, %v487
        %v548 = vpack.c.b16 %v492, %v490
        %v549 = vpack.c.b16 %v493, %v491
        %v550 = vpack.c.b16 %v496, %v494
        %v551 = vpack.c.b16 %v497, %v495
        %v552 = vpack.c.b16 %v500, %v498
        %v553 = vpack.c.b16 %v501, %v499
        %v554 = vpack.c.b16 %v504, %v502
        %v555 = vpack.c.b16 %v505, %v503
        %v556 = vpack.c.b16 %v508, %v506
        %v557 = vpack.c.b16 %v509, %v507
        %v558 = vpack.c.b16 %v512, %v510
        %v559 = vpack.c.b16 %v513, %v511
        %v560 = vpack.c.b16 %v516, %v514
        %v561 = vpack.c.b16 %v517, %v515
        %v562 = vpack.c.b16 %v520, %v518
        %v563 = vpack.c.b16 %v521, %v519
        %v564 = vpack.c.b16 %v524, %v522
        %v565 = vpack.c.b16 %v525, %v523
        %v566 = vpack.c.b16 %v528, %v526
        %v567 = vpack.c.b16 %v529, %v527
        %v568 = vpack.c.b16 %v532, %v530
        %v569 = vpack.c.b16 %v533, %v531
        %v570 = vpack.c.b16 %v536, %v534
        %v571 = vpack.c.b16 %v537, %v535
        %v572 = vpack.c.b16 %v540, %v538
        %v573 = vpack.c.b16 %v541, %v539
        %606 = vmatpush.bf16.msra.mxu0 %v556
        %607 = vmatpush.bf16.msra.mxu0 %v554
        %608 = vmatpush.bf16.msra.mxu0 %v552
        %609 = vmatpush.bf16.msra.mxu0 %v550
        %610 = vmatpush.bf16.msra.mxu0 %v548
        %611 = vmatpush.bf16.msra.mxu0 %v546
        %612 = vmatpush.bf16.msra.mxu0 %v544
        %613 = vmatpush.bf16.msra.mxu0 %v542
        %614 = vmatmul.bf16.gmra.mxu0 %v406
        %v615 = vpop.f32.mrf.mxu0
        %v616 = vadd.f32 %v442, %v615
        %v617 = vpop.f32.mrf.mxu0
        %v618 = vadd.f32 %v442, %v617
        %619 = vdwg.mxu0
        %620 = vmatpush.bf16.msra.mxu0 %v572
        %621 = vmatpush.bf16.msra.mxu0 %v570
        %622 = vmatpush.bf16.msra.mxu0 %v568
        %623 = vmatpush.bf16.msra.mxu0 %v566
        %624 = vmatpush.bf16.msra.mxu0 %v564
        %625 = vmatpush.bf16.msra.mxu0 %v562
        %626 = vmatpush.bf16.msra.mxu0 %v560
        %627 = vmatpush.bf16.msra.mxu0 %v558
        %628 = vmatmul.bf16.gmra.mxu0 %v407
        %v629 = vpop.f32.mrf.mxu0
        %v630 = vadd.f32 %v616, %v629
        %v631 = vpop.f32.mrf.mxu0
        %v632 = vadd.f32 %v618, %v631
        %633 = vdwg.mxu0
        %634 = vmatpush.bf16.msra.mxu0 %v557
        %635 = vmatpush.bf16.msra.mxu0 %v555
        %636 = vmatpush.bf16.msra.mxu0 %v553
        %637 = vmatpush.bf16.msra.mxu0 %v551
        %638 = vmatpush.bf16.msra.mxu0 %v549
        %639 = vmatpush.bf16.msra.mxu0 %v547
        %640 = vmatpush.bf16.msra.mxu0 %v545
        %641 = vmatpush.bf16.msra.mxu0 %v543
        %642 = vmatmul.bf16.gmra.mxu0 %v406
        %v643 = vpop.f32.mrf.mxu0
        %v644 = vadd.f32 %v443, %v643
        %v645 = vpop.f32.mrf.mxu0
        %v646 = vadd.f32 %v443, %v645
        %647 = vdwg.mxu0
        %648 = vmatpush.bf16.msra.mxu0 %v573
        %649 = vmatpush.bf16.msra.mxu0 %v571
        %650 = vmatpush.bf16.msra.mxu0 %v569
        %651 = vmatpush.bf16.msra.mxu0 %v567
        %652 = vmatpush.bf16.msra.mxu0 %v565
        %653 = vmatpush.bf16.msra.mxu0 %v563
        %654 = vmatpush.bf16.msra.mxu0 %v561
        %655 = vmatpush.bf16.msra.mxu0 %v559
        %656 = vmatmul.bf16.gmra.mxu0 %v407
        %v657 = vpop.f32.mrf.mxu0
        %v658 = vadd.f32 %v644, %v657
        %v659 = vpop.f32.mrf.mxu0
        %v660 = vadd.f32 %v646, %v659
        %661 = vdwg.mxu0
        %v662 = vmul.f32 %v630, 0.5
        %v663 = vmul.f32 %v658, 0.5
        %v664 = vmul.f32 %v632, 0.5
        %v665 = vmul.f32 %v660, 0.5
        %v666 = vmul.f32 %v630, 0.70710677
        %v667 = vmul.f32 %v658, 0.70710677
        %v668 = vmul.f32 %v632, 0.70710677
        %v669 = vmul.f32 %v660, 0.70710677
        %v670 = vmul.f32 %v666, %v666
        %v671 = vmin.f32 16.0, %v670
        %v672 = vmul.f32 %v671, 2.1237322e-06
        %v673 = vadd.f32 %v672, 0.00028619796
        %v674 = vmul.f32 %v671, %v673
        %v675 = vadd.f32 %v674, 0.0036580483
        %v676 = vmul.f32 %v671, %v675
        %v677 = vadd.f32 %v676, 0.05243302
        %v678 = vmul.f32 %v671, %v677
        %v679 = vadd.f32 %v678, 0.18741608
        %v680 = vmul.f32 %v671, %v679
        %v681 = vadd.f32 %v680, 1.1283791
        %v682 = vmul.f32 %v666, %v681
        %v683 = vmul.f32 %v671, 3.8918573e-05
        %v684 = vadd.f32 %v683, 0.001143296
        %v685 = vmul.f32 %v671, %v684
        %v686 = vadd.f32 %v685, 0.014752088
        %v687 = vmul.f32 %v671, %v686
        %v688 = vadd.f32 %v687, 0.112945676
        %v689 = vmul.f32 %v671, %v688
        %v690 = vadd.f32 %v689, 0.4994258
        %v691 = vmul.f32 %v671, %v690
        %v692 = vadd.f32 %v691, 1.0
        %v693 = vrcp.pop %v692
        %v694 = vmul.f32 %v692, %v693
        %v695 = vsub.f32 1.0, %v694
        %v696 = vmul.f32 %v693, %v695
        %v697 = vadd.f32 %v693, %v696
        %vm698 = vweird.f32 %v692
        %vm699 = vweird.f32 %v693
        %vm700 = vmor %vm698, %vm699
        %v701 = vsel %vm700, %v693, %v697
        %v702 = vand.u32 2147483647, %v692
        %vm703 = vcmp.eq.f32.partialorder %v702, 8.507059e+37
        %v704 = vand.u32 %v692, 2147483648
        %v705 = vor.u32 1.1754944e-38, %v704
        %v706 = vsel %vm703, %v705, %v701
        %v707 = vmul.f32 %v682, %v706
        %v708 = vmin.f32 %v707, 1.0
        %v709 = vmax.f32 %v708, -1.0
        %v710 = vmul.f32 %v667, %v667
        %v711 = vmin.f32 16.0, %v710
        %v712 = vmul.f32 %v711, 2.1237322e-06
        %v713 = vadd.f32 %v712, 0.00028619796
        %v714 = vmul.f32 %v711, %v713
        %v715 = vadd.f32 %v714, 0.0036580483
        %v716 = vmul.f32 %v711, %v715
        %v717 = vadd.f32 %v716, 0.05243302
        %v718 = vmul.f32 %v711, %v717
        %v719 = vadd.f32 %v718, 0.18741608
        %v720 = vmul.f32 %v711, %v719
        %v721 = vadd.f32 %v720, 1.1283791
        %v722 = vmul.f32 %v667, %v721
        %v723 = vmul.f32 %v711, 3.8918573e-05
        %v724 = vadd.f32 %v723, 0.001143296
        %v725 = vmul.f32 %v711, %v724
        %v726 = vadd.f32 %v725, 0.014752088
        %v727 = vmul.f32 %v711, %v726
        %v728 = vadd.f32 %v727, 0.112945676
        %v729 = vmul.f32 %v711, %v728
        %v730 = vadd.f32 %v729, 0.4994258
        %v731 = vmul.f32 %v711, %v730
        %v732 = vadd.f32 %v731, 1.0
        %v733 = vrcp.pop %v732
        %v734 = vmul.f32 %v732, %v733
        %v735 = vsub.f32 1.0, %v734
        %v736 = vmul.f32 %v733, %v735
        %v737 = vadd.f32 %v733, %v736
        %vm738 = vweird.f32 %v732
        %vm739 = vweird.f32 %v733
        %vm740 = vmor %vm738, %vm739
        %v741 = vsel %vm740, %v733, %v737
        %v742 = vand.u32 2147483647, %v732
        %vm743 = vcmp.eq.f32.partialorder %v742, 8.507059e+37
        %v744 = vand.u32 %v732, 2147483648
        %v745 = vor.u32 1.1754944e-38, %v744
        %v746 = vsel %vm743, %v745, %v741
        %v747 = vmul.f32 %v722, %v746
        %v748 = vmin.f32 %v747, 1.0
        %v749 = vmax.f32 %v748, -1.0
        %v750 = vmul.f32 %v668, %v668
        %v751 = vmin.f32 16.0, %v750
        %v752 = vmul.f32 %v751, 2.1237322e-06
        %v753 = vadd.f32 %v752, 0.00028619796
        %v754 = vmul.f32 %v751, %v753
        %v755 = vadd.f32 %v754, 0.0036580483
        %v756 = vmul.f32 %v751, %v755
        %v757 = vadd.f32 %v756, 0.05243302
        %v758 = vmul.f32 %v751, %v757
        %v759 = vadd.f32 %v758, 0.18741608
        %v760 = vmul.f32 %v751, %v759
        %v761 = vadd.f32 %v760, 1.1283791
        %v762 = vmul.f32 %v668, %v761
        %v763 = vmul.f32 %v751, 3.8918573e-05
        %v764 = vadd.f32 %v763, 0.001143296
        %v765 = vmul.f32 %v751, %v764
        %v766 = vadd.f32 %v765, 0.014752088
        %v767 = vmul.f32 %v751, %v766
        %v768 = vadd.f32 %v767, 0.112945676
        %v769 = vmul.f32 %v751, %v768
        %v770 = vadd.f32 %v769, 0.4994258
        %v771 = vmul.f32 %v751, %v770
        %v772 = vadd.f32 %v771, 1.0
        %v773 = vrcp.pop %v772
        %v774 = vmul.f32 %v772, %v773
        %v775 = vsub.f32 1.0, %v774
        %v776 = vmul.f32 %v773, %v775
        %v777 = vadd.f32 %v773, %v776
        %vm778 = vweird.f32 %v772
        %vm779 = vweird.f32 %v773
        %vm780 = vmor %vm778, %vm779
        %v781 = vsel %vm780, %v773, %v777
        %v782 = vand.u32 2147483647, %v772
        %vm783 = vcmp.eq.f32.partialorder %v782, 8.507059e+37
        %v784 = vand.u32 %v772, 2147483648
        %v785 = vor.u32 1.1754944e-38, %v784
        %v786 = vsel %vm783, %v785, %v781
        %v787 = vmul.f32 %v762, %v786
        %v788 = vmin.f32 %v787, 1.0
        %v789 = vmax.f32 %v788, -1.0
        %v790 = vmul.f32 %v669, %v669
        %v791 = vmin.f32 16.0, %v790
        %v792 = vmul.f32 %v791, 2.1237322e-06
        %v793 = vadd.f32 %v792, 0.00028619796
        %v794 = vmul.f32 %v791, %v793
        %v795 = vadd.f32 %v794, 0.0036580483
        %v796 = vmul.f32 %v791, %v795
        %v797 = vadd.f32 %v796, 0.05243302
        %v798 = vmul.f32 %v791, %v797
        %v799 = vadd.f32 %v798, 0.18741608
        %v800 = vmul.f32 %v791, %v799
        %v801 = vadd.f32 %v800, 1.1283791
        %v802 = vmul.f32 %v669, %v801
        %v803 = vmul.f32 %v791, 3.8918573e-05
        %v804 = vadd.f32 %v803, 0.001143296
        %v805 = vmul.f32 %v791, %v804
        %v806 = vadd.f32 %v805, 0.014752088
        %v807 = vmul.f32 %v791, %v806
        %v808 = vadd.f32 %v807, 0.112945676
        %v809 = vmul.f32 %v791, %v808
        %v810 = vadd.f32 %v809, 0.4994258
        %v811 = vmul.f32 %v791, %v810
        %v812 = vadd.f32 %v811, 1.0
        %v813 = vrcp.pop %v812
        %v814 = vmul.f32 %v812, %v813
        %v815 = vsub.f32 1.0, %v814
        %v816 = vmul.f32 %v813, %v815
        %v817 = vadd.f32 %v813, %v816
        %vm818 = vweird.f32 %v812
        %vm819 = vweird.f32 %v813
        %vm820 = vmor %vm818, %vm819
        %v821 = vsel %vm820, %v813, %v817
        %v822 = vand.u32 2147483647, %v812
        %vm823 = vcmp.eq.f32.partialorder %v822, 8.507059e+37
        %v824 = vand.u32 %v812, 2147483648
        %v825 = vor.u32 1.1754944e-38, %v824
        %v826 = vsel %vm823, %v825, %v821
        %v827 = vmul.f32 %v802, %v826
        %v828 = vmin.f32 %v827, 1.0
        %v829 = vmax.f32 %v828, -1.0
        %v830 = vadd.f32 %v709, 1.0
        %v831 = vadd.f32 %v749, 1.0
        %v832 = vadd.f32 %v789, 1.0
        %v833 = vadd.f32 %v829, 1.0
        %v834 = vmul.f32 %v662, %v830
        %v835 = vmul.f32 %v663, %v831
        %v836 = vmul.f32 %v664, %v832
        %v837 = vmul.f32 %v665, %v833
        %v838 = vld [vmem:[#allocation2] sm:$0xff]
        %v839 = vld [vmem:[#allocation2 + $0x8] sm:$0xff]
        %v840 = vld [vmem:[#allocation2 + $0x10] sm:$0xff]
        %v841 = vld [vmem:[#allocation2 + $0x18] sm:$0xff]
        %v842 = vpack.c.bf16 %v836, %v834
        %v843 = vpack.c.bf16 %v837, %v835
        %v844 = vld [vmem:[%s337] sm:$0xff]
        %v845 = vld [vmem:[%s337 + $0x8] sm:$0xff]
        %v846 = vld [vmem:[%s337 + $0x10] sm:$0xff]
        %v847 = vld [vmem:[%s337 + $0x18] sm:$0xff]
        %v848 = vld [vmem:[%s337 + $0x20] sm:$0xff]
        %v849 = vld [vmem:[%s337 + $0x28] sm:$0xff]
        %v850 = vld [vmem:[%s337 + $0x30] sm:$0xff]
        %v851 = vld [vmem:[%s337 + $0x38] sm:$0xff]
        %v852 = vld [vmem:[%s337 + $0x40] sm:$0xff]
        %v853 = vld [vmem:[%s337 + $0x48] sm:$0xff]
        %v854 = vld [vmem:[%s337 + $0x50] sm:$0xff]
        %v855 = vld [vmem:[%s337 + $0x58] sm:$0xff]
        %v856 = vld [vmem:[%s337 + $0x60] sm:$0xff]
        %v857 = vld [vmem:[%s337 + $0x68] sm:$0xff]
        %v858 = vld [vmem:[%s337 + $0x70] sm:$0xff]
        %v859 = vld [vmem:[%s337 + $0x78] sm:$0xff]
        %v860 = vld [vmem:[%s337 + $0x80] sm:$0xff]
        %v861 = vld [vmem:[%s337 + $0x88] sm:$0xff]
        %v862 = vld [vmem:[%s337 + $0x90] sm:$0xff]
        %v863 = vld [vmem:[%s337 + $0x98] sm:$0xff]
        %v864 = vld [vmem:[%s337 + $0xa0] sm:$0xff]
        %v865 = vld [vmem:[%s337 + $0xa8] sm:$0xff]
        %v866 = vld [vmem:[%s337 + $0xb0] sm:$0xff]
        %v867 = vld [vmem:[%s337 + $0xb8] sm:$0xff]
        %v868 = vld [vmem:[%s337 + $0xc0] sm:$0xff]
        %v869 = vld [vmem:[%s337 + $0xc8] sm:$0xff]
        %v870 = vld [vmem:[%s337 + $0xd0] sm:$0xff]
        %v871 = vld [vmem:[%s337 + $0xd8] sm:$0xff]
        %v872 = vld [vmem:[%s337 + $0xe0] sm:$0xff]
        %v873 = vld [vmem:[%s337 + $0xe8] sm:$0xff]
        %v874 = vld [vmem:[%s337 + $0xf0] sm:$0xff]
        %v875 = vld [vmem:[%s337 + $0xf8] sm:$0xff]
        %v908 = vunpack.c.l.b16 %v844
        %v909 = vunpack.c.h.b16 %v844
        %v910 = vunpack.c.l.b16 %v845
        %v911 = vunpack.c.h.b16 %v845
        %v912 = vunpack.c.l.b16 %v846
        %v913 = vunpack.c.h.b16 %v846
        %v914 = vunpack.c.l.b16 %v847
        %v915 = vunpack.c.h.b16 %v847
        %v916 = vunpack.c.l.b16 %v848
        %v917 = vunpack.c.h.b16 %v848
        %v918 = vunpack.c.l.b16 %v849
        %v919 = vunpack.c.h.b16 %v849
        %v920 = vunpack.c.l.b16 %v850
        %v921 = vunpack.c.h.b16 %v850
        %v922 = vunpack.c.l.b16 %v851
        %v923 = vunpack.c.h.b16 %v851
        %v924 = vunpack.c.l.b16 %v852
        %v925 = vunpack.c.h.b16 %v852
        %v926 = vunpack.c.l.b16 %v853
        %v927 = vunpack.c.h.b16 %v853
        %v928 = vunpack.c.l.b16 %v854
        %v929 = vunpack.c.h.b16 %v854
        %v930 = vunpack.c.l.b16 %v855
        %v931 = vunpack.c.h.b16 %v855
        %v932 = vunpack.c.l.b16 %v856
        %v933 = vunpack.c.h.b16 %v856
        %v934 = vunpack.c.l.b16 %v857
        %v935 = vunpack.c.h.b16 %v857
        %v936 = vunpack.c.l.b16 %v858
        %v937 = vunpack.c.h.b16 %v858
        %v938 = vunpack.c.l.b16 %v859
        %v939 = vunpack.c.h.b16 %v859
        %v940 = vunpack.c.l.b16 %v860
        %v941 = vunpack.c.h.b16 %v860
        %v942 = vunpack.c.l.b16 %v861
        %v943 = vunpack.c.h.b16 %v861
        %v944 = vunpack.c.l.b16 %v862
        %v945 = vunpack.c.h.b16 %v862
        %v946 = vunpack.c.l.b16 %v863
        %v947 = vunpack.c.h.b16 %v863
        %v948 = vunpack.c.l.b16 %v864
        %v949 = vunpack.c.h.b16 %v864
        %v950 = vunpack.c.l.b16 %v865
        %v951 = vunpack.c.h.b16 %v865
        %v952 = vunpack.c.l.b16 %v866
        %v953 = vunpack.c.h.b16 %v866
        %v954 = vunpack.c.l.b16 %v867
        %v955 = vunpack.c.h.b16 %v867
        %v956 = vunpack.c.l.b16 %v868
        %v957 = vunpack.c.h.b16 %v868
        %v958 = vunpack.c.l.b16 %v869
        %v959 = vunpack.c.h.b16 %v869
        %v960 = vunpack.c.l.b16 %v870
        %v961 = vunpack.c.h.b16 %v870
        %v962 = vunpack.c.l.b16 %v871
        %v963 = vunpack.c.h.b16 %v871
        %v964 = vunpack.c.l.b16 %v872
        %v965 = vunpack.c.h.b16 %v872
        %v966 = vunpack.c.l.b16 %v873
        %v967 = vunpack.c.h.b16 %v873
        %v968 = vunpack.c.l.b16 %v874
        %v969 = vunpack.c.h.b16 %v874
        %v970 = vunpack.c.l.b16 %v875
        %v971 = vunpack.c.h.b16 %v875
        %v972 = vpack.c.b16 %v910, %v908
        %v973 = vpack.c.b16 %v911, %v909
        %v974 = vpack.c.b16 %v914, %v912
        %v975 = vpack.c.b16 %v915, %v913
        %v976 = vpack.c.b16 %v918, %v916
        %v977 = vpack.c.b16 %v919, %v917
        %v978 = vpack.c.b16 %v922, %v920
        %v979 = vpack.c.b16 %v923, %v921
        %v980 = vpack.c.b16 %v926, %v924
        %v981 = vpack.c.b16 %v927, %v925
        %v982 = vpack.c.b16 %v930, %v928
        %v983 = vpack.c.b16 %v931, %v929
        %v984 = vpack.c.b16 %v934, %v932
        %v985 = vpack.c.b16 %v935, %v933
        %v986 = vpack.c.b16 %v938, %v936
        %v987 = vpack.c.b16 %v939, %v937
        %v988 = vpack.c.b16 %v942, %v940
        %v989 = vpack.c.b16 %v943, %v941
        %v990 = vpack.c.b16 %v946, %v944
        %v991 = vpack.c.b16 %v947, %v945
        %v992 = vpack.c.b16 %v950, %v948
        %v993 = vpack.c.b16 %v951, %v949
        %v994 = vpack.c.b16 %v954, %v952
        %v995 = vpack.c.b16 %v955, %v953
        %v996 = vpack.c.b16 %v958, %v956
        %v997 = vpack.c.b16 %v959, %v957
        %v998 = vpack.c.b16 %v962, %v960
        %v999 = vpack.c.b16 %v963, %v961
        %v1000 = vpack.c.b16 %v966, %v964
        %v1001 = vpack.c.b16 %v967, %v965
        %v1002 = vpack.c.b16 %v970, %v968
        %v1003 = vpack.c.b16 %v971, %v969
        %1036 = vmatpush.bf16.msra.mxu0 %v986
        %1037 = vmatpush.bf16.msra.mxu0 %v984
        %1038 = vmatpush.bf16.msra.mxu0 %v982
        %1039 = vmatpush.bf16.msra.mxu0 %v980
        %1040 = vmatpush.bf16.msra.mxu0 %v978
        %1041 = vmatpush.bf16.msra.mxu0 %v976
        %1042 = vmatpush.bf16.msra.mxu0 %v974
        %1043 = vmatpush.bf16.msra.mxu0 %v972
        %1044 = vmatmul.bf16.gmra.mxu0 %v842
        %v1045 = vpop.f32.mrf.mxu0
        %v1046 = vadd.f32 0.0, %v1045
        %v1047 = vpop.f32.mrf.mxu0
        %v1048 = vadd.f32 0.0, %v1047
        %1049 = vdwg.mxu0
        %1050 = vmatpush.bf16.msra.mxu0 %v1002
        %1051 = vmatpush.bf16.msra.mxu0 %v1000
        %1052 = vmatpush.bf16.msra.mxu0 %v998
        %1053 = vmatpush.bf16.msra.mxu0 %v996
        %1054 = vmatpush.bf16.msra.mxu0 %v994
        %1055 = vmatpush.bf16.msra.mxu0 %v992
        %1056 = vmatpush.bf16.msra.mxu0 %v990
        %1057 = vmatpush.bf16.msra.mxu0 %v988
        %1058 = vmatmul.bf16.gmra.mxu0 %v843
        %v1059 = vpop.f32.mrf.mxu0
        %v1060 = vadd.f32 %v1046, %v1059
        %v1061 = vpop.f32.mrf.mxu0
        %v1062 = vadd.f32 %v1048, %v1061
        %1063 = vdwg.mxu0
        %1064 = vmatpush.bf16.msra.mxu0 %v987
        %1065 = vmatpush.bf16.msra.mxu0 %v985
        %1066 = vmatpush.bf16.msra.mxu0 %v983
        %1067 = vmatpush.bf16.msra.mxu0 %v981
        %1068 = vmatpush.bf16.msra.mxu0 %v979
        %1069 = vmatpush.bf16.msra.mxu0 %v977
        %1070 = vmatpush.bf16.msra.mxu0 %v975
        %1071 = vmatpush.bf16.msra.mxu0 %v973
        %1072 = vmatmul.bf16.gmra.mxu0 %v842
        %v1073 = vpop.f32.mrf.mxu0
        %v1074 = vadd.f32 0.0, %v1073
        %v1075 = vpop.f32.mrf.mxu0
        %v1076 = vadd.f32 0.0, %v1075
        %1077 = vdwg.mxu0
        %1078 = vmatpush.bf16.msra.mxu0 %v1003
        %1079 = vmatpush.bf16.msra.mxu0 %v1001
        %1080 = vmatpush.bf16.msra.mxu0 %v999
        %1081 = vmatpush.bf16.msra.mxu0 %v997
        %1082 = vmatpush.bf16.msra.mxu0 %v995
        %1083 = vmatpush.bf16.msra.mxu0 %v993
        %1084 = vmatpush.bf16.msra.mxu0 %v991
        %1085 = vmatpush.bf16.msra.mxu0 %v989
        %1086 = vmatmul.bf16.gmra.mxu0 %v843
        %v1087 = vpop.f32.mrf.mxu0
        %v1088 = vadd.f32 %v1074, %v1087
        %v1089 = vpop.f32.mrf.mxu0
        %v1090 = vadd.f32 %v1076, %v1089
        %1091 = vdwg.mxu0
        %v1092 = vadd.f32 %v838, %v1060
        %v1093 = vadd.f32 %v839, %v1088
        %v1094 = vadd.f32 %v840, %v1062
        %v1095 = vadd.f32 %v841, %v1090
        %1096 = vst [vmem:[#allocation2] sm:$0xff] %v1092
        %1097 = vst [vmem:[#allocation2 + $0x8] sm:$0xff] %v1093
        %1098 = vst [vmem:[#allocation2 + $0x10] sm:$0xff] %v1094
        %1099 = vst [vmem:[#allocation2 + $0x18] sm:$0xff] %v1095
        %p1100 = scmp.eq.s32.totalorder %s30, 3
        // Predicated region
        $region61: #{decoder_layer.15} parent=47 // pred_check
          %p1101 = pneg %p1100
        $region62: #{decoder_layer.15} parent=47 // pred_check_branch
          %1103 = sbr.rel (%p1101) target = $region64
        $region63: #{decoder_layer.15} parent=47 // pred_region
          %v1104 = vld [vmem:[#allocation2] sm:$0xff]
          %v1105 = vld [vmem:[#allocation2 + $0x8] sm:$0xff]
          %v1106 = vld [vmem:[#allocation2 + $0x10] sm:$0xff]
          %v1107 = vld [vmem:[#allocation2 + $0x18] sm:$0xff]
          %v1108 = vld [vmem:[%s4] sm:$0x3]
          %v1110 = vperm.slane %v1108, 0
          %v1111 = vperm.slane %v1108, 1
          %v1114 = vadd.f32 %v1104, %v1110
          %v1115 = vadd.f32 %v1105, %v1111
          %v1116 = vadd.f32 %v1106, %v1110
          %v1117 = vadd.f32 %v1107, %v1111
          %v1118 = vld [vmem:[%s384] sm:$0xff]
          %v1119 = vld [vmem:[%s384 + $0x8] sm:$0xff]
          %v1120 = vld [vmem:[%s384 + $0x10] sm:$0xff]
          %v1121 = vld [vmem:[%s384 + $0x18] sm:$0xff]
          %v1122 = vadd.f32 %v1114, %v1118
          %v1123 = vadd.f32 %v1115, %v1119
          %v1124 = vadd.f32 %v1116, %v1120
          %v1125 = vadd.f32 %v1117, %v1121
          %v1126 = vld [vmem:[%s5] sm:$0x3]
          %v1127 = vld [vmem:[%s6] sm:$0x3]
          %v1128 = vadd.f32 %v1122, %v1123
          %1129 = vadd.xlane.f32.xlu0 %v1128
          %v1130 = vpop.xlane.xlu0 %1129
          %v1131 = vadd.f32 %v1124, %v1125
          %1132 = vadd.xlane.f32.xlu0 %v1131
          %v1133 = vpop.xlane.xlu0 %1132
          %v1134 = vrcp.pop 256.0
          %v1135 = vmul.f32 256.0, %v1134
          %v1136 = vsub.f32 1.0, %v1135
          %v1137 = vmul.f32 %v1134, %v1136
          %v1138 = vadd.f32 %v1134, %v1137
          %vm1139 = vweird.f32 %v1134
          %v1140 = vsel %vm1139, %v1134, %v1138
          %v1141 = vmul.f32 %v1130, %v1140
          %v1142 = vmul.f32 %v1133, %v1140
          %v1143 = vmul.f32 %v1122, %v1122
          %v1144 = vmul.f32 %v1123, %v1123
          %v1145 = vmul.f32 %v1124, %v1124
          %v1146 = vmul.f32 %v1125, %v1125
          %v1147 = vadd.f32 %v1143, %v1144
          %1148 = vadd.xlane.f32.xlu0 %v1147
          %v1149 = vpop.xlane.xlu0 %1148
          %v1150 = vadd.f32 %v1145, %v1146
          %1151 = vadd.xlane.f32.xlu0 %v1150
          %v1152 = vpop.xlane.xlu0 %1151
          %v1153 = vmul.f32 %v1149, %v1140
          %v1154 = vmul.f32 %v1152, %v1140
          %v1155 = vmul.f32 %v1141, %v1141
          %v1156 = vmul.f32 %v1142, %v1142
          %v1157 = vsub.f32 %v1153, %v1155
          %v1158 = vsub.f32 %v1154, %v1156
          %v1159 = vadd.f32 %v1157, 1e-05
          %v1160 = vadd.f32 %v1158, 1e-05
          %v1161 = vrsqrt.pop %v1159
          %v1162 = vmul.f32 %v1161, %v1159
          %v1163 = vmul.f32 %v1162, %v1161
          %v1164 = vmul.f32 0.5, %v1163
          %v1165 = vsub.f32 1.5, %v1164
          %v1166 = vmul.f32 %v1161, %v1165
          %vm1167 = vweird.f32 %v1159
          %vm1168 = vweird.f32 %v1161
          %vm1169 = vmor %vm1167, %vm1168
          %v1170 = vsel %vm1169, %v1161, %v1166
          %v1171 = vrsqrt.pop %v1160
          %v1172 = vmul.f32 %v1171, %v1160
          %v1173 = vmul.f32 %v1172, %v1171
          %v1174 = vmul.f32 0.5, %v1173
          %v1175 = vsub.f32 1.5, %v1174
          %v1176 = vmul.f32 %v1171, %v1175
          %vm1177 = vweird.f32 %v1160
          %vm1178 = vweird.f32 %v1171
          %vm1179 = vmor %vm1177, %vm1178
          %v1180 = vsel %vm1179, %v1171, %v1176
          %v1181 = vsub.f32 %v1122, %v1141
          %v1182 = vsub.f32 %v1123, %v1141
          %v1183 = vsub.f32 %v1124, %v1142
          %v1184 = vsub.f32 %v1125, %v1142
          %v1185 = vmul.f32 %v1181, %v1170
          %v1186 = vmul.f32 %v1182, %v1170
          %v1187 = vmul.f32 %v1183, %v1180
          %v1188 = vmul.f32 %v1184, %v1180
          %v1190 = vperm.slane %v1126, 0
          %v1191 = vperm.slane %v1126, 1
          %v1194 = vmul.f32 %v1185, %v1190
          %v1195 = vmul.f32 %v1186, %v1191
          %v1196 = vmul.f32 %v1187, %v1190
          %v1197 = vmul.f32 %v1188, %v1191
          %v1199 = vperm.slane %v1127, 0
          %v1200 = vperm.slane %v1127, 1
          %v1203 = vadd.f32 %v1194, %v1199
          %v1204 = vadd.f32 %v1195, %v1200
          %v1205 = vadd.f32 %v1196, %v1199
          %v1206 = vadd.f32 %v1197, %v1200
          %1207 = vst [vmem:[#allocation8] sm:$0xff] %v1203
          %1208 = vst [vmem:[#allocation8 + $0x8] sm:$0xff] %v1204
          %1209 = vst [vmem:[#allocation8 + $0x10] sm:$0xff] %v1205
          %1210 = vst [vmem:[#allocation8 + $0x18] sm:$0xff] %v1206
        $region64: #{decoder_layer.15} parent=47 // pred_fallthru
          _
        // Predicated region
        $region65: #{decoder_layer.15} parent=47 // pred_check
          %p1211 = pneg %p222
        $region66: #{decoder_layer.15} parent=47 // pred_check_branch
          %1213 = sbr.rel (%p1211) target = $region68
        $region67: #{decoder_layer.15} parent=47 // pred_region
          %s1214 = smul.u32 2, %s29
          %1216 = vsyncadd [#allocation5], 0
          %s1217 = smul.addr %s1214, 2
          %s1218 = smul.addr %s1217, 8
          %s1219 = scalar_lea.hbm %s7, %s1218
          %s1220 = sshll.u32 [#allocation8], 4
          %s1221 = int_to_ptr.vmem [resolvable:$true] %s1220
          %s1222 = sshll.u32 %s1219, 4
          %s1223 = int_to_ptr.hbm [resolvable:$true] %s1222
          %1228 = dma.vmem_to_hbm [thread:$0]  %s1221, 512, %s1223, [#allocation5], 256, 256, 16
        $region68: #{decoder_layer.15} parent=47 // pred_fallthru
          _
        // Predicated region
        $region69: #{decoder_layer.15} parent=47 // pred_check
          %p1229 = pneg %p222
        $region70: #{decoder_layer.15} parent=47 // pred_check_branch
          %1231 = sbr.rel (%p1229) target = $region72
        $region71: #{decoder_layer.15} parent=47 // pred_region
          %1233 = dma.done [#allocation5], 512
        $region72: #{decoder_layer.15} parent=47 // pred_fallthru
          _
      $region48: #{decoder_layer.15} parent=5 // pred_fallthru
        _
      %p1234 = scmp.le.s32.totalorder 2, %s20
      // Predicated region
      $region73: #{decoder_layer.15} parent=5 // pred_check
        %p1235 = pneg %p1234
      $region74: #{decoder_layer.15} parent=5 // pred_check_branch
        %1237 = sbr.rel (%p1235) target = $region76
      $region75: #{decoder_layer.15} parent=5 // pred_region
        %s1238 = ssub.s32 %s20, 2
      $region76: #{decoder_layer.15} parent=5 // pred_fallthru
        _
    $region6: #{decoder_layer.15} parent=1 // loop_footer
      %s24 = sadd.s32 1, %s20
    $region7: #{decoder_layer.15} parent=1 // loop_footer_branch
      %19 = sbr.rel target = $region3
    $region8: #{decoder_layer.15} parent=1 // loop_exit
      _
    %1239 = vsyncpa [#allocation4], 1
    %s1240 = scalar_lea.sflag [#allocation4], 1
    %1241 = vsyncpa %s1240, 1
    %1242 = vsyncpa [#allocation7], 1
    %s1243 = scalar_lea.sflag [#allocation7], 1
    %1244 = vsyncpa %s1243, 1
    %1245 = vsyncpa [#allocation5], 1
    %s1246 = scalar_lea.sflag [#allocation5], 1
    %1247 = vsyncpa %s1246, 1

</llo_original>
